<compile_context>
chip_gen: v7x
topology: tpu7x:2x2x1
jax: 0.10.0
libtpu: 0.0.40
codegen_flags: <defaults>
</compile_context>

<pallas_src>
import jax
import jax.numpy as jnp
from jax.experimental import pallas as pl
from jax.experimental.pallas import tpu as pltpu


def _round_up(x, m):
    return ((x + m - 1) // m) * m


def bottleneck_kernel(x_ref, w1_ref, b1_ref, w2_ref, b2_ref, w3_ref, b3_ref,
                      o_ref, pad_ref, col_ref):
    # x_ref: (H, W, Cp) bf16   (batch dim squeezed by BlockSpec)
    H, W, cp = x_ref.shape
    pp = w1_ref.shape[1]          # padded planes
    coutp = w3_ref.shape[1]       # padded 4*planes (== cp on this path)

    x = x_ref[...]                                     # (H, W, Cp) bf16
    xf = x.reshape(H * W, cp)

    # --- conv1 (1x1, BN scale pre-folded) + bias + relu ----------------------
    y1 = jnp.dot(xf, w1_ref[...], preferred_element_type=jnp.float32)
    y1 = jnp.maximum(y1 + b1_ref[...], 0.0)            # (H*W, Pp) f32

    # --- conv2 (3x3, stride=1, pad=1) as a single im2col matmul --------------
    # zero only the 1-element halo; the interior is fully overwritten below.
    pad_ref[0:1, :, :] = jnp.zeros((1, W + 2, pp), pad_ref.dtype)
    pad_ref[H + 1:H + 2, :, :] = jnp.zeros((1, W + 2, pp), pad_ref.dtype)
    pad_ref[1:H + 1, 0:1, :] = jnp.zeros((H, 1, pp), pad_ref.dtype)
    pad_ref[1:H + 1, W + 1:W + 2, :] = jnp.zeros((H, 1, pp), pad_ref.dtype)
    pad_ref[1:H + 1, 1:W + 1, :] = y1.astype(pad_ref.dtype).reshape(H, W, pp)

    # build (H*W, 9*Pp) patch matrix in VMEM (9 lane-dense copies)
    for k in range(9):
        dh, dw = k // 3, k % 3
        col_ref[:, k * pp:(k + 1) * pp] = (
            pad_ref[dh:dh + H, dw:dw + W, :].reshape(H * W, pp))

    y2 = jnp.dot(col_ref[...], w2_ref[...], preferred_element_type=jnp.float32)
    y2 = jnp.maximum(y2 + b2_ref[...], 0.0)            # (H*W, Pp) f32

    # --- conv3 (1x1) + bias ---------------------------------------------------
    y3 = jnp.dot(y2.astype(jnp.bfloat16), w3_ref[...],
                 preferred_element_type=jnp.float32)
    y3 = y3 + b3_ref[...]                              # (H*W, Coutp) f32

    # --- residual add + relu (downsample=None -> residual = x) ---------------
    out = jnp.maximum(y3 + xf.astype(jnp.float32), 0.0)
    o_ref[...] = out.reshape(H, W, coutp).astype(o_ref.dtype)


def bottleneck_pallas(x_nchw, params, eps=1e-5):
    N, cin, H, W = x_nchw.shape
    w1_t = params["w1"]                      # (P,  Cin, 1, 1)
    w2_t = params["w2"]                      # (P,  P,   3, 3)
    w3_t = params["w3"]                      # (4P, P,   1, 1)
    p = w1_t.shape[0]
    cout = w3_t.shape[0]

    # Implemented path: downsample=None => stride=1, residual = x, Cin == Cout.
    assert cin == cout == 4 * p, (cin, cout, p)

    # lane-dense (multiple-of-128) channel sizes
    cin_p = _round_up(cin, 128)
    pp = _round_up(p, 128)
    cout_p = _round_up(cout, 128)
    assert cin_p == cout_p

    def fold_bn(gamma, beta, mean, var):
        scale = (gamma / jnp.sqrt(var + eps)).astype(jnp.float32)
        bias = (beta - mean * scale).astype(jnp.float32)
        return scale, bias

    s1, b1 = fold_bn(*params["bn1"])
    s2, b2 = fold_bn(*params["bn2"])
    s3, b3 = fold_bn(*params["bn3"])

    # conv1 weights: (Cin, P), BN scale folded, padded, bf16
    w1k = jnp.transpose(w1_t[:, :, 0, 0], (1, 0)) * s1[None, :]
    w1k = jnp.pad(w1k, ((0, cin_p - cin), (0, pp - p))).astype(jnp.bfloat16)
    # conv2 weights: (3,3,Cin,Cout) -> im2col matrix (9*Pp, Pp), bf16
    w2k = jnp.transpose(w2_t, (2, 3, 1, 0)) * s2[None, None, None, :]
    w2k = jnp.pad(w2k, ((0, 0), (0, 0), (0, pp - p), (0, pp - p)))
    w2k = w2k.reshape(9 * pp, pp).astype(jnp.bfloat16)
    # conv3 weights: (P, 4P), padded, bf16
    w3k = jnp.transpose(w3_t[:, :, 0, 0], (1, 0)) * s3[None, :]
    w3k = jnp.pad(w3k, ((0, pp - p), (0, cout_p - cout))).astype(jnp.bfloat16)

    b1k = jnp.pad(b1.reshape(1, -1), ((0, 0), (0, pp - p)))
    b2k = jnp.pad(b2.reshape(1, -1), ((0, 0), (0, pp - p)))
    b3k = jnp.pad(b3.reshape(1, -1), ((0, 0), (0, cout_p - cout)))

    # NCHW -> NHWC, pad channels to lane width, cast MXU input to bf16
    x = jnp.transpose(x_nchw, (0, 2, 3, 1))
    x = jnp.pad(x, ((0, 0), (0, 0), (0, 0), (0, cin_p - cin))).astype(jnp.bfloat16)

    out_nhwc = pl.pallas_call(
        bottleneck_kernel,
        out_shape=jax.ShapeDtypeStruct((N, H, W, cout_p), x_nchw.dtype),
        grid_spec=pltpu.PrefetchScalarGridSpec(
            num_scalar_prefetch=0,
            grid=(N,),
            in_specs=[
                pl.BlockSpec((None, H, W, cin_p), lambda n: (n, 0, 0, 0)),  # x
                pl.BlockSpec((cin_p, pp), lambda n: (0, 0)),                # w1
                pl.BlockSpec((1, pp), lambda n: (0, 0)),                    # b1
                pl.BlockSpec((9 * pp, pp), lambda n: (0, 0)),               # w2
                pl.BlockSpec((1, pp), lambda n: (0, 0)),                    # b2
                pl.BlockSpec((pp, cout_p), lambda n: (0, 0)),               # w3
                pl.BlockSpec((1, cout_p), lambda n: (0, 0)),                # b3
            ],
            out_specs=pl.BlockSpec((None, H, W, cout_p), lambda n: (n, 0, 0, 0)),
            scratch_shapes=[
                pltpu.VMEM((H + 2, W + 2, pp), jnp.bfloat16),   # zero-padded y1
                pltpu.VMEM((H * W, 9 * pp), jnp.bfloat16),      # im2col patches
            ],
        ),
        compiler_params=pltpu.CompilerParams(
            dimension_semantics=("parallel",),
            vmem_limit_bytes=32 * 1024 * 1024,
        ),
    )(x, w1k, b1k, w2k, b2k, w3k, b3k)

    return jnp.transpose(out_nhwc[..., :cout], (0, 3, 1, 2))    # -> NCHW


# ------------------------ pure-JAX f32 reference (NCHW) ---------------------
def ref_bottleneck(x, params, eps=1e-5):
    def conv(x, w, stride=1, pad=0):
        return jax.lax.conv_general_dilated(
            x, w, window_strides=(stride, stride),
            padding=[(pad, pad), (pad, pad)],
            dimension_numbers=("NCHW", "OIHW", "NCHW"))

    def bn(x, gamma, beta, mean, var):
        r = lambda a: a.reshape(1, -1, 1, 1)
        return (x - r(mean)) / jnp.sqrt(r(var) + eps) * r(gamma) + r(beta)

    out = jax.nn.relu(bn(conv(x, params["w1"]), *params["bn1"]))
    out = jax.nn.relu(bn(conv(out, params["w2"], stride=1, pad=1), *params["bn2"]))
    out = bn(conv(out, params["w3"]), *params["bn3"])
    return jax.nn.relu(out + x)


if __name__ == "__main__":
    N, planes, H, W = 2, 4, 16, 16
    inplanes = planes * 4            # downsample=None => inplanes == planes*expansion

    key = jax.random.PRNGKey(0)
    ks = jax.random.split(key, 8)

    def bn_params(k, c):
        k1, k2, k3, k4 = jax.random.split(k, 4)
        gamma = 1.0 + 0.1 * jax.random.normal(k1, (c,), jnp.float32)
        beta = 0.1 * jax.random.normal(k2, (c,), jnp.float32)
        mean = 0.1 * jax.random.normal(k3, (c,), jnp.float32)
        var = jnp.abs(jax.random.normal(k4, (c,), jnp.float32)) + 0.5
        return (gamma, beta, mean, var)

    params = {
        "w1": 0.1 * jax.random.normal(ks[1], (planes, inplanes, 1, 1), jnp.float32),
        "w2": 0.1 * jax.random.normal(ks[2], (planes, planes, 3, 3), jnp.float32),
        "w3": 0.1 * jax.random.normal(ks[3], (planes * 4, planes, 1, 1), jnp.float32),
        "bn1": bn_params(ks[4], planes),
        "bn2": bn_params(ks[5], planes),
        "bn3": bn_params(ks[6], planes * 4),
    }

    x = jax.random.normal(ks[0], (N, inplanes, H, W), jnp.float32)

    out = jax.block_until_ready(bottleneck_pallas(x, params))
    ref = ref_bottleneck(x, params)

    assert out.shape == (N, planes * 4, H, W), out.shape
    max_err = float(jnp.max(jnp.abs(out - ref)))
    # tolerance reflects bf16 MXU inputs (f32 accumulation) vs. pure-f32 reference
    assert jnp.allclose(out, ref, atol=5e-2, rtol=5e-2), max_err
    print("KERNEL_OK")
</pallas_src>

<mosaic_0001>
module attributes {stable_mosaic.version = 11 : i64} {
  func.func @bottleneck_kernel(%arg0: i32, %arg1: memref<1x16x16x128xbf16, #tpu.memory_space<vmem>>, %arg2: memref<128x128xbf16, #tpu.memory_space<vmem>>, %arg3: memref<1x128xf32, #tpu.memory_space<vmem>>, %arg4: memref<1152x128xbf16, #tpu.memory_space<vmem>>, %arg5: memref<1x128xf32, #tpu.memory_space<vmem>>, %arg6: memref<128x128xbf16, #tpu.memory_space<vmem>>, %arg7: memref<1x128xf32, #tpu.memory_space<vmem>>, %arg8: memref<1x16x16x128xf32, #tpu.memory_space<vmem>>, %arg9: memref<18x18x128xbf16, #tpu.memory_space<vmem>>, %arg10: memref<256x1152xbf16, #tpu.memory_space<vmem>>) attributes {dimension_semantics = [#tpu.dimension_semantics<parallel>], iteration_bounds = array<i64: 2>, scalar_prefetch = 0 : i64, scratch_operands = 2 : i64, tpu.core_type = #tpu.core_type<tc>, window_params = [{transform_indices = @transform_0, window_bounds = array<i64: 1, 16, 16, 128>}, {pipeline_mode = #tpu.pipeline_mode<synchronous>, transform_indices = @transform_1, window_bounds = array<i64: 128, 128>}, {pipeline_mode = #tpu.pipeline_mode<synchronous>, transform_indices = @transform_2, window_bounds = array<i64: 1, 128>}, {pipeline_mode = #tpu.pipeline_mode<synchronous>, transform_indices = @transform_3, window_bounds = array<i64: 1152, 128>}, {pipeline_mode = #tpu.pipeline_mode<synchronous>, transform_indices = @transform_4, window_bounds = array<i64: 1, 128>}, {pipeline_mode = #tpu.pipeline_mode<synchronous>, transform_indices = @transform_5, window_bounds = array<i64: 128, 128>}, {pipeline_mode = #tpu.pipeline_mode<synchronous>, transform_indices = @transform_6, window_bounds = array<i64: 1, 128>}, {transform_indices = @transform_7, window_bounds = array<i64: 1, 16, 16, 128>}]} {
    %c0 = arith.constant 0 : index
    %c0_0 = arith.constant 0 : index
    %c0_1 = arith.constant 0 : index
    %c0_2 = arith.constant 0 : index
    %0 = vector.load %arg1[%c0, %c0_0, %c0_1, %c0_2] : memref<1x16x16x128xbf16, #tpu.memory_space<vmem>>, vector<1x16x16x128xbf16>
    %1 = vector.shape_cast %0 : vector<1x16x16x128xbf16> to vector<16x16x128xbf16>
    %2 = vector.shape_cast %1 : vector<16x16x128xbf16> to vector<256x128xbf16>
    %c0_3 = arith.constant 0 : index
    %c0_4 = arith.constant 0 : index
    %3 = vector.load %arg2[%c0_3, %c0_4] : memref<128x128xbf16, #tpu.memory_space<vmem>>, vector<128x128xbf16>
    %cst = arith.constant dense<0.000000e+00> : vector<256x128xf32>
    %4 = tpu.matmul %2, %3, %cst {dimension_numbers = #tpu.dot_dimension_numbers<[1], [0], [0], [1], [0, 0, 1, 1], [], []>} : vector<256x128xbf16>, vector<128x128xbf16>, vector<256x128xf32> -> vector<256x128xf32>
    %c0_5 = arith.constant 0 : index
    %c0_6 = arith.constant 0 : index
    %5 = vector.load %arg3[%c0_5, %c0_6] : memref<1x128xf32, #tpu.memory_space<vmem>>, vector<1x128xf32>
    %6 = vector.broadcast %5 : vector<1x128xf32> to vector<256x128xf32>
    %7 = arith.addf %4, %6 : vector<256x128xf32>
    %cst_7 = arith.constant 0.000000e+00 : f32
    %8 = vector.broadcast %cst_7 : f32 to vector<256x128xf32>
    %9 = arith.maximumf %7, %8 : vector<256x128xf32>
    %cst_8 = arith.constant 0.000000e+00 : bf16
    %10 = vector.broadcast %cst_8 : bf16 to vector<1x18x128xbf16>
    %c0_9 = arith.constant 0 : index
    %c0_10 = arith.constant 0 : index
    %c0_11 = arith.constant 0 : index
    %11 = vector.load %arg9[%c0_9, %c0_10, %c0_11] : memref<18x18x128xbf16, #tpu.memory_space<vmem>>, vector<1x18x128xbf16>
    tpu.vector_store %arg9[%c0_9, %c0_10, %c0_11], %10 {strides = array<i32>} : memref<18x18x128xbf16, #tpu.memory_space<vmem>>, vector<1x18x128xbf16>,
    %cst_12 = arith.constant 0.000000e+00 : bf16
    %12 = vector.broadcast %cst_12 : bf16 to vector<1x18x128xbf16>
    %c17 = arith.constant 17 : index
    %c0_13 = arith.constant 0 : index
    %c0_14 = arith.constant 0 : index
    %13 = vector.load %arg9[%c17, %c0_13, %c0_14] : memref<18x18x128xbf16, #tpu.memory_space<vmem>>, vector<1x18x128xbf16>
    tpu.vector_store %arg9[%c17, %c0_13, %c0_14], %12 {strides = array<i32>} : memref<18x18x128xbf16, #tpu.memory_space<vmem>>, vector<1x18x128xbf16>,
    %cst_15 = arith.constant 0.000000e+00 : bf16
    %14 = vector.broadcast %cst_15 : bf16 to vector<16x1x128xbf16>
    %c1 = arith.constant 1 : index
    %c0_16 = arith.constant 0 : index
    %c0_17 = arith.constant 0 : index
    %15 = vector.load %arg9[%c1, %c0_16, %c0_17] : memref<18x18x128xbf16, #tpu.memory_space<vmem>>, vector<16x1x128xbf16>
    tpu.vector_store %arg9[%c1, %c0_16, %c0_17], %14 {strides = array<i32>} : memref<18x18x128xbf16, #tpu.memory_space<vmem>>, vector<16x1x128xbf16>,
    %cst_18 = arith.constant 0.000000e+00 : bf16
    %16 = vector.broadcast %cst_18 : bf16 to vector<16x1x128xbf16>
    %c1_19 = arith.constant 1 : index
    %c17_20 = arith.constant 17 : index
    %c0_21 = arith.constant 0 : index
    %17 = vector.load %arg9[%c1_19, %c17_20, %c0_21] : memref<18x18x128xbf16, #tpu.memory_space<vmem>>, vector<16x1x128xbf16>
    tpu.vector_store %arg9[%c1_19, %c17_20, %c0_21], %16 {strides = array<i32>} : memref<18x18x128xbf16, #tpu.memory_space<vmem>>, vector<16x1x128xbf16>,
    %18 = arith.truncf %9 : vector<256x128xf32> to vector<256x128xbf16>
    %19 = vector.shape_cast %18 : vector<256x128xbf16> to vector<16x16x128xbf16>
    %c1_22 = arith.constant 1 : index
    %c1_23 = arith.constant 1 : index
    %c0_24 = arith.constant 0 : index
    %20 = vector.load %arg9[%c1_22, %c1_23, %c0_24] : memref<18x18x128xbf16, #tpu.memory_space<vmem>>, vector<16x16x128xbf16>
    tpu.vector_store %arg9[%c1_22, %c1_23, %c0_24], %19 {strides = array<i32>} : memref<18x18x128xbf16, #tpu.memory_space<vmem>>, vector<16x16x128xbf16>,
    %c0_25 = arith.constant 0 : index
    %c0_26 = arith.constant 0 : index
    %c0_27 = arith.constant 0 : index
    %21 = vector.load %arg9[%c0_25, %c0_26, %c0_27] : memref<18x18x128xbf16, #tpu.memory_space<vmem>>, vector<16x16x128xbf16>
    %22 = vector.shape_cast %21 : vector<16x16x128xbf16> to vector<256x128xbf16>
    %c0_28 = arith.constant 0 : index
    %c0_29 = arith.constant 0 : index
    %23 = vector.load %arg10[%c0_28, %c0_29] : memref<256x1152xbf16, #tpu.memory_space<vmem>>, vector<256x128xbf16>
    tpu.vector_store %arg10[%c0_28, %c0_29], %22 {strides = array<i32>} : memref<256x1152xbf16, #tpu.memory_space<vmem>>, vector<256x128xbf16>,
    %c0_30 = arith.constant 0 : index
    %c1_31 = arith.constant 1 : index
    %c0_32 = arith.constant 0 : index
    %24 = vector.load %arg9[%c0_30, %c1_31, %c0_32] : memref<18x18x128xbf16, #tpu.memory_space<vmem>>, vector<16x16x128xbf16>
    %25 = vector.shape_cast %24 : vector<16x16x128xbf16> to vector<256x128xbf16>
    %c0_33 = arith.constant 0 : index
    %c128 = arith.constant 128 : index
    %26 = vector.load %arg10[%c0_33, %c128] : memref<256x1152xbf16, #tpu.memory_space<vmem>>, vector<256x128xbf16>
    tpu.vector_store %arg10[%c0_33, %c128], %25 {strides = array<i32>} : memref<256x1152xbf16, #tpu.memory_space<vmem>>, vector<256x128xbf16>,
    %c0_34 = arith.constant 0 : index
    %c2 = arith.constant 2 : index
    %c0_35 = arith.constant 0 : index
    %27 = vector.load %arg9[%c0_34, %c2, %c0_35] : memref<18x18x128xbf16, #tpu.memory_space<vmem>>, vector<16x16x128xbf16>
    %28 = vector.shape_cast %27 : vector<16x16x128xbf16> to vector<256x128xbf16>
    %c0_36 = arith.constant 0 : index
    %c256 = arith.constant 256 : index
    %29 = vector.load %arg10[%c0_36, %c256] : memref<256x1152xbf16, #tpu.memory_space<vmem>>, vector<256x128xbf16>
    tpu.vector_store %arg10[%c0_36, %c256], %28 {strides = array<i32>} : memref<256x1152xbf16, #tpu.memory_space<vmem>>, vector<256x128xbf16>,
    %c1_37 = arith.constant 1 : index
    %c0_38 = arith.constant 0 : index
    %c0_39 = arith.constant 0 : index
    %30 = vector.load %arg9[%c1_37, %c0_38, %c0_39] : memref<18x18x128xbf16, #tpu.memory_space<vmem>>, vector<16x16x128xbf16>
    %31 = vector.shape_cast %30 : vector<16x16x128xbf16> to vector<256x128xbf16>
    %c0_40 = arith.constant 0 : index
    %c384 = arith.constant 384 : index
    %32 = vector.load %arg10[%c0_40, %c384] : memref<256x1152xbf16, #tpu.memory_space<vmem>>, vector<256x128xbf16>
    tpu.vector_store %arg10[%c0_40, %c384], %31 {strides = array<i32>} : memref<256x1152xbf16, #tpu.memory_space<vmem>>, vector<256x128xbf16>,
    %c1_41 = arith.constant 1 : index
    %c1_42 = arith.constant 1 : index
    %c0_43 = arith.constant 0 : index
    %33 = vector.load %arg9[%c1_41, %c1_42, %c0_43] : memref<18x18x128xbf16, #tpu.memory_space<vmem>>, vector<16x16x128xbf16>
    %34 = vector.shape_cast %33 : vector<16x16x128xbf16> to vector<256x128xbf16>
    %c0_44 = arith.constant 0 : index
    %c512 = arith.constant 512 : index
    %35 = vector.load %arg10[%c0_44, %c512] : memref<256x1152xbf16, #tpu.memory_space<vmem>>, vector<256x128xbf16>
    tpu.vector_store %arg10[%c0_44, %c512], %34 {strides = array<i32>} : memref<256x1152xbf16, #tpu.memory_space<vmem>>, vector<256x128xbf16>,
    %c1_45 = arith.constant 1 : index
    %c2_46 = arith.constant 2 : index
    %c0_47 = arith.constant 0 : index
    %36 = vector.load %arg9[%c1_45, %c2_46, %c0_47] : memref<18x18x128xbf16, #tpu.memory_space<vmem>>, vector<16x16x128xbf16>
    %37 = vector.shape_cast %36 : vector<16x16x128xbf16> to vector<256x128xbf16>
    %c0_48 = arith.constant 0 : index
    %c640 = arith.constant 640 : index
    %38 = vector.load %arg10[%c0_48, %c640] : memref<256x1152xbf16, #tpu.memory_space<vmem>>, vector<256x128xbf16>
    tpu.vector_store %arg10[%c0_48, %c640], %37 {strides = array<i32>} : memref<256x1152xbf16, #tpu.memory_space<vmem>>, vector<256x128xbf16>,
    %c2_49 = arith.constant 2 : index
    %c0_50 = arith.constant 0 : index
    %c0_51 = arith.constant 0 : index
    %39 = vector.load %arg9[%c2_49, %c0_50, %c0_51] : memref<18x18x128xbf16, #tpu.memory_space<vmem>>, vector<16x16x128xbf16>
    %40 = vector.shape_cast %39 : vector<16x16x128xbf16> to vector<256x128xbf16>
    %c0_52 = arith.constant 0 : index
    %c768 = arith.constant 768 : index
    %41 = vector.load %arg10[%c0_52, %c768] : memref<256x1152xbf16, #tpu.memory_space<vmem>>, vector<256x128xbf16>
    tpu.vector_store %arg10[%c0_52, %c768], %40 {strides = array<i32>} : memref<256x1152xbf16, #tpu.memory_space<vmem>>, vector<256x128xbf16>,
    %c2_53 = arith.constant 2 : index
    %c1_54 = arith.constant 1 : index
    %c0_55 = arith.constant 0 : index
    %42 = vector.load %arg9[%c2_53, %c1_54, %c0_55] : memref<18x18x128xbf16, #tpu.memory_space<vmem>>, vector<16x16x128xbf16>
    %43 = vector.shape_cast %42 : vector<16x16x128xbf16> to vector<256x128xbf16>
    %c0_56 = arith.constant 0 : index
    %c896 = arith.constant 896 : index
    %44 = vector.load %arg10[%c0_56, %c896] : memref<256x1152xbf16, #tpu.memory_space<vmem>>, vector<256x128xbf16>
    tpu.vector_store %arg10[%c0_56, %c896], %43 {strides = array<i32>} : memref<256x1152xbf16, #tpu.memory_space<vmem>>, vector<256x128xbf16>,
    %c2_57 = arith.constant 2 : index
    %c2_58 = arith.constant 2 : index
    %c0_59 = arith.constant 0 : index
    %45 = vector.load %arg9[%c2_57, %c2_58, %c0_59] : memref<18x18x128xbf16, #tpu.memory_space<vmem>>, vector<16x16x128xbf16>
    %46 = vector.shape_cast %45 : vector<16x16x128xbf16> to vector<256x128xbf16>
    %c0_60 = arith.constant 0 : index
    %c1024 = arith.constant 1024 : index
    %47 = vector.load %arg10[%c0_60, %c1024] : memref<256x1152xbf16, #tpu.memory_space<vmem>>, vector<256x128xbf16>
    tpu.vector_store %arg10[%c0_60, %c1024], %46 {strides = array<i32>} : memref<256x1152xbf16, #tpu.memory_space<vmem>>, vector<256x128xbf16>,
    %c0_61 = arith.constant 0 : index
    %c0_62 = arith.constant 0 : index
    %48 = vector.load %arg10[%c0_61, %c0_62] : memref<256x1152xbf16, #tpu.memory_space<vmem>>, vector<256x1152xbf16>
    %c0_63 = arith.constant 0 : index
    %c0_64 = arith.constant 0 : index
    %49 = vector.load %arg4[%c0_63, %c0_64] : memref<1152x128xbf16, #tpu.memory_space<vmem>>, vector<1152x128xbf16>
    %cst_65 = arith.constant dense<0.000000e+00> : vector<256x128xf32>
    %50 = tpu.matmul %48, %49, %cst_65 {dimension_numbers = #tpu.dot_dimension_numbers<[1], [0], [0], [1], [0, 0, 1, 1], [], []>} : vector<256x1152xbf16>, vector<1152x128xbf16>, vector<256x128xf32> -> vector<256x128xf32>
    %c0_66 = arith.constant 0 : index
    %c0_67 = arith.constant 0 : index
    %51 = vector.load %arg5[%c0_66, %c0_67] : memref<1x128xf32, #tpu.memory_space<vmem>>, vector<1x128xf32>
    %52 = vector.broadcast %51 : vector<1x128xf32> to vector<256x128xf32>
    %53 = arith.addf %50, %52 : vector<256x128xf32>
    %cst_68 = arith.constant 0.000000e+00 : f32
    %54 = vector.broadcast %cst_68 : f32 to vector<256x128xf32>
    %55 = arith.maximumf %53, %54 : vector<256x128xf32>
    %56 = arith.truncf %55 : vector<256x128xf32> to vector<256x128xbf16>
    %c0_69 = arith.constant 0 : index
    %c0_70 = arith.constant 0 : index
    %57 = vector.load %arg6[%c0_69, %c0_70] : memref<128x128xbf16, #tpu.memory_space<vmem>>, vector<128x128xbf16>
    %cst_71 = arith.constant dense<0.000000e+00> : vector<256x128xf32>
    %58 = tpu.matmul %56, %57, %cst_71 {dimension_numbers = #tpu.dot_dimension_numbers<[1], [0], [0], [1], [0, 0, 1, 1], [], []>} : vector<256x128xbf16>, vector<128x128xbf16>, vector<256x128xf32> -> vector<256x128xf32>
    %c0_72 = arith.constant 0 : index
    %c0_73 = arith.constant 0 : index
    %59 = vector.load %arg7[%c0_72, %c0_73] : memref<1x128xf32, #tpu.memory_space<vmem>>, vector<1x128xf32>
    %60 = vector.broadcast %59 : vector<1x128xf32> to vector<256x128xf32>
    %61 = arith.addf %58, %60 : vector<256x128xf32>
    %62 = arith.extf %2 : vector<256x128xbf16> to vector<256x128xf32>
    %63 = arith.addf %61, %62 : vector<256x128xf32>
    %cst_74 = arith.constant 0.000000e+00 : f32
    %64 = vector.broadcast %cst_74 : f32 to vector<256x128xf32>
    %65 = arith.maximumf %63, %64 : vector<256x128xf32>
    %66 = vector.shape_cast %65 : vector<256x128xf32> to vector<16x16x128xf32>
    %c0_75 = arith.constant 0 : index
    %c0_76 = arith.constant 0 : index
    %c0_77 = arith.constant 0 : index
    %c0_78 = arith.constant 0 : index
    %67 = vector.load %arg8[%c0_75, %c0_76, %c0_77, %c0_78] : memref<1x16x16x128xf32, #tpu.memory_space<vmem>>, vector<1x16x16x128xf32>
    %68 = vector.shape_cast %67 : vector<1x16x16x128xf32> to vector<16x16x128xf32>
    %69 = vector.shape_cast %66 : vector<16x16x128xf32> to vector<1x16x16x128xf32>
    tpu.vector_store %arg8[%c0_75, %c0_76, %c0_77, %c0_78], %69 {strides = array<i32>} : memref<1x16x16x128xf32, #tpu.memory_space<vmem>>, vector<1x16x16x128xf32>,
    return
  }
  func.func @transform_0(%arg0: i32) -> (i32, i32, i32, i32) {
    %c0_i32 = arith.constant 0 : i32
    %c0_i32_0 = arith.constant 0 : i32
    %c0_i32_1 = arith.constant 0 : i32
    %c0_i32_2 = arith.constant 0 : i32
    return %arg0, %c0_i32, %c0_i32_0, %c0_i32_1 : i32, i32, i32, i32
  }
  func.func @transform_1(%arg0: i32) -> (i32, i32) {
    %c0_i32 = arith.constant 0 : i32
    %c0_i32_0 = arith.constant 0 : i32
    %c0_i32_1 = arith.constant 0 : i32
    return %c0_i32, %c0_i32_0 : i32, i32
  }
  func.func @transform_2(%arg0: i32) -> (i32, i32) {
    %c0_i32 = arith.constant 0 : i32
    %c0_i32_0 = arith.constant 0 : i32
    %c0_i32_1 = arith.constant 0 : i32
    return %c0_i32, %c0_i32_0 : i32, i32
  }
  func.func @transform_3(%arg0: i32) -> (i32, i32) {
    %c0_i32 = arith.constant 0 : i32
    %c0_i32_0 = arith.constant 0 : i32
    %c0_i32_1 = arith.constant 0 : i32
    return %c0_i32, %c0_i32_0 : i32, i32
  }
  func.func @transform_4(%arg0: i32) -> (i32, i32) {
    %c0_i32 = arith.constant 0 : i32
    %c0_i32_0 = arith.constant 0 : i32
    %c0_i32_1 = arith.constant 0 : i32
    return %c0_i32, %c0_i32_0 : i32, i32
  }
  func.func @transform_5(%arg0: i32) -> (i32, i32) {
    %c0_i32 = arith.constant 0 : i32
    %c0_i32_0 = arith.constant 0 : i32
    %c0_i32_1 = arith.constant 0 : i32
    return %c0_i32, %c0_i32_0 : i32, i32
  }
  func.func @transform_6(%arg0: i32) -> (i32, i32) {
    %c0_i32 = arith.constant 0 : i32
    %c0_i32_0 = arith.constant 0 : i32
    %c0_i32_1 = arith.constant 0 : i32
    return %c0_i32, %c0_i32_0 : i32, i32
  }
  func.func @transform_7(%arg0: i32) -> (i32, i32, i32, i32) {
    %c0_i32 = arith.constant 0 : i32
    %c0_i32_0 = arith.constant 0 : i32
    %c0_i32_1 = arith.constant 0 : i32
    %c0_i32_2 = arith.constant 0 : i32
    return %arg0, %c0_i32, %c0_i32_0, %c0_i32_1 : i32, i32, i32, i32
  }
}

</mosaic_0001>

<llo_original>
// kernel: tpu_custom_call.1
$region0: #{tpu_custom_call.1}
  #allocation0 [shape = 'u32[]', space=smem, size = 0x4, offset = 0x4, fixed_abs, tag = 'smem constant byte address 0x4 - core index']
  #allocation1 [shape = 'u32[144,128]{1,0:T(1,128)}', space=vmem, size = 0x12000, scoped, tag = 'internal scratch']
  #allocation2 [shape = 'bf16[18,18,128]{2,1,0:T(8,128)(2,1)}', space=vmem, size = 0x1b000, scoped, tag = 'scratch operand']
  #allocation3 [shape = 'bf16[256,1152]{1,0:T(16,128)(2,1)}', space=vmem, size = 0x90000, scoped, tag = 'scratch operand']
  %s0 = inlined_call_operand.hbm [shape: bf16[2,16,16,128], index: 0, kind: input, shape index: {}]
  %s1 = inlined_call_operand.hbm [shape: bf16[128,128], index: 1, kind: input, shape index: {}]
  %s2 = inlined_call_operand.vmem [shape: f32[1,128], index: 2, kind: input, shape index: {}]
  %s3 = inlined_call_operand.hbm [shape: bf16[1152,128], index: 3, kind: input, shape index: {}]
  %s4 = inlined_call_operand.vmem [shape: f32[1,128], index: 4, kind: input, shape index: {}]
  %s5 = inlined_call_operand.hbm [shape: bf16[128,128], index: 5, kind: input, shape index: {}]
  %s6 = inlined_call_operand.vmem [shape: f32[1,128], index: 6, kind: input, shape index: {}]
  %s7 = inlined_call_operand.hbm [shape: f32[2,16,16,128], index: 7, kind: output, shape index: {}]
  %s8 = sld [smem:[#allocation0]]
  $region77: #{tpu_custom_call.1} parent=0
    _
  %s10 = ssub.s32 1, %s8
  %s11 = scalar_select 0, %s10, %s8
  $region1: #{tpu_custom_call.1} parent=0
    #allocation4 [shape = 'u8[131072]{0}', space=vmem, size = 0x20000, scoped, tag = 'input window, operand 0']
    #allocation5 [shape = 's32[2]{0}', space=sflag, size = 0x8, scoped, tag = 'scoped memory for tpu_custom_call.1']
    #allocation6 [shape = 's32[2]{0}', space=sflag, size = 0x8, scoped, tag = 'scoped memory for tpu_custom_call.1']
    #allocation7 [shape = 'u8[32768]{0}', space=vmem, size = 0x8000, scoped, tag = 'input window, operand 1, single buffered']
    #allocation8 [shape = 's32[1]{0}', space=sflag, size = 0x4, scoped, tag = 'scoped memory for tpu_custom_call.1']
    #allocation9 [shape = 'u8[294912]{0}', space=vmem, size = 0x48000, scoped, tag = 'input window, operand 3, single buffered']
    #allocation10 [shape = 'u8[32768]{0}', space=vmem, size = 0x8000, scoped, tag = 'input window, operand 5, single buffered']
    #allocation11 [shape = 's32[1]{0}', space=sflag, size = 0x4, scoped, tag = 'scoped memory for tpu_custom_call.1']
    #allocation12 [shape = 'u8[262144]{0}', space=vmem, size = 0x40000, scoped, tag = 'output window, operand 0']
    %12 = vsyncpa [#allocation5], 0
    %s13 = scalar_lea.sflag [#allocation5], 1
    %14 = vsyncpa %s13, 0
    %15 = vsyncpa [#allocation8], 0
    %16 = vsyncpa [#allocation11], 0
    %17 = vsyncpa [#allocation6], 0
    %s18 = scalar_lea.sflag [#allocation6], 1
    %19 = vsyncpa %s18, 0
    loop: start=0, step=1, limit=4
    $region2: #{tpu_custom_call.1} parent=1 // loop_pre_header
      _
    $region3: #{tpu_custom_call.1} parent=1 // loop_header
      %s21 = sphi 0, %s25
      %p22 = scmp.ge.s32.totalorder %s21, 4
      %s31 = sphi 0, %s33
      %s34 = sphi 0, %s31
      %s35 = sphi 0, %s34
      %s51 = sphi 0, %s35
      %s55 = sphi 0, %s55
      %s57 = sphi 0, %s55
      %s58 = sphi 0, %s57
      %s72 = sphi 0, %s58
      %s76 = sphi 0, %s76
      %s78 = sphi 0, %s76
      %s79 = sphi 0, %s78
      %s93 = sphi 0, %s79
      %s97 = sphi 0, %s97
      %s99 = sphi 0, %s97
      %s100 = sphi 0, %s99
      %s114 = sphi 0, %s100
      %s118 = sphi 0, %s118
      %s120 = sphi 0, %s118
      %s121 = sphi 0, %s120
      %s135 = sphi 0, %s121
      %s139 = sphi 0, %s139
      %s141 = sphi 0, %s139
      %s142 = sphi 0, %s141
      %s156 = sphi 0, %s142
      %s160 = sphi 0, %s160
      %s162 = sphi 0, %s160
      %s163 = sphi 0, %s162
      %s177 = sphi 0, %s163
      %s183 = sphi 0, %s185
      %s186 = sphi 0, %s183
      %s187 = sphi 0, %s186
      %s203 = sphi 0, %s187
    $region4: #{tpu_custom_call.1} parent=1 // loop_header_branch
      %24 = sbr.rel (%p22) target = $region8
    $region5: #{tpu_custom_call.1} parent=1 // loop_body
      %s26 = ssub.s32 %s21, 1
      %s27 = ssub.s32 %s21, 2
      %s28 = sadd.s32 %s21, 1
      %s29 = ssub.s32 %s21, %s28
      %p30 = scmp.eq.s32.totalorder %s29, 0
      %s32 = sadd.s32 %s31, 1
      %s33 = scalar_select %p30, %s31, %s32
      %p36 = pneg %p30
      %p37 = scmp.eq.s32.totalorder %s21, 1
      %p38 = por %p36, %p37
      %p39 = scmp.ne.s32.totalorder %s31, %s34
      %p40 = scmp.eq.s32.totalorder %s21, 0
      %p41 = por %p39, %p40
      %p42 = scmp.ne.s32.totalorder %s31, %s34
      %p43 = scmp.eq.s32.totalorder %s26, 1
      %p44 = por %p42, %p43
      %p45 = scmp.ne.s32.totalorder %s34, %s35
      %p46 = scmp.eq.s32.totalorder %s26, 0
      %p47 = por %p45, %p46
      %p48 = scmp.ne.s32.totalorder %s34, %s35
      %p49 = scmp.eq.s32.totalorder %s27, 1
      %p50 = por %p48, %p49
      %p52 = scmp.ne.s32.totalorder %s35, %s51
      %p53 = scmp.eq.s32.totalorder %s27, 0
      %p54 = por %p52, %p53
      %s56 = sadd.s32 %s55, 1
      %p59 = scmp.eq.s32.totalorder %s21, 1
      %p60 = scmp.ne.s32.totalorder %s55, %s57
      %p61 = scmp.eq.s32.totalorder %s21, 0
      %p62 = por %p60, %p61
      %p63 = scmp.ne.s32.totalorder %s55, %s57
      %p64 = scmp.eq.s32.totalorder %s26, 1
      %p65 = por %p63, %p64
      %p66 = scmp.ne.s32.totalorder %s57, %s58
      %p67 = scmp.eq.s32.totalorder %s26, 0
      %p68 = por %p66, %p67
      %p69 = scmp.ne.s32.totalorder %s57, %s58
      %p70 = scmp.eq.s32.totalorder %s27, 1
      %p71 = por %p69, %p70
      %p73 = scmp.ne.s32.totalorder %s58, %s72
      %p74 = scmp.eq.s32.totalorder %s27, 0
      %p75 = por %p73, %p74
      %s77 = sadd.s32 %s76, 1
      %p80 = scmp.eq.s32.totalorder %s21, 1
      %p81 = scmp.ne.s32.totalorder %s76, %s78
      %p82 = scmp.eq.s32.totalorder %s21, 0
      %p83 = por %p81, %p82
      %p84 = scmp.ne.s32.totalorder %s76, %s78
      %p85 = scmp.eq.s32.totalorder %s26, 1
      %p86 = por %p84, %p85
      %p87 = scmp.ne.s32.totalorder %s78, %s79
      %p88 = scmp.eq.s32.totalorder %s26, 0
      %p89 = por %p87, %p88
      %p90 = scmp.ne.s32.totalorder %s78, %s79
      %p91 = scmp.eq.s32.totalorder %s27, 1
      %p92 = por %p90, %p91
      %p94 = scmp.ne.s32.totalorder %s79, %s93
      %p95 = scmp.eq.s32.totalorder %s27, 0
      %p96 = por %p94, %p95
      %s98 = sadd.s32 %s97, 1
      %p101 = scmp.eq.s32.totalorder %s21, 1
      %p102 = scmp.ne.s32.totalorder %s97, %s99
      %p103 = scmp.eq.s32.totalorder %s21, 0
      %p104 = por %p102, %p103
      %p105 = scmp.ne.s32.totalorder %s97, %s99
      %p106 = scmp.eq.s32.totalorder %s26, 1
      %p107 = por %p105, %p106
      %p108 = scmp.ne.s32.totalorder %s99, %s100
      %p109 = scmp.eq.s32.totalorder %s26, 0
      %p110 = por %p108, %p109
      %p111 = scmp.ne.s32.totalorder %s99, %s100
      %p112 = scmp.eq.s32.totalorder %s27, 1
      %p113 = por %p111, %p112
      %p115 = scmp.ne.s32.totalorder %s100, %s114
      %p116 = scmp.eq.s32.totalorder %s27, 0
      %p117 = por %p115, %p116
      %s119 = sadd.s32 %s118, 1
      %p122 = scmp.eq.s32.totalorder %s21, 1
      %p123 = scmp.ne.s32.totalorder %s118, %s120
      %p124 = scmp.eq.s32.totalorder %s21, 0
      %p125 = por %p123, %p124
      %p126 = scmp.ne.s32.totalorder %s118, %s120
      %p127 = scmp.eq.s32.totalorder %s26, 1
      %p128 = por %p126, %p127
      %p129 = scmp.ne.s32.totalorder %s120, %s121
      %p130 = scmp.eq.s32.totalorder %s26, 0
      %p131 = por %p129, %p130
      %p132 = scmp.ne.s32.totalorder %s120, %s121
      %p133 = scmp.eq.s32.totalorder %s27, 1
      %p134 = por %p132, %p133
      %p136 = scmp.ne.s32.totalorder %s121, %s135
      %p137 = scmp.eq.s32.totalorder %s27, 0
      %p138 = por %p136, %p137
      %s140 = sadd.s32 %s139, 1
      %p143 = scmp.eq.s32.totalorder %s21, 1
      %p144 = scmp.ne.s32.totalorder %s139, %s141
      %p145 = scmp.eq.s32.totalorder %s21, 0
      %p146 = por %p144, %p145
      %p147 = scmp.ne.s32.totalorder %s139, %s141
      %p148 = scmp.eq.s32.totalorder %s26, 1
      %p149 = por %p147, %p148
      %p150 = scmp.ne.s32.totalorder %s141, %s142
      %p151 = scmp.eq.s32.totalorder %s26, 0
      %p152 = por %p150, %p151
      %p153 = scmp.ne.s32.totalorder %s141, %s142
      %p154 = scmp.eq.s32.totalorder %s27, 1
      %p155 = por %p153, %p154
      %p157 = scmp.ne.s32.totalorder %s142, %s156
      %p158 = scmp.eq.s32.totalorder %s27, 0
      %p159 = por %p157, %p158
      %s161 = sadd.s32 %s160, 1
      %p164 = scmp.eq.s32.totalorder %s21, 1
      %p165 = scmp.ne.s32.totalorder %s160, %s162
      %p166 = scmp.eq.s32.totalorder %s21, 0
      %p167 = por %p165, %p166
      %p168 = scmp.ne.s32.totalorder %s160, %s162
      %p169 = scmp.eq.s32.totalorder %s26, 1
      %p170 = por %p168, %p169
      %p171 = scmp.ne.s32.totalorder %s162, %s163
      %p172 = scmp.eq.s32.totalorder %s26, 0
      %p173 = por %p171, %p172
      %p174 = scmp.ne.s32.totalorder %s162, %s163
      %p175 = scmp.eq.s32.totalorder %s27, 1
      %p176 = por %p174, %p175
      %p178 = scmp.ne.s32.totalorder %s163, %s177
      %p179 = scmp.eq.s32.totalorder %s27, 0
      %p180 = por %p178, %p179
      %s181 = ssub.s32 %s21, %s28
      %p182 = scmp.eq.s32.totalorder %s181, 0
      %s184 = sadd.s32 %s183, 1
      %s185 = scalar_select %p182, %s183, %s184
      %p188 = pneg %p182
      %p189 = scmp.eq.s32.totalorder %s21, 1
      %p190 = por %p188, %p189
      %p191 = scmp.ne.s32.totalorder %s183, %s186
      %p192 = scmp.eq.s32.totalorder %s21, 0
      %p193 = por %p191, %p192
      %p194 = scmp.ne.s32.totalorder %s183, %s186
      %p195 = scmp.eq.s32.totalorder %s26, 1
      %p196 = por %p194, %p195
      %p197 = scmp.ne.s32.totalorder %s186, %s187
      %p198 = scmp.eq.s32.totalorder %s26, 0
      %p199 = por %p197, %p198
      %p200 = scmp.ne.s32.totalorder %s186, %s187
      %p201 = scmp.eq.s32.totalorder %s27, 1
      %p202 = por %p200, %p201
      %p204 = scmp.ne.s32.totalorder %s187, %s203
      %p205 = scmp.eq.s32.totalorder %s27, 0
      %p206 = por %p204, %p205
      %p207 = scmp.le.s32.totalorder 1, %s21
      %p208 = scmp.lt.s32.totalorder %s21, 3
      %p209 = pnand %p207, %p208
      %p210 = pneg %p209
      // Predicated region
      $region9: #{tpu_custom_call.1} parent=5 // pred_check
        _
      $region10: #{tpu_custom_call.1} parent=5 // pred_check_branch
        %212 = sbr.rel (%p209) target = $region12
      $region11: #{tpu_custom_call.1} parent=5 // pred_region
        %s213 = ssub.s32 %s21, 1
        // Predicated region
        $region13: #{tpu_custom_call.1} parent=11 // pred_check
          %p214 = pneg %p68
        $region14: #{tpu_custom_call.1} parent=11 // pred_check_branch
          %216 = sbr.rel (%p214) target = $region16
        $region15: #{tpu_custom_call.1} parent=11 // pred_region
          %s218 = ssub.s32 1024, 1024
          %219 = vsyncadd [#allocation8], %s218
          %s220 = sshll.u32 [#allocation7], 4
          %s221 = int_to_ptr.vmem [resolvable:$true] %s220
          %226 = dma.hbm_to_vmem [thread:$0]  %s1, 1024, %s221, [#allocation8], 64, 64, 4
        $region16: #{tpu_custom_call.1} parent=11 // pred_fallthru
          _
        // Predicated region
        $region17: #{tpu_custom_call.1} parent=11 // pred_check
          %p227 = pneg %p89
        $region18: #{tpu_custom_call.1} parent=11 // pred_check_branch
          %229 = sbr.rel (%p227) target = $region20
        $region19: #{tpu_custom_call.1} parent=11 // pred_region
          _
        $region20: #{tpu_custom_call.1} parent=11 // pred_fallthru
          _
        // Predicated region
        $region21: #{tpu_custom_call.1} parent=11 // pred_check
          %p230 = pneg %p110
        $region22: #{tpu_custom_call.1} parent=11 // pred_check_branch
          %232 = sbr.rel (%p230) target = $region24
        $region23: #{tpu_custom_call.1} parent=11 // pred_region
          %s234 = ssub.s32 9216, 9216
          %235 = vsyncadd [#allocation8], %s234
          %s236 = sshll.u32 [#allocation9], 4
          %s237 = int_to_ptr.vmem [resolvable:$true] %s236
          %242 = dma.hbm_to_vmem [thread:$0]  %s3, 9216, %s237, [#allocation8], 64, 64, 4
        $region24: #{tpu_custom_call.1} parent=11 // pred_fallthru
          _
        // Predicated region
        $region25: #{tpu_custom_call.1} parent=11 // pred_check
          %p243 = pneg %p131
        $region26: #{tpu_custom_call.1} parent=11 // pred_check_branch
          %245 = sbr.rel (%p243) target = $region28
        $region27: #{tpu_custom_call.1} parent=11 // pred_region
          _
        $region28: #{tpu_custom_call.1} parent=11 // pred_fallthru
          _
        // Predicated region
        $region29: #{tpu_custom_call.1} parent=11 // pred_check
          %p246 = pneg %p152
        $region30: #{tpu_custom_call.1} parent=11 // pred_check_branch
          %248 = sbr.rel (%p246) target = $region32
        $region31: #{tpu_custom_call.1} parent=11 // pred_region
          %s250 = ssub.s32 1024, 1024
          %251 = vsyncadd [#allocation11], %s250
          %s252 = sshll.u32 [#allocation10], 4
          %s253 = int_to_ptr.vmem [resolvable:$true] %s252
          %258 = dma.hbm_to_vmem [thread:$0]  %s5, 1024, %s253, [#allocation11], 64, 64, 4
        $region32: #{tpu_custom_call.1} parent=11 // pred_fallthru
          _
        // Predicated region
        $region33: #{tpu_custom_call.1} parent=11 // pred_check
          %p259 = pneg %p173
        $region34: #{tpu_custom_call.1} parent=11 // pred_check_branch
          %261 = sbr.rel (%p259) target = $region36
        $region35: #{tpu_custom_call.1} parent=11 // pred_region
          _
        $region36: #{tpu_custom_call.1} parent=11 // pred_fallthru
          _
      $region12: #{tpu_custom_call.1} parent=5 // pred_fallthru
        _
      %p262 = scmp.lt.s32.totalorder %s21, 2
      // Predicated region
      $region37: #{tpu_custom_call.1} parent=5 // pred_check
        %p263 = pneg %p262
      $region38: #{tpu_custom_call.1} parent=5 // pred_check_branch
        %265 = sbr.rel (%p263) target = $region40
      $region39: #{tpu_custom_call.1} parent=5 // pred_region
        // Predicated region
        $region41: #{tpu_custom_call.1} parent=39 // pred_check
          %p266 = pneg %p41
        $region42: #{tpu_custom_call.1} parent=39 // pred_check_branch
          %268 = sbr.rel (%p266) target = $region44
        $region43: #{tpu_custom_call.1} parent=39 // pred_region
          %s269 = sand.u32 %s31, 1
          %s270 = scalar_lea.sflag [#allocation5], %s269
          %s271 = sand.u32 %s31, 1
          %s272 = smul.addr %s271, 128
          %s273 = scalar_lea.vmem [#allocation4], %s272
          %s275 = ssub.s32 2048, 2048
          %276 = vsyncadd %s270, %s275
          %s277 = smul.addr %s21, 32
          %s278 = smul.addr %s277, 64
          %s279 = scalar_lea.hbm %s0, %s278
          %s280 = sshll.u32 %s273, 4
          %s281 = int_to_ptr.vmem [resolvable:$true] %s280
          %286 = dma.hbm_to_vmem [thread:$0]  %s279, 2048, %s281, %s270, 64, 64, 4
        $region44: #{tpu_custom_call.1} parent=39 // pred_fallthru
          _
      $region40: #{tpu_custom_call.1} parent=5 // pred_fallthru
        _
      %p287 = scmp.le.s32.totalorder 1, %s21
      %p288 = scmp.lt.s32.totalorder %s21, 3
      %p289 = pnand %p287, %p288
      %p290 = pneg %p289
      // Predicated region
      $region45: #{tpu_custom_call.1} parent=5 // pred_check
        _
      $region46: #{tpu_custom_call.1} parent=5 // pred_check_branch
        %292 = sbr.rel (%p289) target = $region48
      $region47: #{tpu_custom_call.1} parent=5 // pred_region
        %s293 = ssub.s32 %s21, 1
        %s294 = sand.u32 %s34, 1
        %s295 = scalar_lea.sflag [#allocation5], %s294
        %s296 = sand.u32 %s34, 1
        %s297 = smul.addr %s296, 128
        %s298 = scalar_lea.vmem [#allocation4], %s297
        // Predicated region
        $region49: #{tpu_custom_call.1} parent=47 // pred_check
          %p299 = pneg %p47
        $region50: #{tpu_custom_call.1} parent=47 // pred_check_branch
          %301 = sbr.rel (%p299) target = $region52
        $region51: #{tpu_custom_call.1} parent=47 // pred_region
          %302 = dma.done %s295, 2048
        $region52: #{tpu_custom_call.1} parent=47 // pred_fallthru
          _
        // Predicated region
        $region53: #{tpu_custom_call.1} parent=47 // pred_check
          %p303 = pneg %p68
        $region54: #{tpu_custom_call.1} parent=47 // pred_check_branch
          %305 = sbr.rel (%p303) target = $region56
        $region55: #{tpu_custom_call.1} parent=47 // pred_region
          %306 = dma.done [#allocation8], 1024
        $region56: #{tpu_custom_call.1} parent=47 // pred_fallthru
          _
        // Predicated region
        $region57: #{tpu_custom_call.1} parent=47 // pred_check
          %p307 = pneg %p110
        $region58: #{tpu_custom_call.1} parent=47 // pred_check_branch
          %309 = sbr.rel (%p307) target = $region60
        $region59: #{tpu_custom_call.1} parent=47 // pred_region
          %310 = dma.done [#allocation8], 9216
        $region60: #{tpu_custom_call.1} parent=47 // pred_fallthru
          _
        // Predicated region
        $region61: #{tpu_custom_call.1} parent=47 // pred_check
          %p311 = pneg %p152
        $region62: #{tpu_custom_call.1} parent=47 // pred_check_branch
          %313 = sbr.rel (%p311) target = $region64
        $region63: #{tpu_custom_call.1} parent=47 // pred_region
          %314 = dma.done [#allocation11], 1024
        $region64: #{tpu_custom_call.1} parent=47 // pred_fallthru
          _
        %s315 = sand.u32 %s34, 1
        %s316 = scalar_lea.sflag [#allocation5], %s315
        %s317 = sand.u32 %s34, 1
        %s318 = smul.addr %s317, 128
        %s319 = scalar_lea.vmem [#allocation4], %s318
        %p320 = pneg %p47
        %p321 = pneg %p44
        %p322 = pneg %p68
        %p323 = pneg %p65
        %p324 = pneg %p89
        %p325 = pneg %p86
        %p326 = pneg %p110
        %p327 = pneg %p107
        %p328 = pneg %p131
        %p329 = pneg %p128
        %p330 = pneg %p152
        %p331 = pneg %p149
        %p332 = pneg %p173
        %p333 = pneg %p170
        %p334 = pneg %p199
        %p335 = pneg %p196
        %s336 = sand.u32 %s186, 1
        %s337 = scalar_lea.sflag [#allocation6], %s336
        %s338 = sand.u32 %s186, 1
        %s339 = smul.addr %s338, 256
        %s340 = scalar_lea.vmem [#allocation12], %s339
        %v342 = vld [vmem:[%s298] sm:$0xf]
        %v343 = vld [vmem:[%s298 + $0x4] sm:$0xf]
        %v344 = vld [vmem:[%s298 + $0x8] sm:$0xf]
        %v345 = vld [vmem:[%s298 + $0xc] sm:$0xf]
        %v346 = vld [vmem:[%s298 + $0x10] sm:$0xf]
        %v347 = vld [vmem:[%s298 + $0x14] sm:$0xf]
        %v348 = vld [vmem:[%s298 + $0x18] sm:$0xf]
        %v349 = vld [vmem:[%s298 + $0x1c] sm:$0xf]
        %v350 = vld [vmem:[%s298 + $0x20] sm:$0xf]
        %v351 = vld [vmem:[%s298 + $0x24] sm:$0xf]
        %v352 = vld [vmem:[%s298 + $0x28] sm:$0xf]
        %v353 = vld [vmem:[%s298 + $0x2c] sm:$0xf]
        %v354 = vld [vmem:[%s298 + $0x30] sm:$0xf]
        %v355 = vld [vmem:[%s298 + $0x34] sm:$0xf]
        %v356 = vld [vmem:[%s298 + $0x38] sm:$0xf]
        %v357 = vld [vmem:[%s298 + $0x3c] sm:$0xf]
        %v358 = vld [vmem:[%s298 + $0x40] sm:$0xf]
        %v359 = vld [vmem:[%s298 + $0x44] sm:$0xf]
        %v360 = vld [vmem:[%s298 + $0x48] sm:$0xf]
        %v361 = vld [vmem:[%s298 + $0x4c] sm:$0xf]
        %v362 = vld [vmem:[%s298 + $0x50] sm:$0xf]
        %v363 = vld [vmem:[%s298 + $0x54] sm:$0xf]
        %v364 = vld [vmem:[%s298 + $0x58] sm:$0xf]
        %v365 = vld [vmem:[%s298 + $0x5c] sm:$0xf]
        %v366 = vld [vmem:[%s298 + $0x60] sm:$0xf]
        %v367 = vld [vmem:[%s298 + $0x64] sm:$0xf]
        %v368 = vld [vmem:[%s298 + $0x68] sm:$0xf]
        %v369 = vld [vmem:[%s298 + $0x6c] sm:$0xf]
        %v370 = vld [vmem:[%s298 + $0x70] sm:$0xf]
        %v371 = vld [vmem:[%s298 + $0x74] sm:$0xf]
        %v372 = vld [vmem:[%s298 + $0x78] sm:$0xf]
        %v373 = vld [vmem:[%s298 + $0x7c] sm:$0xf]
        %v374 = vld [vmem:[#allocation7] sm:$0xf]
        %v375 = vld [vmem:[#allocation7 + $0x4] sm:$0xf]
        %v376 = vld [vmem:[#allocation7 + $0x8] sm:$0xf]
        %v377 = vld [vmem:[#allocation7 + $0xc] sm:$0xf]
        %v378 = vld [vmem:[#allocation7 + $0x10] sm:$0xf]
        %v379 = vld [vmem:[#allocation7 + $0x14] sm:$0xf]
        %v380 = vld [vmem:[#allocation7 + $0x18] sm:$0xf]
        %v381 = vld [vmem:[#allocation7 + $0x1c] sm:$0xf]
        %v382 = vld [vmem:[#allocation7 + $0x20] sm:$0xf]
        %v383 = vld [vmem:[#allocation7 + $0x24] sm:$0xf]
        %v384 = vld [vmem:[#allocation7 + $0x28] sm:$0xf]
        %v385 = vld [vmem:[#allocation7 + $0x2c] sm:$0xf]
        %v386 = vld [vmem:[#allocation7 + $0x30] sm:$0xf]
        %v387 = vld [vmem:[#allocation7 + $0x34] sm:$0xf]
        %v388 = vld [vmem:[#allocation7 + $0x38] sm:$0xf]
        %v389 = vld [vmem:[#allocation7 + $0x3c] sm:$0xf]
        %v390 = vld [vmem:[%s2] sm:$0x1]
        %v392 = vlaneseq
        %v393 = vshrl.u32 %v392, 7
        %v394 = vsub.s32 0, %v393
        %v395 = vrot.slane %v390, %v394
        %v429 = vunpack.c.l.b16 %v342
        %v430 = vunpack.c.l.b16 %v343
        %v431 = vunpack.c.l.b16 %v344
        %v432 = vunpack.c.l.b16 %v345
        %v433 = vunpack.c.l.b16 %v346
        %v434 = vunpack.c.l.b16 %v347
        %v435 = vunpack.c.l.b16 %v348
        %v436 = vunpack.c.l.b16 %v349
        %v437 = vunpack.c.l.b16 %v350
        %v438 = vunpack.c.l.b16 %v351
        %v439 = vunpack.c.l.b16 %v352
        %v440 = vunpack.c.l.b16 %v353
        %v441 = vunpack.c.l.b16 %v354
        %v442 = vunpack.c.l.b16 %v355
        %v443 = vunpack.c.l.b16 %v356
        %v444 = vunpack.c.l.b16 %v357
        %v445 = vunpack.c.l.b16 %v358
        %v446 = vunpack.c.l.b16 %v359
        %v447 = vunpack.c.l.b16 %v360
        %v448 = vunpack.c.l.b16 %v361
        %v449 = vunpack.c.l.b16 %v362
        %v450 = vunpack.c.l.b16 %v363
        %v451 = vunpack.c.l.b16 %v364
        %v452 = vunpack.c.l.b16 %v365
        %v453 = vunpack.c.l.b16 %v366
        %v454 = vunpack.c.l.b16 %v367
        %v455 = vunpack.c.l.b16 %v368
        %v456 = vunpack.c.l.b16 %v369
        %v457 = vunpack.c.l.b16 %v370
        %v458 = vunpack.c.l.b16 %v371
        %v459 = vunpack.c.l.b16 %v372
        %v460 = vunpack.c.l.b16 %v373
        %v461 = vpack.c.b16 %v430, %v429
        %v462 = vpack.c.b16 %v432, %v431
        %v463 = vpack.c.b16 %v434, %v433
        %v464 = vpack.c.b16 %v436, %v435
        %v465 = vpack.c.b16 %v438, %v437
        %v466 = vpack.c.b16 %v440, %v439
        %v467 = vpack.c.b16 %v442, %v441
        %v468 = vpack.c.b16 %v444, %v443
        %v469 = vpack.c.b16 %v446, %v445
        %v470 = vpack.c.b16 %v448, %v447
        %v471 = vpack.c.b16 %v450, %v449
        %v472 = vpack.c.b16 %v452, %v451
        %v473 = vpack.c.b16 %v454, %v453
        %v474 = vpack.c.b16 %v456, %v455
        %v475 = vpack.c.b16 %v458, %v457
        %v476 = vpack.c.b16 %v460, %v459
        %v509 = vunpack.c.l.b16 %v374
        %v510 = vunpack.c.l.b16 %v375
        %v511 = vunpack.c.l.b16 %v376
        %v512 = vunpack.c.l.b16 %v377
        %v513 = vunpack.c.l.b16 %v378
        %v514 = vunpack.c.l.b16 %v379
        %v515 = vunpack.c.l.b16 %v380
        %v516 = vunpack.c.l.b16 %v381
        %v517 = vunpack.c.l.b16 %v382
        %v518 = vunpack.c.l.b16 %v383
        %v519 = vunpack.c.l.b16 %v384
        %v520 = vunpack.c.l.b16 %v385
        %v521 = vunpack.c.l.b16 %v386
        %v522 = vunpack.c.l.b16 %v387
        %v523 = vunpack.c.l.b16 %v388
        %v524 = vunpack.c.l.b16 %v389
        %v525 = vpack.c.b16 %v510, %v509
        %v526 = vpack.c.b16 %v512, %v511
        %v527 = vpack.c.b16 %v514, %v513
        %v528 = vpack.c.b16 %v516, %v515
        %v529 = vpack.c.b16 %v518, %v517
        %v530 = vpack.c.b16 %v520, %v519
        %v531 = vpack.c.b16 %v522, %v521
        %v532 = vpack.c.b16 %v524, %v523
        %541 = vmatprep.subr.bf16.mxu0 0
        %542 = vmatpush1.bf16.msra.mxu0 %v525
        %543 = vmatprep.subr.bf16.mxu0 0
        %544 = vmatpush1.bf16.msra.mxu0 %v526
        %545 = vmatprep.subr.bf16.mxu0 0
        %546 = vmatpush1.bf16.msra.mxu0 %v527
        %547 = vmatprep.subr.bf16.mxu0 0
        %548 = vmatpush1.bf16.msra.mxu0 %v528
        %549 = vmatprep.subr.bf16.mxu0 0
        %550 = vmatpush1.bf16.msra.mxu0 %v529
        %551 = vmatprep.subr.bf16.mxu0 0
        %552 = vmatpush1.bf16.msra.mxu0 %v530
        %553 = vmatprep.subr.bf16.mxu0 0
        %554 = vmatpush1.bf16.msra.mxu0 %v531
        %555 = vmatprep.subr.bf16.mxu0 0
        %556 = vmatpush1.bf16.msra.mxu0 %v532
        %557 = vmatprep.subr.bf16.mxu0 0
        %558 = vmatpush1.bf16.msra.mxu0 0
        %559 = vmatprep.subr.bf16.mxu0 0
        %560 = vmatpush1.bf16.msra.mxu0 0
        %561 = vmatprep.subr.bf16.mxu0 0
        %562 = vmatpush1.bf16.msra.mxu0 0
        %563 = vmatprep.subr.bf16.mxu0 0
        %564 = vmatpush1.bf16.msra.mxu0 0
        %565 = vmatprep.subr.bf16.mxu0 0
        %566 = vmatpush1.bf16.msra.mxu0 0
        %567 = vmatprep.subr.bf16.mxu0 0
        %568 = vmatpush1.bf16.msra.mxu0 0
        %569 = vmatprep.subr.bf16.mxu0 0
        %570 = vmatpush1.bf16.msra.mxu0 0
        %571 = vmatprep.subr.bf16.mxu0 0
        %572 = vmatpush1.bf16.msra.mxu0 0
        %573 = vmatprep.mubr.bf16.mxu0 0
        %574 = vmatmul.mubr.bf16.gmra.mrb[0].mxu0 %v461
        %v575 = vpop.f32.mrb[0].mxu0
        %v576 = vadd.f32 %v395, %v575
        %v577 = vpop.f32.mrb[0].mxu0
        %v578 = vpop.f32.mrb[0].mxu0
        %v579 = vadd.f32 %v395, %v578
        %v580 = vpop.f32.mrb[0].mxu0
        %581 = vmatprep.mubr.bf16.mxu0 0
        %582 = vmatmul.mubr.bf16.gmra.mrb[0].mxu0 %v462
        %v583 = vpop.f32.mrb[0].mxu0
        %v584 = vadd.f32 %v395, %v583
        %v585 = vpop.f32.mrb[0].mxu0
        %v586 = vpop.f32.mrb[0].mxu0
        %v587 = vadd.f32 %v395, %v586
        %v588 = vpop.f32.mrb[0].mxu0
        %589 = vmatprep.mubr.bf16.mxu0 0
        %590 = vmatmul.mubr.bf16.gmra.mrb[0].mxu0 %v463
        %v591 = vpop.f32.mrb[0].mxu0
        %v592 = vadd.f32 %v395, %v591
        %v593 = vpop.f32.mrb[0].mxu0
        %v594 = vpop.f32.mrb[0].mxu0
        %v595 = vadd.f32 %v395, %v594
        %v596 = vpop.f32.mrb[0].mxu0
        %597 = vmatprep.mubr.bf16.mxu0 0
        %598 = vmatmul.mubr.bf16.gmra.mrb[0].mxu0 %v464
        %v599 = vpop.f32.mrb[0].mxu0
        %v600 = vadd.f32 %v395, %v599
        %v601 = vpop.f32.mrb[0].mxu0
        %v602 = vpop.f32.mrb[0].mxu0
        %v603 = vadd.f32 %v395, %v602
        %v604 = vpop.f32.mrb[0].mxu0
        %605 = vmatprep.mubr.bf16.mxu0 0
        %606 = vmatmul.mubr.bf16.gmra.mrb[0].mxu0 %v465
        %v607 = vpop.f32.mrb[0].mxu0
        %v608 = vadd.f32 %v395, %v607
        %v609 = vpop.f32.mrb[0].mxu0
        %v610 = vpop.f32.mrb[0].mxu0
        %v611 = vadd.f32 %v395, %v610
        %v612 = vpop.f32.mrb[0].mxu0
        %613 = vmatprep.mubr.bf16.mxu0 0
        %614 = vmatmul.mubr.bf16.gmra.mrb[0].mxu0 %v466
        %v615 = vpop.f32.mrb[0].mxu0
        %v616 = vadd.f32 %v395, %v615
        %v617 = vpop.f32.mrb[0].mxu0
        %v618 = vpop.f32.mrb[0].mxu0
        %v619 = vadd.f32 %v395, %v618
        %v620 = vpop.f32.mrb[0].mxu0
        %621 = vmatprep.mubr.bf16.mxu0 0
        %622 = vmatmul.mubr.bf16.gmra.mrb[0].mxu0 %v467
        %v623 = vpop.f32.mrb[0].mxu0
        %v624 = vadd.f32 %v395, %v623
        %v625 = vpop.f32.mrb[0].mxu0
        %v626 = vpop.f32.mrb[0].mxu0
        %v627 = vadd.f32 %v395, %v626
        %v628 = vpop.f32.mrb[0].mxu0
        %629 = vmatprep.mubr.bf16.mxu0 0
        %630 = vmatmul.mubr.bf16.gmra.mrb[0].mxu0 %v468
        %v631 = vpop.f32.mrb[0].mxu0
        %v632 = vadd.f32 %v395, %v631
        %v633 = vpop.f32.mrb[0].mxu0
        %v634 = vpop.f32.mrb[0].mxu0
        %v635 = vadd.f32 %v395, %v634
        %v636 = vpop.f32.mrb[0].mxu0
        %637 = vmatprep.mubr.bf16.mxu0 0
        %638 = vmatmul.mubr.bf16.gmra.mrb[0].mxu0 %v469
        %v639 = vpop.f32.mrb[0].mxu0
        %v640 = vadd.f32 %v395, %v639
        %v641 = vpop.f32.mrb[0].mxu0
        %v642 = vpop.f32.mrb[0].mxu0
        %v643 = vadd.f32 %v395, %v642
        %v644 = vpop.f32.mrb[0].mxu0
        %645 = vmatprep.mubr.bf16.mxu0 0
        %646 = vmatmul.mubr.bf16.gmra.mrb[0].mxu0 %v470
        %v647 = vpop.f32.mrb[0].mxu0
        %v648 = vadd.f32 %v395, %v647
        %v649 = vpop.f32.mrb[0].mxu0
        %v650 = vpop.f32.mrb[0].mxu0
        %v651 = vadd.f32 %v395, %v650
        %v652 = vpop.f32.mrb[0].mxu0
        %653 = vmatprep.mubr.bf16.mxu0 0
        %654 = vmatmul.mubr.bf16.gmra.mrb[0].mxu0 %v471
        %v655 = vpop.f32.mrb[0].mxu0
        %v656 = vadd.f32 %v395, %v655
        %v657 = vpop.f32.mrb[0].mxu0
        %v658 = vpop.f32.mrb[0].mxu0
        %v659 = vadd.f32 %v395, %v658
        %v660 = vpop.f32.mrb[0].mxu0
        %661 = vmatprep.mubr.bf16.mxu0 0
        %662 = vmatmul.mubr.bf16.gmra.mrb[0].mxu0 %v472
        %v663 = vpop.f32.mrb[0].mxu0
        %v664 = vadd.f32 %v395, %v663
        %v665 = vpop.f32.mrb[0].mxu0
        %v666 = vpop.f32.mrb[0].mxu0
        %v667 = vadd.f32 %v395, %v666
        %v668 = vpop.f32.mrb[0].mxu0
        %669 = vmatprep.mubr.bf16.mxu0 0
        %670 = vmatmul.mubr.bf16.gmra.mrb[0].mxu0 %v473
        %v671 = vpop.f32.mrb[0].mxu0
        %v672 = vadd.f32 %v395, %v671
        %v673 = vpop.f32.mrb[0].mxu0
        %v674 = vpop.f32.mrb[0].mxu0
        %v675 = vadd.f32 %v395, %v674
        %v676 = vpop.f32.mrb[0].mxu0
        %677 = vmatprep.mubr.bf16.mxu0 0
        %678 = vmatmul.mubr.bf16.gmra.mrb[0].mxu0 %v474
        %v679 = vpop.f32.mrb[0].mxu0
        %v680 = vadd.f32 %v395, %v679
        %v681 = vpop.f32.mrb[0].mxu0
        %v682 = vpop.f32.mrb[0].mxu0
        %v683 = vadd.f32 %v395, %v682
        %v684 = vpop.f32.mrb[0].mxu0
        %685 = vmatprep.mubr.bf16.mxu0 0
        %686 = vmatmul.mubr.bf16.gmra.mrb[0].mxu0 %v475
        %v687 = vpop.f32.mrb[0].mxu0
        %v688 = vadd.f32 %v395, %v687
        %v689 = vpop.f32.mrb[0].mxu0
        %v690 = vpop.f32.mrb[0].mxu0
        %v691 = vadd.f32 %v395, %v690
        %v692 = vpop.f32.mrb[0].mxu0
        %693 = vmatprep.mubr.bf16.mxu0 0
        %694 = vmatmul.mubr.bf16.gmra.mrb[0].mxu0 %v476
        %v695 = vpop.f32.mrb[0].mxu0
        %v696 = vadd.f32 %v395, %v695
        %v697 = vpop.f32.mrb[0].mxu0
        %v698 = vpop.f32.mrb[0].mxu0
        %v699 = vadd.f32 %v395, %v698
        %v700 = vpop.f32.mrb[0].mxu0
        %701 = vdwg.mxu0
        %v702 = vmax.f32 %v576, 0.0
        %v703 = vmax.f32 %v579, 0.0
        %v704 = vmax.f32 %v584, 0.0
        %v705 = vmax.f32 %v587, 0.0
        %v706 = vmax.f32 %v592, 0.0
        %v707 = vmax.f32 %v595, 0.0
        %v708 = vmax.f32 %v600, 0.0
        %v709 = vmax.f32 %v603, 0.0
        %v710 = vmax.f32 %v608, 0.0
        %v711 = vmax.f32 %v611, 0.0
        %v712 = vmax.f32 %v616, 0.0
        %v713 = vmax.f32 %v619, 0.0
        %v714 = vmax.f32 %v624, 0.0
        %v715 = vmax.f32 %v627, 0.0
        %v716 = vmax.f32 %v632, 0.0
        %v717 = vmax.f32 %v635, 0.0
        %v718 = vmax.f32 %v640, 0.0
        %v719 = vmax.f32 %v643, 0.0
        %v720 = vmax.f32 %v648, 0.0
        %v721 = vmax.f32 %v651, 0.0
        %v722 = vmax.f32 %v656, 0.0
        %v723 = vmax.f32 %v659, 0.0
        %v724 = vmax.f32 %v664, 0.0
        %v725 = vmax.f32 %v667, 0.0
        %v726 = vmax.f32 %v672, 0.0
        %v727 = vmax.f32 %v675, 0.0
        %v728 = vmax.f32 %v680, 0.0
        %v729 = vmax.f32 %v683, 0.0
        %v730 = vmax.f32 %v688, 0.0
        %v731 = vmax.f32 %v691, 0.0
        %v732 = vmax.f32 %v696, 0.0
        %v733 = vmax.f32 %v699, 0.0
        %734 = vst [vmem:[#allocation2] sm:$0xf] 0
        %735 = vst [vmem:[#allocation2 + $0x4] sm:$0xf] 0
        %736 = vst [vmem:[#allocation2 + $0x8] sm:$0x1] 0
        %s737 = scalar_lea.vmem [#allocation2], 204
        %738 = vst [vmem:[%s737] sm:$0xf] 0
        %739 = vst [vmem:[%s737 + $0x4] sm:$0xf] 0
        %740 = vst [vmem:[%s737 + $0x8] sm:$0x1] 0
        %s741 = scalar_lea.vmem [#allocation2], 12
        %vm742 = vcmask 1040384
        %vm743 = vsmask.f32 256
        %vm744 = vmand %vm742, %vm743
        %v745 = vld [vmem:[%s741] sm:$0x1]
        %v746 = vsel %vm744, 0, %v745
        %747 = vst [vmem:[%s741] sm:$0x1] %v746
        %v748 = vld [vmem:[%s741 + $0xc] sm:$0x1]
        %v749 = vsel %vm744, 0, %v748
        %750 = vst [vmem:[%s741 + $0xc] sm:$0x1] %v749
        %v751 = vld [vmem:[%s741 + $0x18] sm:$0x1]
        %v752 = vsel %vm744, 0, %v751
        %753 = vst [vmem:[%s741 + $0x18] sm:$0x1] %v752
        %v754 = vld [vmem:[%s741 + $0x24] sm:$0x1]
        %v755 = vsel %vm744, 0, %v754
        %756 = vst [vmem:[%s741 + $0x24] sm:$0x1] %v755
        %v757 = vld [vmem:[%s741 + $0x30] sm:$0x1]
        %v758 = vsel %vm744, 0, %v757
        %759 = vst [vmem:[%s741 + $0x30] sm:$0x1] %v758
        %v760 = vld [vmem:[%s741 + $0x3c] sm:$0x1]
        %v761 = vsel %vm744, 0, %v760
        %762 = vst [vmem:[%s741 + $0x3c] sm:$0x1] %v761
        %v763 = vld [vmem:[%s741 + $0x48] sm:$0x1]
        %v764 = vsel %vm744, 0, %v763
        %765 = vst [vmem:[%s741 + $0x48] sm:$0x1] %v764
        %v766 = vld [vmem:[%s741 + $0x54] sm:$0x1]
        %v767 = vsel %vm744, 0, %v766
        %768 = vst [vmem:[%s741 + $0x54] sm:$0x1] %v767
        %v769 = vld [vmem:[%s741 + $0x60] sm:$0x1]
        %v770 = vsel %vm744, 0, %v769
        %771 = vst [vmem:[%s741 + $0x60] sm:$0x1] %v770
        %v772 = vld [vmem:[%s741 + $0x6c] sm:$0x1]
        %v773 = vsel %vm744, 0, %v772
        %774 = vst [vmem:[%s741 + $0x6c] sm:$0x1] %v773
        %v775 = vld [vmem:[%s741 + $0x78] sm:$0x1]
        %v776 = vsel %vm744, 0, %v775
        %777 = vst [vmem:[%s741 + $0x78] sm:$0x1] %v776
        %v778 = vld [vmem:[%s741 + $0x84] sm:$0x1]
        %v779 = vsel %vm744, 0, %v778
        %780 = vst [vmem:[%s741 + $0x84] sm:$0x1] %v779
        %v781 = vld [vmem:[%s741 + $0x90] sm:$0x1]
        %v782 = vsel %vm744, 0, %v781
        %783 = vst [vmem:[%s741 + $0x90] sm:$0x1] %v782
        %v784 = vld [vmem:[%s741 + $0x9c] sm:$0x1]
        %v785 = vsel %vm744, 0, %v784
        %786 = vst [vmem:[%s741 + $0x9c] sm:$0x1] %v785
        %v787 = vld [vmem:[%s741 + $0xa8] sm:$0x1]
        %v788 = vsel %vm744, 0, %v787
        %789 = vst [vmem:[%s741 + $0xa8] sm:$0x1] %v788
        %v790 = vld [vmem:[%s741 + $0xb4] sm:$0x1]
        %v791 = vsel %vm744, 0, %v790
        %792 = vst [vmem:[%s741 + $0xb4] sm:$0x1] %v791
        %vm793 = vsmask.f32 7938
        %vm794 = vmand %vm742, %vm793
        %v795 = vld [vmem:[%s741 + $0x8] sm:$0x1]
        %v796 = vsel %vm794, 0, %v795
        %797 = vst [vmem:[%s741 + $0x8] sm:$0x1] %v796
        %v798 = vld [vmem:[%s741 + $0x14] sm:$0x1]
        %v799 = vsel %vm794, 0, %v798
        %800 = vst [vmem:[%s741 + $0x14] sm:$0x1] %v799
        %v801 = vld [vmem:[%s741 + $0x20] sm:$0x1]
        %v802 = vsel %vm794, 0, %v801
        %803 = vst [vmem:[%s741 + $0x20] sm:$0x1] %v802
        %v804 = vld [vmem:[%s741 + $0x2c] sm:$0x1]
        %v805 = vsel %vm794, 0, %v804
        %806 = vst [vmem:[%s741 + $0x2c] sm:$0x1] %v805
        %v807 = vld [vmem:[%s741 + $0x38] sm:$0x1]
        %v808 = vsel %vm794, 0, %v807
        %809 = vst [vmem:[%s741 + $0x38] sm:$0x1] %v808
        %v810 = vld [vmem:[%s741 + $0x44] sm:$0x1]
        %v811 = vsel %vm794, 0, %v810
        %812 = vst [vmem:[%s741 + $0x44] sm:$0x1] %v811
        %v813 = vld [vmem:[%s741 + $0x50] sm:$0x1]
        %v814 = vsel %vm794, 0, %v813
        %815 = vst [vmem:[%s741 + $0x50] sm:$0x1] %v814
        %v816 = vld [vmem:[%s741 + $0x5c] sm:$0x1]
        %v817 = vsel %vm794, 0, %v816
        %818 = vst [vmem:[%s741 + $0x5c] sm:$0x1] %v817
        %v819 = vld [vmem:[%s741 + $0x68] sm:$0x1]
        %v820 = vsel %vm794, 0, %v819
        %821 = vst [vmem:[%s741 + $0x68] sm:$0x1] %v820
        %v822 = vld [vmem:[%s741 + $0x74] sm:$0x1]
        %v823 = vsel %vm794, 0, %v822
        %824 = vst [vmem:[%s741 + $0x74] sm:$0x1] %v823
        %v825 = vld [vmem:[%s741 + $0x80] sm:$0x1]
        %v826 = vsel %vm794, 0, %v825
        %827 = vst [vmem:[%s741 + $0x80] sm:$0x1] %v826
        %v828 = vld [vmem:[%s741 + $0x8c] sm:$0x1]
        %v829 = vsel %vm794, 0, %v828
        %830 = vst [vmem:[%s741 + $0x8c] sm:$0x1] %v829
        %v831 = vld [vmem:[%s741 + $0x98] sm:$0x1]
        %v832 = vsel %vm794, 0, %v831
        %833 = vst [vmem:[%s741 + $0x98] sm:$0x1] %v832
        %v834 = vld [vmem:[%s741 + $0xa4] sm:$0x1]
        %v835 = vsel %vm794, 0, %v834
        %836 = vst [vmem:[%s741 + $0xa4] sm:$0x1] %v835
        %v837 = vld [vmem:[%s741 + $0xb0] sm:$0x1]
        %v838 = vsel %vm794, 0, %v837
        %839 = vst [vmem:[%s741 + $0xb0] sm:$0x1] %v838
        %v840 = vld [vmem:[%s741 + $0xbc] sm:$0x1]
        %v841 = vsel %vm794, 0, %v840
        %842 = vst [vmem:[%s741 + $0xbc] sm:$0x1] %v841
        %v843 = vpack.c.bf16 %v703, %v702
        %v844 = vpack.c.bf16 %v705, %v704
        %v845 = vpack.c.bf16 %v707, %v706
        %v846 = vpack.c.bf16 %v709, %v708
        %v847 = vpack.c.bf16 %v711, %v710
        %v848 = vpack.c.bf16 %v713, %v712
        %v849 = vpack.c.bf16 %v715, %v714
        %v850 = vpack.c.bf16 %v717, %v716
        %v851 = vpack.c.bf16 %v719, %v718
        %v852 = vpack.c.bf16 %v721, %v720
        %v853 = vpack.c.bf16 %v723, %v722
        %v854 = vpack.c.bf16 %v725, %v724
        %v855 = vpack.c.bf16 %v727, %v726
        %v856 = vpack.c.bf16 %v729, %v728
        %v857 = vpack.c.bf16 %v731, %v730
        %v858 = vpack.c.bf16 %v733, %v732
        %v875 = vunpack.c.l.b16 %v843
        %v876 = vunpack.c.h.b16 %v843
        %v877 = vunpack.c.l.b16 %v844
        %v878 = vunpack.c.h.b16 %v844
        %v879 = vunpack.c.l.b16 %v845
        %v880 = vunpack.c.h.b16 %v845
        %v881 = vunpack.c.l.b16 %v846
        %v882 = vunpack.c.h.b16 %v846
        %v883 = vunpack.c.l.b16 %v847
        %v884 = vunpack.c.h.b16 %v847
        %v885 = vunpack.c.l.b16 %v848
        %v886 = vunpack.c.h.b16 %v848
        %v887 = vunpack.c.l.b16 %v849
        %v888 = vunpack.c.h.b16 %v849
        %v889 = vunpack.c.l.b16 %v850
        %v890 = vunpack.c.h.b16 %v850
        %v891 = vunpack.c.l.b16 %v851
        %v892 = vunpack.c.h.b16 %v851
        %v893 = vunpack.c.l.b16 %v852
        %v894 = vunpack.c.h.b16 %v852
        %v895 = vunpack.c.l.b16 %v853
        %v896 = vunpack.c.h.b16 %v853
        %v897 = vunpack.c.l.b16 %v854
        %v898 = vunpack.c.h.b16 %v854
        %v899 = vunpack.c.l.b16 %v855
        %v900 = vunpack.c.h.b16 %v855
        %v901 = vunpack.c.l.b16 %v856
        %v902 = vunpack.c.h.b16 %v856
        %v903 = vunpack.c.l.b16 %v857
        %v904 = vunpack.c.h.b16 %v857
        %v905 = vunpack.c.l.b16 %v858
        %v906 = vunpack.c.h.b16 %v858
        %v907 = vpack.c.b16 %v875, %v875
        %v908 = vpack.c.b16 %v876, %v876
        %v909 = vpack.c.b16 %v877, %v877
        %v910 = vpack.c.b16 %v878, %v878
        %v911 = vpack.c.b16 %v879, %v879
        %v912 = vpack.c.b16 %v880, %v880
        %v913 = vpack.c.b16 %v881, %v881
        %v914 = vpack.c.b16 %v882, %v882
        %v915 = vpack.c.b16 %v883, %v883
        %v916 = vpack.c.b16 %v884, %v884
        %v917 = vpack.c.b16 %v885, %v885
        %v918 = vpack.c.b16 %v886, %v886
        %v919 = vpack.c.b16 %v887, %v887
        %v920 = vpack.c.b16 %v888, %v888
        %v921 = vpack.c.b16 %v889, %v889
        %v922 = vpack.c.b16 %v890, %v890
        %v923 = vpack.c.b16 %v891, %v891
        %v924 = vpack.c.b16 %v892, %v892
        %v925 = vpack.c.b16 %v893, %v893
        %v926 = vpack.c.b16 %v894, %v894
        %v927 = vpack.c.b16 %v895, %v895
        %v928 = vpack.c.b16 %v896, %v896
        %v929 = vpack.c.b16 %v897, %v897
        %v930 = vpack.c.b16 %v898, %v898
        %v931 = vpack.c.b16 %v899, %v899
        %v932 = vpack.c.b16 %v900, %v900
        %v933 = vpack.c.b16 %v901, %v901
        %v934 = vpack.c.b16 %v902, %v902
        %v935 = vpack.c.b16 %v903, %v903
        %v936 = vpack.c.b16 %v904, %v904
        %v937 = vpack.c.b16 %v905, %v905
        %v938 = vpack.c.b16 %v906, %v906
        %vm939 = vsmask.f32 4368
        %vm940 = vmor %vm743, %vm939
        %v942 = vshrl.u32 %v907, 16
        %v944 = vrot.slane %v942, 7
        %v945 = vshll.u32 %v907, 16
        %v947 = vor.u32 %v944, %v945
        %v948 = vrot.slane %v944, 4
        %v950 = vshrl.u32 %v908, 16
        %v952 = vrot.slane %v950, 7
        %v953 = vshll.u32 %v908, 16
        %v955 = vor.u32 %v952, %v953
        %v956 = vsel %vm940, %v948, %v955
        %v957 = vrot.slane %v952, 4
        %v959 = vshrl.u32 %v909, 16
        %v961 = vrot.slane %v959, 7
        %v962 = vshll.u32 %v909, 16
        %v964 = vor.u32 %v961, %v962
        %v965 = vrot.slane %v961, 4
        %v967 = vshrl.u32 %v910, 16
        %v969 = vrot.slane %v967, 7
        %v970 = vshll.u32 %v910, 16
        %v972 = vor.u32 %v969, %v970
        %v973 = vsel %vm940, %v965, %v972
        %v974 = vrot.slane %v969, 4
        %v976 = vshrl.u32 %v911, 16
        %v978 = vrot.slane %v976, 7
        %v979 = vshll.u32 %v911, 16
        %v981 = vor.u32 %v978, %v979
        %v982 = vrot.slane %v978, 4
        %v984 = vshrl.u32 %v912, 16
        %v986 = vrot.slane %v984, 7
        %v987 = vshll.u32 %v912, 16
        %v989 = vor.u32 %v986, %v987
        %v990 = vsel %vm940, %v982, %v989
        %v991 = vrot.slane %v986, 4
        %v993 = vshrl.u32 %v913, 16
        %v995 = vrot.slane %v993, 7
        %v996 = vshll.u32 %v913, 16
        %v998 = vor.u32 %v995, %v996
        %v999 = vrot.slane %v995, 4
        %v1001 = vshrl.u32 %v914, 16
        %v1003 = vrot.slane %v1001, 7
        %v1004 = vshll.u32 %v914, 16
        %v1006 = vor.u32 %v1003, %v1004
        %v1007 = vsel %vm940, %v999, %v1006
        %v1008 = vrot.slane %v1003, 4
        %v1010 = vshrl.u32 %v915, 16
        %v1012 = vrot.slane %v1010, 7
        %v1013 = vshll.u32 %v915, 16
        %v1015 = vor.u32 %v1012, %v1013
        %v1016 = vrot.slane %v1012, 4
        %v1018 = vshrl.u32 %v916, 16
        %v1020 = vrot.slane %v1018, 7
        %v1021 = vshll.u32 %v916, 16
        %v1023 = vor.u32 %v1020, %v1021
        %v1024 = vsel %vm940, %v1016, %v1023
        %v1025 = vrot.slane %v1020, 4
        %v1027 = vshrl.u32 %v917, 16
        %v1029 = vrot.slane %v1027, 7
        %v1030 = vshll.u32 %v917, 16
        %v1032 = vor.u32 %v1029, %v1030
        %v1033 = vrot.slane %v1029, 4
        %v1035 = vshrl.u32 %v918, 16
        %v1037 = vrot.slane %v1035, 7
        %v1038 = vshll.u32 %v918, 16
        %v1040 = vor.u32 %v1037, %v1038
        %v1041 = vsel %vm940, %v1033, %v1040
        %v1042 = vrot.slane %v1037, 4
        %v1044 = vshrl.u32 %v919, 16
        %v1046 = vrot.slane %v1044, 7
        %v1047 = vshll.u32 %v919, 16
        %v1049 = vor.u32 %v1046, %v1047
        %v1050 = vrot.slane %v1046, 4
        %v1052 = vshrl.u32 %v920, 16
        %v1054 = vrot.slane %v1052, 7
        %v1055 = vshll.u32 %v920, 16
        %v1057 = vor.u32 %v1054, %v1055
        %v1058 = vsel %vm940, %v1050, %v1057
        %v1059 = vrot.slane %v1054, 4
        %v1061 = vshrl.u32 %v921, 16
        %v1063 = vrot.slane %v1061, 7
        %v1064 = vshll.u32 %v921, 16
        %v1066 = vor.u32 %v1063, %v1064
        %v1067 = vrot.slane %v1063, 4
        %v1069 = vshrl.u32 %v922, 16
        %v1071 = vrot.slane %v1069, 7
        %v1072 = vshll.u32 %v922, 16
        %v1074 = vor.u32 %v1071, %v1072
        %v1075 = vsel %vm940, %v1067, %v1074
        %v1076 = vrot.slane %v1071, 4
        %v1078 = vshrl.u32 %v923, 16
        %v1080 = vrot.slane %v1078, 7
        %v1081 = vshll.u32 %v923, 16
        %v1083 = vor.u32 %v1080, %v1081
        %v1084 = vrot.slane %v1080, 4
        %v1086 = vshrl.u32 %v924, 16
        %v1088 = vrot.slane %v1086, 7
        %v1089 = vshll.u32 %v924, 16
        %v1091 = vor.u32 %v1088, %v1089
        %v1092 = vsel %vm940, %v1084, %v1091
        %v1093 = vrot.slane %v1088, 4
        %v1095 = vshrl.u32 %v925, 16
        %v1097 = vrot.slane %v1095, 7
        %v1098 = vshll.u32 %v925, 16
        %v1100 = vor.u32 %v1097, %v1098
        %v1101 = vrot.slane %v1097, 4
        %v1103 = vshrl.u32 %v926, 16
        %v1105 = vrot.slane %v1103, 7
        %v1106 = vshll.u32 %v926, 16
        %v1108 = vor.u32 %v1105, %v1106
        %v1109 = vsel %vm940, %v1101, %v1108
        %v1110 = vrot.slane %v1105, 4
        %v1112 = vshrl.u32 %v927, 16
        %v1114 = vrot.slane %v1112, 7
        %v1115 = vshll.u32 %v927, 16
        %v1117 = vor.u32 %v1114, %v1115
        %v1118 = vrot.slane %v1114, 4
        %v1120 = vshrl.u32 %v928, 16
        %v1122 = vrot.slane %v1120, 7
        %v1123 = vshll.u32 %v928, 16
        %v1125 = vor.u32 %v1122, %v1123
        %v1126 = vsel %vm940, %v1118, %v1125
        %v1127 = vrot.slane %v1122, 4
        %v1129 = vshrl.u32 %v929, 16
        %v1131 = vrot.slane %v1129, 7
        %v1132 = vshll.u32 %v929, 16
        %v1134 = vor.u32 %v1131, %v1132
        %v1135 = vrot.slane %v1131, 4
        %v1137 = vshrl.u32 %v930, 16
        %v1139 = vrot.slane %v1137, 7
        %v1140 = vshll.u32 %v930, 16
        %v1142 = vor.u32 %v1139, %v1140
        %v1143 = vsel %vm940, %v1135, %v1142
        %v1144 = vrot.slane %v1139, 4
        %v1146 = vshrl.u32 %v931, 16
        %v1148 = vrot.slane %v1146, 7
        %v1149 = vshll.u32 %v931, 16
        %v1151 = vor.u32 %v1148, %v1149
        %v1152 = vrot.slane %v1148, 4
        %v1154 = vshrl.u32 %v932, 16
        %v1156 = vrot.slane %v1154, 7
        %v1157 = vshll.u32 %v932, 16
        %v1159 = vor.u32 %v1156, %v1157
        %v1160 = vsel %vm940, %v1152, %v1159
        %v1161 = vrot.slane %v1156, 4
        %v1163 = vshrl.u32 %v933, 16
        %v1165 = vrot.slane %v1163, 7
        %v1166 = vshll.u32 %v933, 16
        %v1168 = vor.u32 %v1165, %v1166
        %v1169 = vrot.slane %v1165, 4
        %v1171 = vshrl.u32 %v934, 16
        %v1173 = vrot.slane %v1171, 7
        %v1174 = vshll.u32 %v934, 16
        %v1176 = vor.u32 %v1173, %v1174
        %v1177 = vsel %vm940, %v1169, %v1176
        %v1178 = vrot.slane %v1173, 4
        %v1180 = vshrl.u32 %v935, 16
        %v1182 = vrot.slane %v1180, 7
        %v1183 = vshll.u32 %v935, 16
        %v1185 = vor.u32 %v1182, %v1183
        %v1186 = vrot.slane %v1182, 4
        %v1188 = vshrl.u32 %v936, 16
        %v1190 = vrot.slane %v1188, 7
        %v1191 = vshll.u32 %v936, 16
        %v1193 = vor.u32 %v1190, %v1191
        %v1194 = vsel %vm940, %v1186, %v1193
        %v1195 = vrot.slane %v1190, 4
        %v1197 = vshrl.u32 %v937, 16
        %v1199 = vrot.slane %v1197, 7
        %v1200 = vshll.u32 %v937, 16
        %v1202 = vor.u32 %v1199, %v1200
        %v1203 = vrot.slane %v1199, 4
        %v1205 = vshrl.u32 %v938, 16
        %v1207 = vrot.slane %v1205, 7
        %v1208 = vshll.u32 %v938, 16
        %v1210 = vor.u32 %v1207, %v1208
        %v1211 = vsel %vm940, %v1203, %v1210
        %v1212 = vrot.slane %v1207, 4
        %vm1261 = vcmask 1043456
        %vm1262 = vmand %vm1261, %vm793
        %v1263 = vld [vmem:[%s741] sm:$0xf]
        %v1264 = vsel %vm1262, %v947, %v1263
        %1265 = vst [vmem:[%s741] sm:$0xf] %v1264
        %1266 = vst [vmem:[%s741 + $0x4] sm:$0xf] %v956
        %v1267 = vld [vmem:[%s741 + $0x8] sm:$0x1]
        %v1268 = vsel %vm744, %v957, %v1267
        %1269 = vst [vmem:[%s741 + $0x8] sm:$0x1] %v1268
        %v1270 = vld [vmem:[%s741 + $0xc] sm:$0xf]
        %v1271 = vsel %vm1262, %v964, %v1270
        %1272 = vst [vmem:[%s741 + $0xc] sm:$0xf] %v1271
        %1273 = vst [vmem:[%s741 + $0x10] sm:$0xf] %v973
        %v1274 = vld [vmem:[%s741 + $0x14] sm:$0x1]
        %v1275 = vsel %vm744, %v974, %v1274
        %1276 = vst [vmem:[%s741 + $0x14] sm:$0x1] %v1275
        %v1277 = vld [vmem:[%s741 + $0x18] sm:$0xf]
        %v1278 = vsel %vm1262, %v981, %v1277
        %1279 = vst [vmem:[%s741 + $0x18] sm:$0xf] %v1278
        %1280 = vst [vmem:[%s741 + $0x1c] sm:$0xf] %v990
        %v1281 = vld [vmem:[%s741 + $0x20] sm:$0x1]
        %v1282 = vsel %vm744, %v991, %v1281
        %1283 = vst [vmem:[%s741 + $0x20] sm:$0x1] %v1282
        %v1284 = vld [vmem:[%s741 + $0x24] sm:$0xf]
        %v1285 = vsel %vm1262, %v998, %v1284
        %1286 = vst [vmem:[%s741 + $0x24] sm:$0xf] %v1285
        %1287 = vst [vmem:[%s741 + $0x28] sm:$0xf] %v1007
        %v1288 = vld [vmem:[%s741 + $0x2c] sm:$0x1]
        %v1289 = vsel %vm744, %v1008, %v1288
        %1290 = vst [vmem:[%s741 + $0x2c] sm:$0x1] %v1289
        %v1291 = vld [vmem:[%s741 + $0x30] sm:$0xf]
        %v1292 = vsel %vm1262, %v1015, %v1291
        %1293 = vst [vmem:[%s741 + $0x30] sm:$0xf] %v1292
        %1294 = vst [vmem:[%s741 + $0x34] sm:$0xf] %v1024
        %v1295 = vld [vmem:[%s741 + $0x38] sm:$0x1]
        %v1296 = vsel %vm744, %v1025, %v1295
        %1297 = vst [vmem:[%s741 + $0x38] sm:$0x1] %v1296
        %v1298 = vld [vmem:[%s741 + $0x3c] sm:$0xf]
        %v1299 = vsel %vm1262, %v1032, %v1298
        %1300 = vst [vmem:[%s741 + $0x3c] sm:$0xf] %v1299
        %1301 = vst [vmem:[%s741 + $0x40] sm:$0xf] %v1041
        %v1302 = vld [vmem:[%s741 + $0x44] sm:$0x1]
        %v1303 = vsel %vm744, %v1042, %v1302
        %1304 = vst [vmem:[%s741 + $0x44] sm:$0x1] %v1303
        %v1305 = vld [vmem:[%s741 + $0x48] sm:$0xf]
        %v1306 = vsel %vm1262, %v1049, %v1305
        %1307 = vst [vmem:[%s741 + $0x48] sm:$0xf] %v1306
        %1308 = vst [vmem:[%s741 + $0x4c] sm:$0xf] %v1058
        %v1309 = vld [vmem:[%s741 + $0x50] sm:$0x1]
        %v1310 = vsel %vm744, %v1059, %v1309
        %1311 = vst [vmem:[%s741 + $0x50] sm:$0x1] %v1310
        %v1312 = vld [vmem:[%s741 + $0x54] sm:$0xf]
        %v1313 = vsel %vm1262, %v1066, %v1312
        %1314 = vst [vmem:[%s741 + $0x54] sm:$0xf] %v1313
        %1315 = vst [vmem:[%s741 + $0x58] sm:$0xf] %v1075
        %v1316 = vld [vmem:[%s741 + $0x5c] sm:$0x1]
        %v1317 = vsel %vm744, %v1076, %v1316
        %1318 = vst [vmem:[%s741 + $0x5c] sm:$0x1] %v1317
        %v1319 = vld [vmem:[%s741 + $0x60] sm:$0xf]
        %v1320 = vsel %vm1262, %v1083, %v1319
        %1321 = vst [vmem:[%s741 + $0x60] sm:$0xf] %v1320
        %1322 = vst [vmem:[%s741 + $0x64] sm:$0xf] %v1092
        %v1323 = vld [vmem:[%s741 + $0x68] sm:$0x1]
        %v1324 = vsel %vm744, %v1093, %v1323
        %1325 = vst [vmem:[%s741 + $0x68] sm:$0x1] %v1324
        %v1326 = vld [vmem:[%s741 + $0x6c] sm:$0xf]
        %v1327 = vsel %vm1262, %v1100, %v1326
        %1328 = vst [vmem:[%s741 + $0x6c] sm:$0xf] %v1327
        %1329 = vst [vmem:[%s741 + $0x70] sm:$0xf] %v1109
        %v1330 = vld [vmem:[%s741 + $0x74] sm:$0x1]
        %v1331 = vsel %vm744, %v1110, %v1330
        %1332 = vst [vmem:[%s741 + $0x74] sm:$0x1] %v1331
        %v1333 = vld [vmem:[%s741 + $0x78] sm:$0xf]
        %v1334 = vsel %vm1262, %v1117, %v1333
        %1335 = vst [vmem:[%s741 + $0x78] sm:$0xf] %v1334
        %1336 = vst [vmem:[%s741 + $0x7c] sm:$0xf] %v1126
        %v1337 = vld [vmem:[%s741 + $0x80] sm:$0x1]
        %v1338 = vsel %vm744, %v1127, %v1337
        %1339 = vst [vmem:[%s741 + $0x80] sm:$0x1] %v1338
        %v1340 = vld [vmem:[%s741 + $0x84] sm:$0xf]
        %v1341 = vsel %vm1262, %v1134, %v1340
        %1342 = vst [vmem:[%s741 + $0x84] sm:$0xf] %v1341
        %1343 = vst [vmem:[%s741 + $0x88] sm:$0xf] %v1143
        %v1344 = vld [vmem:[%s741 + $0x8c] sm:$0x1]
        %v1345 = vsel %vm744, %v1144, %v1344
        %1346 = vst [vmem:[%s741 + $0x8c] sm:$0x1] %v1345
        %v1347 = vld [vmem:[%s741 + $0x90] sm:$0xf]
        %v1348 = vsel %vm1262, %v1151, %v1347
        %1349 = vst [vmem:[%s741 + $0x90] sm:$0xf] %v1348
        %1350 = vst [vmem:[%s741 + $0x94] sm:$0xf] %v1160
        %v1351 = vld [vmem:[%s741 + $0x98] sm:$0x1]
        %v1352 = vsel %vm744, %v1161, %v1351
        %1353 = vst [vmem:[%s741 + $0x98] sm:$0x1] %v1352
        %v1354 = vld [vmem:[%s741 + $0x9c] sm:$0xf]
        %v1355 = vsel %vm1262, %v1168, %v1354
        %1356 = vst [vmem:[%s741 + $0x9c] sm:$0xf] %v1355
        %1357 = vst [vmem:[%s741 + $0xa0] sm:$0xf] %v1177
        %v1358 = vld [vmem:[%s741 + $0xa4] sm:$0x1]
        %v1359 = vsel %vm744, %v1178, %v1358
        %1360 = vst [vmem:[%s741 + $0xa4] sm:$0x1] %v1359
        %v1361 = vld [vmem:[%s741 + $0xa8] sm:$0xf]
        %v1362 = vsel %vm1262, %v1185, %v1361
        %1363 = vst [vmem:[%s741 + $0xa8] sm:$0xf] %v1362
        %1364 = vst [vmem:[%s741 + $0xac] sm:$0xf] %v1194
        %v1365 = vld [vmem:[%s741 + $0xb0] sm:$0x1]
        %v1366 = vsel %vm744, %v1195, %v1365
        %1367 = vst [vmem:[%s741 + $0xb0] sm:$0x1] %v1366
        %v1368 = vld [vmem:[%s741 + $0xb4] sm:$0xf]
        %v1369 = vsel %vm1262, %v1202, %v1368
        %1370 = vst [vmem:[%s741 + $0xb4] sm:$0xf] %v1369
        %1371 = vst [vmem:[%s741 + $0xb8] sm:$0xf] %v1211
        %v1372 = vld [vmem:[%s741 + $0xbc] sm:$0x1]
        %v1373 = vsel %vm744, %v1212, %v1372
        %1374 = vst [vmem:[%s741 + $0xbc] sm:$0x1] %v1373
        %v1375 = vld [vmem:[#allocation2] sm:$0xf]
        %v1376 = vld [vmem:[#allocation2 + $0x4] sm:$0xf]
        %v1377 = vld [vmem:[#allocation2 + $0xc] sm:$0xf]
        %v1378 = vld [vmem:[#allocation2 + $0x10] sm:$0xf]
        %v1379 = vld [vmem:[#allocation2 + $0x18] sm:$0xf]
        %v1380 = vld [vmem:[#allocation2 + $0x1c] sm:$0xf]
        %v1381 = vld [vmem:[#allocation2 + $0x24] sm:$0xf]
        %v1382 = vld [vmem:[#allocation2 + $0x28] sm:$0xf]
        %v1383 = vld [vmem:[#allocation2 + $0x30] sm:$0xf]
        %v1384 = vld [vmem:[#allocation2 + $0x34] sm:$0xf]
        %v1385 = vld [vmem:[#allocation2 + $0x3c] sm:$0xf]
        %v1386 = vld [vmem:[#allocation2 + $0x40] sm:$0xf]
        %v1387 = vld [vmem:[#allocation2 + $0x48] sm:$0xf]
        %v1388 = vld [vmem:[#allocation2 + $0x4c] sm:$0xf]
        %v1389 = vld [vmem:[#allocation2 + $0x54] sm:$0xf]
        %v1390 = vld [vmem:[#allocation2 + $0x58] sm:$0xf]
        %v1391 = vld [vmem:[#allocation2 + $0x60] sm:$0xf]
        %v1392 = vld [vmem:[#allocation2 + $0x64] sm:$0xf]
        %v1393 = vld [vmem:[#allocation2 + $0x6c] sm:$0xf]
        %v1394 = vld [vmem:[#allocation2 + $0x70] sm:$0xf]
        %v1395 = vld [vmem:[#allocation2 + $0x78] sm:$0xf]
        %v1396 = vld [vmem:[#allocation2 + $0x7c] sm:$0xf]
        %v1397 = vld [vmem:[#allocation2 + $0x84] sm:$0xf]
        %v1398 = vld [vmem:[#allocation2 + $0x88] sm:$0xf]
        %v1399 = vld [vmem:[#allocation2 + $0x90] sm:$0xf]
        %v1400 = vld [vmem:[#allocation2 + $0x94] sm:$0xf]
        %v1401 = vld [vmem:[#allocation2 + $0x9c] sm:$0xf]
        %v1402 = vld [vmem:[#allocation2 + $0xa0] sm:$0xf]
        %v1403 = vld [vmem:[#allocation2 + $0xa8] sm:$0xf]
        %v1404 = vld [vmem:[#allocation2 + $0xac] sm:$0xf]
        %v1405 = vld [vmem:[#allocation2 + $0xb4] sm:$0xf]
        %v1406 = vld [vmem:[#allocation2 + $0xb8] sm:$0xf]
        %v1439 = vunpack.c.l.b16 %v1375
        %v1440 = vunpack.c.l.b16 %v1376
        %v1441 = vunpack.c.l.b16 %v1377
        %v1442 = vunpack.c.l.b16 %v1378
        %v1443 = vunpack.c.l.b16 %v1379
        %v1444 = vunpack.c.l.b16 %v1380
        %v1445 = vunpack.c.l.b16 %v1381
        %v1446 = vunpack.c.l.b16 %v1382
        %v1447 = vunpack.c.l.b16 %v1383
        %v1448 = vunpack.c.l.b16 %v1384
        %v1449 = vunpack.c.l.b16 %v1385
        %v1450 = vunpack.c.l.b16 %v1386
        %v1451 = vunpack.c.l.b16 %v1387
        %v1452 = vunpack.c.l.b16 %v1388
        %v1453 = vunpack.c.l.b16 %v1389
        %v1454 = vunpack.c.l.b16 %v1390
        %v1455 = vunpack.c.l.b16 %v1391
        %v1456 = vunpack.c.l.b16 %v1392
        %v1457 = vunpack.c.l.b16 %v1393
        %v1458 = vunpack.c.l.b16 %v1394
        %v1459 = vunpack.c.l.b16 %v1395
        %v1460 = vunpack.c.l.b16 %v1396
        %v1461 = vunpack.c.l.b16 %v1397
        %v1462 = vunpack.c.l.b16 %v1398
        %v1463 = vunpack.c.l.b16 %v1399
        %v1464 = vunpack.c.l.b16 %v1400
        %v1465 = vunpack.c.l.b16 %v1401
        %v1466 = vunpack.c.l.b16 %v1402
        %v1467 = vunpack.c.l.b16 %v1403
        %v1468 = vunpack.c.l.b16 %v1404
        %v1469 = vunpack.c.l.b16 %v1405
        %v1470 = vunpack.c.l.b16 %v1406
        %v1471 = vpack.c.b16 %v1440, %v1439
        %v1472 = vpack.c.b16 %v1442, %v1441
        %v1473 = vpack.c.b16 %v1444, %v1443
        %v1474 = vpack.c.b16 %v1446, %v1445
        %v1475 = vpack.c.b16 %v1448, %v1447
        %v1476 = vpack.c.b16 %v1450, %v1449
        %v1477 = vpack.c.b16 %v1452, %v1451
        %v1478 = vpack.c.b16 %v1454, %v1453
        %v1479 = vpack.c.b16 %v1456, %v1455
        %v1480 = vpack.c.b16 %v1458, %v1457
        %v1481 = vpack.c.b16 %v1460, %v1459
        %v1482 = vpack.c.b16 %v1462, %v1461
        %v1483 = vpack.c.b16 %v1464, %v1463
        %v1484 = vpack.c.b16 %v1466, %v1465
        %v1485 = vpack.c.b16 %v1468, %v1467
        %v1486 = vpack.c.b16 %v1470, %v1469
        %1503 = vst [vmem:[#allocation3] sm:$0xff] %v1471
        %1504 = vst [vmem:[#allocation3 + $0x48] sm:$0xff] %v1472
        %1505 = vst [vmem:[#allocation3 + $0x90] sm:$0xff] %v1473
        %1506 = vst [vmem:[#allocation3 + $0xd8] sm:$0xff] %v1474
        %1507 = vst [vmem:[#allocation3 + $0x120] sm:$0xff] %v1475
        %1508 = vst [vmem:[#allocation3 + $0x168] sm:$0xff] %v1476
        %1509 = vst [vmem:[#allocation3 + $0x1b0] sm:$0xff] %v1477
        %1510 = vst [vmem:[#allocation3 + $0x1f8] sm:$0xff] %v1478
        %1511 = vst [vmem:[#allocation3 + $0x240] sm:$0xff] %v1479
        %1512 = vst [vmem:[#allocation3 + $0x288] sm:$0xff] %v1480
        %1513 = vst [vmem:[#allocation3 + $0x2d0] sm:$0xff] %v1481
        %1514 = vst [vmem:[#allocation3 + $0x318] sm:$0xff] %v1482
        %1515 = vst [vmem:[#allocation3 + $0x360] sm:$0xff] %v1483
        %1516 = vst [vmem:[#allocation3 + $0x3a8] sm:$0xff] %v1484
        %1517 = vst [vmem:[#allocation3 + $0x3f0] sm:$0xff] %v1485
        %1518 = vst [vmem:[#allocation3 + $0x438] sm:$0xff] %v1486
        %v1519 = vld [vmem:[#allocation2] sm:$0xf]
        %v1520 = vld [vmem:[#allocation2 + $0x4] sm:$0xf]
        %v1521 = vld [vmem:[#allocation2 + $0x8] sm:$0x1]
        %v1522 = vld [vmem:[#allocation2 + $0xc] sm:$0xf]
        %v1523 = vld [vmem:[#allocation2 + $0x10] sm:$0xf]
        %v1524 = vld [vmem:[#allocation2 + $0x14] sm:$0x1]
        %v1525 = vld [vmem:[#allocation2 + $0x18] sm:$0xf]
        %v1526 = vld [vmem:[#allocation2 + $0x1c] sm:$0xf]
        %v1527 = vld [vmem:[#allocation2 + $0x20] sm:$0x1]
        %v1528 = vld [vmem:[#allocation2 + $0x24] sm:$0xf]
        %v1529 = vld [vmem:[#allocation2 + $0x28] sm:$0xf]
        %v1530 = vld [vmem:[#allocation2 + $0x2c] sm:$0x1]
        %v1531 = vld [vmem:[#allocation2 + $0x30] sm:$0xf]
        %v1532 = vld [vmem:[#allocation2 + $0x34] sm:$0xf]
        %v1533 = vld [vmem:[#allocation2 + $0x38] sm:$0x1]
        %v1534 = vld [vmem:[#allocation2 + $0x3c] sm:$0xf]
        %v1535 = vld [vmem:[#allocation2 + $0x40] sm:$0xf]
        %v1536 = vld [vmem:[#allocation2 + $0x44] sm:$0x1]
        %v1537 = vld [vmem:[#allocation2 + $0x48] sm:$0xf]
        %v1538 = vld [vmem:[#allocation2 + $0x4c] sm:$0xf]
        %v1539 = vld [vmem:[#allocation2 + $0x50] sm:$0x1]
        %v1540 = vld [vmem:[#allocation2 + $0x54] sm:$0xf]
        %v1541 = vld [vmem:[#allocation2 + $0x58] sm:$0xf]
        %v1542 = vld [vmem:[#allocation2 + $0x5c] sm:$0x1]
        %v1543 = vld [vmem:[#allocation2 + $0x60] sm:$0xf]
        %v1544 = vld [vmem:[#allocation2 + $0x64] sm:$0xf]
        %v1545 = vld [vmem:[#allocation2 + $0x68] sm:$0x1]
        %v1546 = vld [vmem:[#allocation2 + $0x6c] sm:$0xf]
        %v1547 = vld [vmem:[#allocation2 + $0x70] sm:$0xf]
        %v1548 = vld [vmem:[#allocation2 + $0x74] sm:$0x1]
        %v1549 = vld [vmem:[#allocation2 + $0x78] sm:$0xf]
        %v1550 = vld [vmem:[#allocation2 + $0x7c] sm:$0xf]
        %v1551 = vld [vmem:[#allocation2 + $0x80] sm:$0x1]
        %v1552 = vld [vmem:[#allocation2 + $0x84] sm:$0xf]
        %v1553 = vld [vmem:[#allocation2 + $0x88] sm:$0xf]
        %v1554 = vld [vmem:[#allocation2 + $0x8c] sm:$0x1]
        %v1555 = vld [vmem:[#allocation2 + $0x90] sm:$0xf]
        %v1556 = vld [vmem:[#allocation2 + $0x94] sm:$0xf]
        %v1557 = vld [vmem:[#allocation2 + $0x98] sm:$0x1]
        %v1558 = vld [vmem:[#allocation2 + $0x9c] sm:$0xf]
        %v1559 = vld [vmem:[#allocation2 + $0xa0] sm:$0xf]
        %v1560 = vld [vmem:[#allocation2 + $0xa4] sm:$0x1]
        %v1561 = vld [vmem:[#allocation2 + $0xa8] sm:$0xf]
        %v1562 = vld [vmem:[#allocation2 + $0xac] sm:$0xf]
        %v1563 = vld [vmem:[#allocation2 + $0xb0] sm:$0x1]
        %v1564 = vld [vmem:[#allocation2 + $0xb4] sm:$0xf]
        %v1565 = vld [vmem:[#allocation2 + $0xb8] sm:$0xf]
        %v1566 = vld [vmem:[#allocation2 + $0xbc] sm:$0x1]
        %vm1567 = vsmask.f32 3328
        %vm1568 = vsmask.f32 7440
        %vm1569 = vmor %vm1567, %vm1568
        %v1571 = vshrl.u32 %v1519, 16
        %v1573 = vrot.slane %v1571, 4
        %v1574 = vshll.u32 %v1519, 16
        %v1576 = vrot.slane %v1574, 5
        %v1577 = vor.u32 %v1573, %v1576
        %v1578 = vrot.slane %v1577, 4
        %v1580 = vshll.u32 %v1520, 16
        %v1582 = vrot.slane %v1580, 5
        %v1583 = vsel %vm1569, %v1578, %v1582
        %v1584 = vshrl.u32 %v1520, 16
        %v1586 = vrot.slane %v1584, 4
        %v1587 = vor.u32 %v1586, %v1582
        %v1588 = vrot.slane %v1587, 4
        %v1590 = vshll.u32 %v1521, 16
        %v1592 = vrot.slane %v1590, 5
        %v1593 = vsel %vm1569, %v1588, %v1592
        %v1595 = vshrl.u32 %v1522, 16
        %v1597 = vrot.slane %v1595, 4
        %v1598 = vshll.u32 %v1522, 16
        %v1600 = vrot.slane %v1598, 5
        %v1601 = vor.u32 %v1597, %v1600
        %v1602 = vrot.slane %v1601, 4
        %v1604 = vshll.u32 %v1523, 16
        %v1606 = vrot.slane %v1604, 5
        %v1607 = vsel %vm1569, %v1602, %v1606
        %v1608 = vshrl.u32 %v1523, 16
        %v1610 = vrot.slane %v1608, 4
        %v1611 = vor.u32 %v1610, %v1606
        %v1612 = vrot.slane %v1611, 4
        %v1614 = vshll.u32 %v1524, 16
        %v1616 = vrot.slane %v1614, 5
        %v1617 = vsel %vm1569, %v1612, %v1616
        %v1619 = vshrl.u32 %v1525, 16
        %v1621 = vrot.slane %v1619, 4
        %v1622 = vshll.u32 %v1525, 16
        %v1624 = vrot.slane %v1622, 5
        %v1625 = vor.u32 %v1621, %v1624
        %v1626 = vrot.slane %v1625, 4
        %v1628 = vshll.u32 %v1526, 16
        %v1630 = vrot.slane %v1628, 5
        %v1631 = vsel %vm1569, %v1626, %v1630
        %v1632 = vshrl.u32 %v1526, 16
        %v1634 = vrot.slane %v1632, 4
        %v1635 = vor.u32 %v1634, %v1630
        %v1636 = vrot.slane %v1635, 4
        %v1638 = vshll.u32 %v1527, 16
        %v1640 = vrot.slane %v1638, 5
        %v1641 = vsel %vm1569, %v1636, %v1640
        %v1643 = vshrl.u32 %v1528, 16
        %v1645 = vrot.slane %v1643, 4
        %v1646 = vshll.u32 %v1528, 16
        %v1648 = vrot.slane %v1646, 5
        %v1649 = vor.u32 %v1645, %v1648
        %v1650 = vrot.slane %v1649, 4
        %v1652 = vshll.u32 %v1529, 16
        %v1654 = vrot.slane %v1652, 5
        %v1655 = vsel %vm1569, %v1650, %v1654
        %v1656 = vshrl.u32 %v1529, 16
        %v1658 = vrot.slane %v1656, 4
        %v1659 = vor.u32 %v1658, %v1654
        %v1660 = vrot.slane %v1659, 4
        %v1662 = vshll.u32 %v1530, 16
        %v1664 = vrot.slane %v1662, 5
        %v1665 = vsel %vm1569, %v1660, %v1664
        %v1667 = vshrl.u32 %v1531, 16
        %v1669 = vrot.slane %v1667, 4
        %v1670 = vshll.u32 %v1531, 16
        %v1672 = vrot.slane %v1670, 5
        %v1673 = vor.u32 %v1669, %v1672
        %v1674 = vrot.slane %v1673, 4
        %v1676 = vshll.u32 %v1532, 16
        %v1678 = vrot.slane %v1676, 5
        %v1679 = vsel %vm1569, %v1674, %v1678
        %v1680 = vshrl.u32 %v1532, 16
        %v1682 = vrot.slane %v1680, 4
        %v1683 = vor.u32 %v1682, %v1678
        %v1684 = vrot.slane %v1683, 4
        %v1686 = vshll.u32 %v1533, 16
        %v1688 = vrot.slane %v1686, 5
        %v1689 = vsel %vm1569, %v1684, %v1688
        %v1691 = vshrl.u32 %v1534, 16
        %v1693 = vrot.slane %v1691, 4
        %v1694 = vshll.u32 %v1534, 16
        %v1696 = vrot.slane %v1694, 5
        %v1697 = vor.u32 %v1693, %v1696
        %v1698 = vrot.slane %v1697, 4
        %v1700 = vshll.u32 %v1535, 16
        %v1702 = vrot.slane %v1700, 5
        %v1703 = vsel %vm1569, %v1698, %v1702
        %v1704 = vshrl.u32 %v1535, 16
        %v1706 = vrot.slane %v1704, 4
        %v1707 = vor.u32 %v1706, %v1702
        %v1708 = vrot.slane %v1707, 4
        %v1710 = vshll.u32 %v1536, 16
        %v1712 = vrot.slane %v1710, 5
        %v1713 = vsel %vm1569, %v1708, %v1712
        %v1715 = vshrl.u32 %v1537, 16
        %v1717 = vrot.slane %v1715, 4
        %v1718 = vshll.u32 %v1537, 16
        %v1720 = vrot.slane %v1718, 5
        %v1721 = vor.u32 %v1717, %v1720
        %v1722 = vrot.slane %v1721, 4
        %v1724 = vshll.u32 %v1538, 16
        %v1726 = vrot.slane %v1724, 5
        %v1727 = vsel %vm1569, %v1722, %v1726
        %v1728 = vshrl.u32 %v1538, 16
        %v1730 = vrot.slane %v1728, 4
        %v1731 = vor.u32 %v1730, %v1726
        %v1732 = vrot.slane %v1731, 4
        %v1734 = vshll.u32 %v1539, 16
        %v1736 = vrot.slane %v1734, 5
        %v1737 = vsel %vm1569, %v1732, %v1736
        %v1739 = vshrl.u32 %v1540, 16
        %v1741 = vrot.slane %v1739, 4
        %v1742 = vshll.u32 %v1540, 16
        %v1744 = vrot.slane %v1742, 5
        %v1745 = vor.u32 %v1741, %v1744
        %v1746 = vrot.slane %v1745, 4
        %v1748 = vshll.u32 %v1541, 16
        %v1750 = vrot.slane %v1748, 5
        %v1751 = vsel %vm1569, %v1746, %v1750
        %v1752 = vshrl.u32 %v1541, 16
        %v1754 = vrot.slane %v1752, 4
        %v1755 = vor.u32 %v1754, %v1750
        %v1756 = vrot.slane %v1755, 4
        %v1758 = vshll.u32 %v1542, 16
        %v1760 = vrot.slane %v1758, 5
        %v1761 = vsel %vm1569, %v1756, %v1760
        %v1763 = vshrl.u32 %v1543, 16
        %v1765 = vrot.slane %v1763, 4
        %v1766 = vshll.u32 %v1543, 16
        %v1768 = vrot.slane %v1766, 5
        %v1769 = vor.u32 %v1765, %v1768
        %v1770 = vrot.slane %v1769, 4
        %v1772 = vshll.u32 %v1544, 16
        %v1774 = vrot.slane %v1772, 5
        %v1775 = vsel %vm1569, %v1770, %v1774
        %v1776 = vshrl.u32 %v1544, 16
        %v1778 = vrot.slane %v1776, 4
        %v1779 = vor.u32 %v1778, %v1774
        %v1780 = vrot.slane %v1779, 4
        %v1782 = vshll.u32 %v1545, 16
        %v1784 = vrot.slane %v1782, 5
        %v1785 = vsel %vm1569, %v1780, %v1784
        %v1787 = vshrl.u32 %v1546, 16
        %v1789 = vrot.slane %v1787, 4
        %v1790 = vshll.u32 %v1546, 16
        %v1792 = vrot.slane %v1790, 5
        %v1793 = vor.u32 %v1789, %v1792
        %v1794 = vrot.slane %v1793, 4
        %v1796 = vshll.u32 %v1547, 16
        %v1798 = vrot.slane %v1796, 5
        %v1799 = vsel %vm1569, %v1794, %v1798
        %v1800 = vshrl.u32 %v1547, 16
        %v1802 = vrot.slane %v1800, 4
        %v1803 = vor.u32 %v1802, %v1798
        %v1804 = vrot.slane %v1803, 4
        %v1806 = vshll.u32 %v1548, 16
        %v1808 = vrot.slane %v1806, 5
        %v1809 = vsel %vm1569, %v1804, %v1808
        %v1811 = vshrl.u32 %v1549, 16
        %v1813 = vrot.slane %v1811, 4
        %v1814 = vshll.u32 %v1549, 16
        %v1816 = vrot.slane %v1814, 5
        %v1817 = vor.u32 %v1813, %v1816
        %v1818 = vrot.slane %v1817, 4
        %v1820 = vshll.u32 %v1550, 16
        %v1822 = vrot.slane %v1820, 5
        %v1823 = vsel %vm1569, %v1818, %v1822
        %v1824 = vshrl.u32 %v1550, 16
        %v1826 = vrot.slane %v1824, 4
        %v1827 = vor.u32 %v1826, %v1822
        %v1828 = vrot.slane %v1827, 4
        %v1830 = vshll.u32 %v1551, 16
        %v1832 = vrot.slane %v1830, 5
        %v1833 = vsel %vm1569, %v1828, %v1832
        %v1835 = vshrl.u32 %v1552, 16
        %v1837 = vrot.slane %v1835, 4
        %v1838 = vshll.u32 %v1552, 16
        %v1840 = vrot.slane %v1838, 5
        %v1841 = vor.u32 %v1837, %v1840
        %v1842 = vrot.slane %v1841, 4
        %v1844 = vshll.u32 %v1553, 16
        %v1846 = vrot.slane %v1844, 5
        %v1847 = vsel %vm1569, %v1842, %v1846
        %v1848 = vshrl.u32 %v1553, 16
        %v1850 = vrot.slane %v1848, 4
        %v1851 = vor.u32 %v1850, %v1846
        %v1852 = vrot.slane %v1851, 4
        %v1854 = vshll.u32 %v1554, 16
        %v1856 = vrot.slane %v1854, 5
        %v1857 = vsel %vm1569, %v1852, %v1856
        %v1859 = vshrl.u32 %v1555, 16
        %v1861 = vrot.slane %v1859, 4
        %v1862 = vshll.u32 %v1555, 16
        %v1864 = vrot.slane %v1862, 5
        %v1865 = vor.u32 %v1861, %v1864
        %v1866 = vrot.slane %v1865, 4
        %v1868 = vshll.u32 %v1556, 16
        %v1870 = vrot.slane %v1868, 5
        %v1871 = vsel %vm1569, %v1866, %v1870
        %v1872 = vshrl.u32 %v1556, 16
        %v1874 = vrot.slane %v1872, 4
        %v1875 = vor.u32 %v1874, %v1870
        %v1876 = vrot.slane %v1875, 4
        %v1878 = vshll.u32 %v1557, 16
        %v1880 = vrot.slane %v1878, 5
        %v1881 = vsel %vm1569, %v1876, %v1880
        %v1883 = vshrl.u32 %v1558, 16
        %v1885 = vrot.slane %v1883, 4
        %v1886 = vshll.u32 %v1558, 16
        %v1888 = vrot.slane %v1886, 5
        %v1889 = vor.u32 %v1885, %v1888
        %v1890 = vrot.slane %v1889, 4
        %v1892 = vshll.u32 %v1559, 16
        %v1894 = vrot.slane %v1892, 5
        %v1895 = vsel %vm1569, %v1890, %v1894
        %v1896 = vshrl.u32 %v1559, 16
        %v1898 = vrot.slane %v1896, 4
        %v1899 = vor.u32 %v1898, %v1894
        %v1900 = vrot.slane %v1899, 4
        %v1902 = vshll.u32 %v1560, 16
        %v1904 = vrot.slane %v1902, 5
        %v1905 = vsel %vm1569, %v1900, %v1904
        %v1907 = vshrl.u32 %v1561, 16
        %v1909 = vrot.slane %v1907, 4
        %v1910 = vshll.u32 %v1561, 16
        %v1912 = vrot.slane %v1910, 5
        %v1913 = vor.u32 %v1909, %v1912
        %v1914 = vrot.slane %v1913, 4
        %v1916 = vshll.u32 %v1562, 16
        %v1918 = vrot.slane %v1916, 5
        %v1919 = vsel %vm1569, %v1914, %v1918
        %v1920 = vshrl.u32 %v1562, 16
        %v1922 = vrot.slane %v1920, 4
        %v1923 = vor.u32 %v1922, %v1918
        %v1924 = vrot.slane %v1923, 4
        %v1926 = vshll.u32 %v1563, 16
        %v1928 = vrot.slane %v1926, 5
        %v1929 = vsel %vm1569, %v1924, %v1928
        %v1931 = vshrl.u32 %v1564, 16
        %v1933 = vrot.slane %v1931, 4
        %v1934 = vshll.u32 %v1564, 16
        %v1936 = vrot.slane %v1934, 5
        %v1937 = vor.u32 %v1933, %v1936
        %v1938 = vrot.slane %v1937, 4
        %v1940 = vshll.u32 %v1565, 16
        %v1942 = vrot.slane %v1940, 5
        %v1943 = vsel %vm1569, %v1938, %v1942
        %v1944 = vshrl.u32 %v1565, 16
        %v1946 = vrot.slane %v1944, 4
        %v1947 = vor.u32 %v1946, %v1942
        %v1948 = vrot.slane %v1947, 4
        %v1950 = vshll.u32 %v1566, 16
        %v1952 = vrot.slane %v1950, 5
        %v1953 = vsel %vm1569, %v1948, %v1952
        %v1954 = vunpack.c.l.b16 %v1583
        %v1955 = vunpack.c.l.b16 %v1593
        %v1956 = vunpack.c.l.b16 %v1607
        %v1957 = vunpack.c.l.b16 %v1617
        %v1958 = vunpack.c.l.b16 %v1631
        %v1959 = vunpack.c.l.b16 %v1641
        %v1960 = vunpack.c.l.b16 %v1655
        %v1961 = vunpack.c.l.b16 %v1665
        %v1962 = vunpack.c.l.b16 %v1679
        %v1963 = vunpack.c.l.b16 %v1689
        %v1964 = vunpack.c.l.b16 %v1703
        %v1965 = vunpack.c.l.b16 %v1713
        %v1966 = vunpack.c.l.b16 %v1727
        %v1967 = vunpack.c.l.b16 %v1737
        %v1968 = vunpack.c.l.b16 %v1751
        %v1969 = vunpack.c.l.b16 %v1761
        %v1970 = vunpack.c.l.b16 %v1775
        %v1971 = vunpack.c.l.b16 %v1785
        %v1972 = vunpack.c.l.b16 %v1799
        %v1973 = vunpack.c.l.b16 %v1809
        %v1974 = vunpack.c.l.b16 %v1823
        %v1975 = vunpack.c.l.b16 %v1833
        %v1976 = vunpack.c.l.b16 %v1847
        %v1977 = vunpack.c.l.b16 %v1857
        %v1978 = vunpack.c.l.b16 %v1871
        %v1979 = vunpack.c.l.b16 %v1881
        %v1980 = vunpack.c.l.b16 %v1895
        %v1981 = vunpack.c.l.b16 %v1905
        %v1982 = vunpack.c.l.b16 %v1919
        %v1983 = vunpack.c.l.b16 %v1929
        %v1984 = vunpack.c.l.b16 %v1943
        %v1985 = vunpack.c.l.b16 %v1953
        %v1986 = vpack.c.b16 %v1955, %v1954
        %v1987 = vpack.c.b16 %v1957, %v1956
        %v1988 = vpack.c.b16 %v1959, %v1958
        %v1989 = vpack.c.b16 %v1961, %v1960
        %v1990 = vpack.c.b16 %v1963, %v1962
        %v1991 = vpack.c.b16 %v1965, %v1964
        %v1992 = vpack.c.b16 %v1967, %v1966
        %v1993 = vpack.c.b16 %v1969, %v1968
        %v1994 = vpack.c.b16 %v1971, %v1970
        %v1995 = vpack.c.b16 %v1973, %v1972
        %v1996 = vpack.c.b16 %v1975, %v1974
        %v1997 = vpack.c.b16 %v1977, %v1976
        %v1998 = vpack.c.b16 %v1979, %v1978
        %v1999 = vpack.c.b16 %v1981, %v1980
        %v2000 = vpack.c.b16 %v1983, %v1982
        %v2001 = vpack.c.b16 %v1985, %v1984
        %2018 = vst [vmem:[#allocation3 + $0x8] sm:$0xff] %v1986
        %2019 = vst [vmem:[#allocation3 + $0x50] sm:$0xff] %v1987
        %2020 = vst [vmem:[#allocation3 + $0x98] sm:$0xff] %v1988
        %2021 = vst [vmem:[#allocation3 + $0xe0] sm:$0xff] %v1989
        %2022 = vst [vmem:[#allocation3 + $0x128] sm:$0xff] %v1990
        %2023 = vst [vmem:[#allocation3 + $0x170] sm:$0xff] %v1991
        %2024 = vst [vmem:[#allocation3 + $0x1b8] sm:$0xff] %v1992
        %2025 = vst [vmem:[#allocation3 + $0x200] sm:$0xff] %v1993
        %2026 = vst [vmem:[#allocation3 + $0x248] sm:$0xff] %v1994
        %2027 = vst [vmem:[#allocation3 + $0x290] sm:$0xff] %v1995
        %2028 = vst [vmem:[#allocation3 + $0x2d8] sm:$0xff] %v1996
        %2029 = vst [vmem:[#allocation3 + $0x320] sm:$0xff] %v1997
        %2030 = vst [vmem:[#allocation3 + $0x368] sm:$0xff] %v1998
        %2031 = vst [vmem:[#allocation3 + $0x3b0] sm:$0xff] %v1999
        %2032 = vst [vmem:[#allocation3 + $0x3f8] sm:$0xff] %v2000
        %2033 = vst [vmem:[#allocation3 + $0x440] sm:$0xff] %v2001
        %v2034 = vld [vmem:[#allocation2] sm:$0xe]
        %v2035 = vld [vmem:[#allocation2 + $0x4] sm:$0xf]
        %v2036 = vld [vmem:[#allocation2 + $0x8] sm:$0x1]
        %v2037 = vld [vmem:[#allocation2 + $0xc] sm:$0xe]
        %v2038 = vld [vmem:[#allocation2 + $0x10] sm:$0xf]
        %v2039 = vld [vmem:[#allocation2 + $0x14] sm:$0x1]
        %v2040 = vld [vmem:[#allocation2 + $0x18] sm:$0xe]
        %v2041 = vld [vmem:[#allocation2 + $0x1c] sm:$0xf]
        %v2042 = vld [vmem:[#allocation2 + $0x20] sm:$0x1]
        %v2043 = vld [vmem:[#allocation2 + $0x24] sm:$0xe]
        %v2044 = vld [vmem:[#allocation2 + $0x28] sm:$0xf]
        %v2045 = vld [vmem:[#allocation2 + $0x2c] sm:$0x1]
        %v2046 = vld [vmem:[#allocation2 + $0x30] sm:$0xe]
        %v2047 = vld [vmem:[#allocation2 + $0x34] sm:$0xf]
        %v2048 = vld [vmem:[#allocation2 + $0x38] sm:$0x1]
        %v2049 = vld [vmem:[#allocation2 + $0x3c] sm:$0xe]
        %v2050 = vld [vmem:[#allocation2 + $0x40] sm:$0xf]
        %v2051 = vld [vmem:[#allocation2 + $0x44] sm:$0x1]
        %v2052 = vld [vmem:[#allocation2 + $0x48] sm:$0xe]
        %v2053 = vld [vmem:[#allocation2 + $0x4c] sm:$0xf]
        %v2054 = vld [vmem:[#allocation2 + $0x50] sm:$0x1]
        %v2055 = vld [vmem:[#allocation2 + $0x54] sm:$0xe]
        %v2056 = vld [vmem:[#allocation2 + $0x58] sm:$0xf]
        %v2057 = vld [vmem:[#allocation2 + $0x5c] sm:$0x1]
        %v2058 = vld [vmem:[#allocation2 + $0x60] sm:$0xe]
        %v2059 = vld [vmem:[#allocation2 + $0x64] sm:$0xf]
        %v2060 = vld [vmem:[#allocation2 + $0x68] sm:$0x1]
        %v2061 = vld [vmem:[#allocation2 + $0x6c] sm:$0xe]
        %v2062 = vld [vmem:[#allocation2 + $0x70] sm:$0xf]
        %v2063 = vld [vmem:[#allocation2 + $0x74] sm:$0x1]
        %v2064 = vld [vmem:[#allocation2 + $0x78] sm:$0xe]
        %v2065 = vld [vmem:[#allocation2 + $0x7c] sm:$0xf]
        %v2066 = vld [vmem:[#allocation2 + $0x80] sm:$0x1]
        %v2067 = vld [vmem:[#allocation2 + $0x84] sm:$0xe]
        %v2068 = vld [vmem:[#allocation2 + $0x88] sm:$0xf]
        %v2069 = vld [vmem:[#allocation2 + $0x8c] sm:$0x1]
        %v2070 = vld [vmem:[#allocation2 + $0x90] sm:$0xe]
        %v2071 = vld [vmem:[#allocation2 + $0x94] sm:$0xf]
        %v2072 = vld [vmem:[#allocation2 + $0x98] sm:$0x1]
        %v2073 = vld [vmem:[#allocation2 + $0x9c] sm:$0xe]
        %v2074 = vld [vmem:[#allocation2 + $0xa0] sm:$0xf]
        %v2075 = vld [vmem:[#allocation2 + $0xa4] sm:$0x1]
        %v2076 = vld [vmem:[#allocation2 + $0xa8] sm:$0xe]
        %v2077 = vld [vmem:[#allocation2 + $0xac] sm:$0xf]
        %v2078 = vld [vmem:[#allocation2 + $0xb0] sm:$0x1]
        %v2079 = vld [vmem:[#allocation2 + $0xb4] sm:$0xe]
        %v2080 = vld [vmem:[#allocation2 + $0xb8] sm:$0xf]
        %v2081 = vld [vmem:[#allocation2 + $0xbc] sm:$0x1]
        %vm2130 = vcmask 1042432
        %vm2131 = vcmask 1046532
        %vm2132 = vmor %vm2130, %vm2131
        %v2133 = vrot.slane %v2034, 5
        %v2134 = vrot.slane %v2133, 4
        %v2135 = vrot.slane %v2035, 5
        %v2136 = vsel %vm2132, %v2134, %v2135
        %v2137 = vrot.slane %v2135, 4
        %v2138 = vrot.slane %v2036, 5
        %v2139 = vsel %vm2132, %v2137, %v2138
        %v2140 = vrot.slane %v2037, 5
        %v2141 = vrot.slane %v2140, 4
        %v2142 = vrot.slane %v2038, 5
        %v2143 = vsel %vm2132, %v2141, %v2142
        %v2144 = vrot.slane %v2142, 4
        %v2145 = vrot.slane %v2039, 5
        %v2146 = vsel %vm2132, %v2144, %v2145
        %v2147 = vrot.slane %v2040, 5
        %v2148 = vrot.slane %v2147, 4
        %v2149 = vrot.slane %v2041, 5
        %v2150 = vsel %vm2132, %v2148, %v2149
        %v2151 = vrot.slane %v2149, 4
        %v2152 = vrot.slane %v2042, 5
        %v2153 = vsel %vm2132, %v2151, %v2152
        %v2154 = vrot.slane %v2043, 5
        %v2155 = vrot.slane %v2154, 4
        %v2156 = vrot.slane %v2044, 5
        %v2157 = vsel %vm2132, %v2155, %v2156
        %v2158 = vrot.slane %v2156, 4
        %v2159 = vrot.slane %v2045, 5
        %v2160 = vsel %vm2132, %v2158, %v2159
        %v2161 = vrot.slane %v2046, 5
        %v2162 = vrot.slane %v2161, 4
        %v2163 = vrot.slane %v2047, 5
        %v2164 = vsel %vm2132, %v2162, %v2163
        %v2165 = vrot.slane %v2163, 4
        %v2166 = vrot.slane %v2048, 5
        %v2167 = vsel %vm2132, %v2165, %v2166
        %v2168 = vrot.slane %v2049, 5
        %v2169 = vrot.slane %v2168, 4
        %v2170 = vrot.slane %v2050, 5
        %v2171 = vsel %vm2132, %v2169, %v2170
        %v2172 = vrot.slane %v2170, 4
        %v2173 = vrot.slane %v2051, 5
        %v2174 = vsel %vm2132, %v2172, %v2173
        %v2175 = vrot.slane %v2052, 5
        %v2176 = vrot.slane %v2175, 4
        %v2177 = vrot.slane %v2053, 5
        %v2178 = vsel %vm2132, %v2176, %v2177
        %v2179 = vrot.slane %v2177, 4
        %v2180 = vrot.slane %v2054, 5
        %v2181 = vsel %vm2132, %v2179, %v2180
        %v2182 = vrot.slane %v2055, 5
        %v2183 = vrot.slane %v2182, 4
        %v2184 = vrot.slane %v2056, 5
        %v2185 = vsel %vm2132, %v2183, %v2184
        %v2186 = vrot.slane %v2184, 4
        %v2187 = vrot.slane %v2057, 5
        %v2188 = vsel %vm2132, %v2186, %v2187
        %v2189 = vrot.slane %v2058, 5
        %v2190 = vrot.slane %v2189, 4
        %v2191 = vrot.slane %v2059, 5
        %v2192 = vsel %vm2132, %v2190, %v2191
        %v2193 = vrot.slane %v2191, 4
        %v2194 = vrot.slane %v2060, 5
        %v2195 = vsel %vm2132, %v2193, %v2194
        %v2196 = vrot.slane %v2061, 5
        %v2197 = vrot.slane %v2196, 4
        %v2198 = vrot.slane %v2062, 5
        %v2199 = vsel %vm2132, %v2197, %v2198
        %v2200 = vrot.slane %v2198, 4
        %v2201 = vrot.slane %v2063, 5
        %v2202 = vsel %vm2132, %v2200, %v2201
        %v2203 = vrot.slane %v2064, 5
        %v2204 = vrot.slane %v2203, 4
        %v2205 = vrot.slane %v2065, 5
        %v2206 = vsel %vm2132, %v2204, %v2205
        %v2207 = vrot.slane %v2205, 4
        %v2208 = vrot.slane %v2066, 5
        %v2209 = vsel %vm2132, %v2207, %v2208
        %v2210 = vrot.slane %v2067, 5
        %v2211 = vrot.slane %v2210, 4
        %v2212 = vrot.slane %v2068, 5
        %v2213 = vsel %vm2132, %v2211, %v2212
        %v2214 = vrot.slane %v2212, 4
        %v2215 = vrot.slane %v2069, 5
        %v2216 = vsel %vm2132, %v2214, %v2215
        %v2217 = vrot.slane %v2070, 5
        %v2218 = vrot.slane %v2217, 4
        %v2219 = vrot.slane %v2071, 5
        %v2220 = vsel %vm2132, %v2218, %v2219
        %v2221 = vrot.slane %v2219, 4
        %v2222 = vrot.slane %v2072, 5
        %v2223 = vsel %vm2132, %v2221, %v2222
        %v2224 = vrot.slane %v2073, 5
        %v2225 = vrot.slane %v2224, 4
        %v2226 = vrot.slane %v2074, 5
        %v2227 = vsel %vm2132, %v2225, %v2226
        %v2228 = vrot.slane %v2226, 4
        %v2229 = vrot.slane %v2075, 5
        %v2230 = vsel %vm2132, %v2228, %v2229
        %v2231 = vrot.slane %v2076, 5
        %v2232 = vrot.slane %v2231, 4
        %v2233 = vrot.slane %v2077, 5
        %v2234 = vsel %vm2132, %v2232, %v2233
        %v2235 = vrot.slane %v2233, 4
        %v2236 = vrot.slane %v2078, 5
        %v2237 = vsel %vm2132, %v2235, %v2236
        %v2238 = vrot.slane %v2079, 5
        %v2239 = vrot.slane %v2238, 4
        %v2240 = vrot.slane %v2080, 5
        %v2241 = vsel %vm2132, %v2239, %v2240
        %v2242 = vrot.slane %v2240, 4
        %v2243 = vrot.slane %v2081, 5
        %v2244 = vsel %vm2132, %v2242, %v2243
        %v2245 = vunpack.c.l.b16 %v2136
        %v2246 = vunpack.c.l.b16 %v2139
        %v2247 = vunpack.c.l.b16 %v2143
        %v2248 = vunpack.c.l.b16 %v2146
        %v2249 = vunpack.c.l.b16 %v2150
        %v2250 = vunpack.c.l.b16 %v2153
        %v2251 = vunpack.c.l.b16 %v2157
        %v2252 = vunpack.c.l.b16 %v2160
        %v2253 = vunpack.c.l.b16 %v2164
        %v2254 = vunpack.c.l.b16 %v2167
        %v2255 = vunpack.c.l.b16 %v2171
        %v2256 = vunpack.c.l.b16 %v2174
        %v2257 = vunpack.c.l.b16 %v2178
        %v2258 = vunpack.c.l.b16 %v2181
        %v2259 = vunpack.c.l.b16 %v2185
        %v2260 = vunpack.c.l.b16 %v2188
        %v2261 = vunpack.c.l.b16 %v2192
        %v2262 = vunpack.c.l.b16 %v2195
        %v2263 = vunpack.c.l.b16 %v2199
        %v2264 = vunpack.c.l.b16 %v2202
        %v2265 = vunpack.c.l.b16 %v2206
        %v2266 = vunpack.c.l.b16 %v2209
        %v2267 = vunpack.c.l.b16 %v2213
        %v2268 = vunpack.c.l.b16 %v2216
        %v2269 = vunpack.c.l.b16 %v2220
        %v2270 = vunpack.c.l.b16 %v2223
        %v2271 = vunpack.c.l.b16 %v2227
        %v2272 = vunpack.c.l.b16 %v2230
        %v2273 = vunpack.c.l.b16 %v2234
        %v2274 = vunpack.c.l.b16 %v2237
        %v2275 = vunpack.c.l.b16 %v2241
        %v2276 = vunpack.c.l.b16 %v2244
        %v2277 = vpack.c.b16 %v2246, %v2245
        %v2278 = vpack.c.b16 %v2248, %v2247
        %v2279 = vpack.c.b16 %v2250, %v2249
        %v2280 = vpack.c.b16 %v2252, %v2251
        %v2281 = vpack.c.b16 %v2254, %v2253
        %v2282 = vpack.c.b16 %v2256, %v2255
        %v2283 = vpack.c.b16 %v2258, %v2257
        %v2284 = vpack.c.b16 %v2260, %v2259
        %v2285 = vpack.c.b16 %v2262, %v2261
        %v2286 = vpack.c.b16 %v2264, %v2263
        %v2287 = vpack.c.b16 %v2266, %v2265
        %v2288 = vpack.c.b16 %v2268, %v2267
        %v2289 = vpack.c.b16 %v2270, %v2269
        %v2290 = vpack.c.b16 %v2272, %v2271
        %v2291 = vpack.c.b16 %v2274, %v2273
        %v2292 = vpack.c.b16 %v2276, %v2275
        %2309 = vst [vmem:[#allocation3 + $0x10] sm:$0xff] %v2277
        %2310 = vst [vmem:[#allocation3 + $0x58] sm:$0xff] %v2278
        %2311 = vst [vmem:[#allocation3 + $0xa0] sm:$0xff] %v2279
        %2312 = vst [vmem:[#allocation3 + $0xe8] sm:$0xff] %v2280
        %2313 = vst [vmem:[#allocation3 + $0x130] sm:$0xff] %v2281
        %2314 = vst [vmem:[#allocation3 + $0x178] sm:$0xff] %v2282
        %2315 = vst [vmem:[#allocation3 + $0x1c0] sm:$0xff] %v2283
        %2316 = vst [vmem:[#allocation3 + $0x208] sm:$0xff] %v2284
        %2317 = vst [vmem:[#allocation3 + $0x250] sm:$0xff] %v2285
        %2318 = vst [vmem:[#allocation3 + $0x298] sm:$0xff] %v2286
        %2319 = vst [vmem:[#allocation3 + $0x2e0] sm:$0xff] %v2287
        %2320 = vst [vmem:[#allocation3 + $0x328] sm:$0xff] %v2288
        %2321 = vst [vmem:[#allocation3 + $0x370] sm:$0xff] %v2289
        %2322 = vst [vmem:[#allocation3 + $0x3b8] sm:$0xff] %v2290
        %2323 = vst [vmem:[#allocation3 + $0x400] sm:$0xff] %v2291
        %2324 = vst [vmem:[#allocation3 + $0x448] sm:$0xff] %v2292
        %v2325 = vld [vmem:[%s741] sm:$0xf]
        %v2326 = vld [vmem:[%s741 + $0x4] sm:$0xf]
        %v2327 = vld [vmem:[%s741 + $0xc] sm:$0xf]
        %v2328 = vld [vmem:[%s741 + $0x10] sm:$0xf]
        %v2329 = vld [vmem:[%s741 + $0x18] sm:$0xf]
        %v2330 = vld [vmem:[%s741 + $0x1c] sm:$0xf]
        %v2331 = vld [vmem:[%s741 + $0x24] sm:$0xf]
        %v2332 = vld [vmem:[%s741 + $0x28] sm:$0xf]
        %v2333 = vld [vmem:[%s741 + $0x30] sm:$0xf]
        %v2334 = vld [vmem:[%s741 + $0x34] sm:$0xf]
        %v2335 = vld [vmem:[%s741 + $0x3c] sm:$0xf]
        %v2336 = vld [vmem:[%s741 + $0x40] sm:$0xf]
        %v2337 = vld [vmem:[%s741 + $0x48] sm:$0xf]
        %v2338 = vld [vmem:[%s741 + $0x4c] sm:$0xf]
        %v2339 = vld [vmem:[%s741 + $0x54] sm:$0xf]
        %v2340 = vld [vmem:[%s741 + $0x58] sm:$0xf]
        %v2341 = vld [vmem:[%s741 + $0x60] sm:$0xf]
        %v2342 = vld [vmem:[%s741 + $0x64] sm:$0xf]
        %v2343 = vld [vmem:[%s741 + $0x6c] sm:$0xf]
        %v2344 = vld [vmem:[%s741 + $0x70] sm:$0xf]
        %v2345 = vld [vmem:[%s741 + $0x78] sm:$0xf]
        %v2346 = vld [vmem:[%s741 + $0x7c] sm:$0xf]
        %v2347 = vld [vmem:[%s741 + $0x84] sm:$0xf]
        %v2348 = vld [vmem:[%s741 + $0x88] sm:$0xf]
        %v2349 = vld [vmem:[%s741 + $0x90] sm:$0xf]
        %v2350 = vld [vmem:[%s741 + $0x94] sm:$0xf]
        %v2351 = vld [vmem:[%s741 + $0x9c] sm:$0xf]
        %v2352 = vld [vmem:[%s741 + $0xa0] sm:$0xf]
        %v2353 = vld [vmem:[%s741 + $0xa8] sm:$0xf]
        %v2354 = vld [vmem:[%s741 + $0xac] sm:$0xf]
        %v2355 = vld [vmem:[%s741 + $0xb4] sm:$0xf]
        %v2356 = vld [vmem:[%s741 + $0xb8] sm:$0xf]
        %v2389 = vunpack.c.l.b16 %v2325
        %v2390 = vunpack.c.l.b16 %v2326
        %v2391 = vunpack.c.l.b16 %v2327
        %v2392 = vunpack.c.l.b16 %v2328
        %v2393 = vunpack.c.l.b16 %v2329
        %v2394 = vunpack.c.l.b16 %v2330
        %v2395 = vunpack.c.l.b16 %v2331
        %v2396 = vunpack.c.l.b16 %v2332
        %v2397 = vunpack.c.l.b16 %v2333
        %v2398 = vunpack.c.l.b16 %v2334
        %v2399 = vunpack.c.l.b16 %v2335
        %v2400 = vunpack.c.l.b16 %v2336
        %v2401 = vunpack.c.l.b16 %v2337
        %v2402 = vunpack.c.l.b16 %v2338
        %v2403 = vunpack.c.l.b16 %v2339
        %v2404 = vunpack.c.l.b16 %v2340
        %v2405 = vunpack.c.l.b16 %v2341
        %v2406 = vunpack.c.l.b16 %v2342
        %v2407 = vunpack.c.l.b16 %v2343
        %v2408 = vunpack.c.l.b16 %v2344
        %v2409 = vunpack.c.l.b16 %v2345
        %v2410 = vunpack.c.l.b16 %v2346
        %v2411 = vunpack.c.l.b16 %v2347
        %v2412 = vunpack.c.l.b16 %v2348
        %v2413 = vunpack.c.l.b16 %v2349
        %v2414 = vunpack.c.l.b16 %v2350
        %v2415 = vunpack.c.l.b16 %v2351
        %v2416 = vunpack.c.l.b16 %v2352
        %v2417 = vunpack.c.l.b16 %v2353
        %v2418 = vunpack.c.l.b16 %v2354
        %v2419 = vunpack.c.l.b16 %v2355
        %v2420 = vunpack.c.l.b16 %v2356
        %v2421 = vpack.c.b16 %v2390, %v2389
        %v2422 = vpack.c.b16 %v2392, %v2391
        %v2423 = vpack.c.b16 %v2394, %v2393
        %v2424 = vpack.c.b16 %v2396, %v2395
        %v2425 = vpack.c.b16 %v2398, %v2397
        %v2426 = vpack.c.b16 %v2400, %v2399
        %v2427 = vpack.c.b16 %v2402, %v2401
        %v2428 = vpack.c.b16 %v2404, %v2403
        %v2429 = vpack.c.b16 %v2406, %v2405
        %v2430 = vpack.c.b16 %v2408, %v2407
        %v2431 = vpack.c.b16 %v2410, %v2409
        %v2432 = vpack.c.b16 %v2412, %v2411
        %v2433 = vpack.c.b16 %v2414, %v2413
        %v2434 = vpack.c.b16 %v2416, %v2415
        %v2435 = vpack.c.b16 %v2418, %v2417
        %v2436 = vpack.c.b16 %v2420, %v2419
        %2453 = vst [vmem:[#allocation3 + $0x18] sm:$0xff] %v2421
        %2454 = vst [vmem:[#allocation3 + $0x60] sm:$0xff] %v2422
        %2455 = vst [vmem:[#allocation3 + $0xa8] sm:$0xff] %v2423
        %2456 = vst [vmem:[#allocation3 + $0xf0] sm:$0xff] %v2424
        %2457 = vst [vmem:[#allocation3 + $0x138] sm:$0xff] %v2425
        %2458 = vst [vmem:[#allocation3 + $0x180] sm:$0xff] %v2426
        %2459 = vst [vmem:[#allocation3 + $0x1c8] sm:$0xff] %v2427
        %2460 = vst [vmem:[#allocation3 + $0x210] sm:$0xff] %v2428
        %2461 = vst [vmem:[#allocation3 + $0x258] sm:$0xff] %v2429
        %2462 = vst [vmem:[#allocation3 + $0x2a0] sm:$0xff] %v2430
        %2463 = vst [vmem:[#allocation3 + $0x2e8] sm:$0xff] %v2431
        %2464 = vst [vmem:[#allocation3 + $0x330] sm:$0xff] %v2432
        %2465 = vst [vmem:[#allocation3 + $0x378] sm:$0xff] %v2433
        %2466 = vst [vmem:[#allocation3 + $0x3c0] sm:$0xff] %v2434
        %2467 = vst [vmem:[#allocation3 + $0x408] sm:$0xff] %v2435
        %2468 = vst [vmem:[#allocation3 + $0x450] sm:$0xff] %v2436
        %v2469 = vld [vmem:[%s741] sm:$0xf]
        %v2470 = vld [vmem:[%s741 + $0x4] sm:$0xf]
        %v2471 = vld [vmem:[%s741 + $0x8] sm:$0x1]
        %v2472 = vld [vmem:[%s741 + $0xc] sm:$0xf]
        %v2473 = vld [vmem:[%s741 + $0x10] sm:$0xf]
        %v2474 = vld [vmem:[%s741 + $0x14] sm:$0x1]
        %v2475 = vld [vmem:[%s741 + $0x18] sm:$0xf]
        %v2476 = vld [vmem:[%s741 + $0x1c] sm:$0xf]
        %v2477 = vld [vmem:[%s741 + $0x20] sm:$0x1]
        %v2478 = vld [vmem:[%s741 + $0x24] sm:$0xf]
        %v2479 = vld [vmem:[%s741 + $0x28] sm:$0xf]
        %v2480 = vld [vmem:[%s741 + $0x2c] sm:$0x1]
        %v2481 = vld [vmem:[%s741 + $0x30] sm:$0xf]
        %v2482 = vld [vmem:[%s741 + $0x34] sm:$0xf]
        %v2483 = vld [vmem:[%s741 + $0x38] sm:$0x1]
        %v2484 = vld [vmem:[%s741 + $0x3c] sm:$0xf]
        %v2485 = vld [vmem:[%s741 + $0x40] sm:$0xf]
        %v2486 = vld [vmem:[%s741 + $0x44] sm:$0x1]
        %v2487 = vld [vmem:[%s741 + $0x48] sm:$0xf]
        %v2488 = vld [vmem:[%s741 + $0x4c] sm:$0xf]
        %v2489 = vld [vmem:[%s741 + $0x50] sm:$0x1]
        %v2490 = vld [vmem:[%s741 + $0x54] sm:$0xf]
        %v2491 = vld [vmem:[%s741 + $0x58] sm:$0xf]
        %v2492 = vld [vmem:[%s741 + $0x5c] sm:$0x1]
        %v2493 = vld [vmem:[%s741 + $0x60] sm:$0xf]
        %v2494 = vld [vmem:[%s741 + $0x64] sm:$0xf]
        %v2495 = vld [vmem:[%s741 + $0x68] sm:$0x1]
        %v2496 = vld [vmem:[%s741 + $0x6c] sm:$0xf]
        %v2497 = vld [vmem:[%s741 + $0x70] sm:$0xf]
        %v2498 = vld [vmem:[%s741 + $0x74] sm:$0x1]
        %v2499 = vld [vmem:[%s741 + $0x78] sm:$0xf]
        %v2500 = vld [vmem:[%s741 + $0x7c] sm:$0xf]
        %v2501 = vld [vmem:[%s741 + $0x80] sm:$0x1]
        %v2502 = vld [vmem:[%s741 + $0x84] sm:$0xf]
        %v2503 = vld [vmem:[%s741 + $0x88] sm:$0xf]
        %v2504 = vld [vmem:[%s741 + $0x8c] sm:$0x1]
        %v2505 = vld [vmem:[%s741 + $0x90] sm:$0xf]
        %v2506 = vld [vmem:[%s741 + $0x94] sm:$0xf]
        %v2507 = vld [vmem:[%s741 + $0x98] sm:$0x1]
        %v2508 = vld [vmem:[%s741 + $0x9c] sm:$0xf]
        %v2509 = vld [vmem:[%s741 + $0xa0] sm:$0xf]
        %v2510 = vld [vmem:[%s741 + $0xa4] sm:$0x1]
        %v2511 = vld [vmem:[%s741 + $0xa8] sm:$0xf]
        %v2512 = vld [vmem:[%s741 + $0xac] sm:$0xf]
        %v2513 = vld [vmem:[%s741 + $0xb0] sm:$0x1]
        %v2514 = vld [vmem:[%s741 + $0xb4] sm:$0xf]
        %v2515 = vld [vmem:[%s741 + $0xb8] sm:$0xf]
        %v2516 = vld [vmem:[%s741 + $0xbc] sm:$0x1]
        %v2518 = vshrl.u32 %v2469, 16
        %v2520 = vrot.slane %v2518, 4
        %v2521 = vshll.u32 %v2469, 16
        %v2523 = vrot.slane %v2521, 5
        %v2524 = vor.u32 %v2520, %v2523
        %v2525 = vrot.slane %v2524, 4
        %v2527 = vshll.u32 %v2470, 16
        %v2529 = vrot.slane %v2527, 5
        %v2530 = vsel %vm1569, %v2525, %v2529
        %v2531 = vshrl.u32 %v2470, 16
        %v2533 = vrot.slane %v2531, 4
        %v2534 = vor.u32 %v2533, %v2529
        %v2535 = vrot.slane %v2534, 4
        %v2537 = vshll.u32 %v2471, 16
        %v2539 = vrot.slane %v2537, 5
        %v2540 = vsel %vm1569, %v2535, %v2539
        %v2542 = vshrl.u32 %v2472, 16
        %v2544 = vrot.slane %v2542, 4
        %v2545 = vshll.u32 %v2472, 16
        %v2547 = vrot.slane %v2545, 5
        %v2548 = vor.u32 %v2544, %v2547
        %v2549 = vrot.slane %v2548, 4
        %v2551 = vshll.u32 %v2473, 16
        %v2553 = vrot.slane %v2551, 5
        %v2554 = vsel %vm1569, %v2549, %v2553
        %v2555 = vshrl.u32 %v2473, 16
        %v2557 = vrot.slane %v2555, 4
        %v2558 = vor.u32 %v2557, %v2553
        %v2559 = vrot.slane %v2558, 4
        %v2561 = vshll.u32 %v2474, 16
        %v2563 = vrot.slane %v2561, 5
        %v2564 = vsel %vm1569, %v2559, %v2563
        %v2566 = vshrl.u32 %v2475, 16
        %v2568 = vrot.slane %v2566, 4
        %v2569 = vshll.u32 %v2475, 16
        %v2571 = vrot.slane %v2569, 5
        %v2572 = vor.u32 %v2568, %v2571
        %v2573 = vrot.slane %v2572, 4
        %v2575 = vshll.u32 %v2476, 16
        %v2577 = vrot.slane %v2575, 5
        %v2578 = vsel %vm1569, %v2573, %v2577
        %v2579 = vshrl.u32 %v2476, 16
        %v2581 = vrot.slane %v2579, 4
        %v2582 = vor.u32 %v2581, %v2577
        %v2583 = vrot.slane %v2582, 4
        %v2585 = vshll.u32 %v2477, 16
        %v2587 = vrot.slane %v2585, 5
        %v2588 = vsel %vm1569, %v2583, %v2587
        %v2590 = vshrl.u32 %v2478, 16
        %v2592 = vrot.slane %v2590, 4
        %v2593 = vshll.u32 %v2478, 16
        %v2595 = vrot.slane %v2593, 5
        %v2596 = vor.u32 %v2592, %v2595
        %v2597 = vrot.slane %v2596, 4
        %v2599 = vshll.u32 %v2479, 16
        %v2601 = vrot.slane %v2599, 5
        %v2602 = vsel %vm1569, %v2597, %v2601
        %v2603 = vshrl.u32 %v2479, 16
        %v2605 = vrot.slane %v2603, 4
        %v2606 = vor.u32 %v2605, %v2601
        %v2607 = vrot.slane %v2606, 4
        %v2609 = vshll.u32 %v2480, 16
        %v2611 = vrot.slane %v2609, 5
        %v2612 = vsel %vm1569, %v2607, %v2611
        %v2614 = vshrl.u32 %v2481, 16
        %v2616 = vrot.slane %v2614, 4
        %v2617 = vshll.u32 %v2481, 16
        %v2619 = vrot.slane %v2617, 5
        %v2620 = vor.u32 %v2616, %v2619
        %v2621 = vrot.slane %v2620, 4
        %v2623 = vshll.u32 %v2482, 16
        %v2625 = vrot.slane %v2623, 5
        %v2626 = vsel %vm1569, %v2621, %v2625
        %v2627 = vshrl.u32 %v2482, 16
        %v2629 = vrot.slane %v2627, 4
        %v2630 = vor.u32 %v2629, %v2625
        %v2631 = vrot.slane %v2630, 4
        %v2633 = vshll.u32 %v2483, 16
        %v2635 = vrot.slane %v2633, 5
        %v2636 = vsel %vm1569, %v2631, %v2635
        %v2638 = vshrl.u32 %v2484, 16
        %v2640 = vrot.slane %v2638, 4
        %v2641 = vshll.u32 %v2484, 16
        %v2643 = vrot.slane %v2641, 5
        %v2644 = vor.u32 %v2640, %v2643
        %v2645 = vrot.slane %v2644, 4
        %v2647 = vshll.u32 %v2485, 16
        %v2649 = vrot.slane %v2647, 5
        %v2650 = vsel %vm1569, %v2645, %v2649
        %v2651 = vshrl.u32 %v2485, 16
        %v2653 = vrot.slane %v2651, 4
        %v2654 = vor.u32 %v2653, %v2649
        %v2655 = vrot.slane %v2654, 4
        %v2657 = vshll.u32 %v2486, 16
        %v2659 = vrot.slane %v2657, 5
        %v2660 = vsel %vm1569, %v2655, %v2659
        %v2662 = vshrl.u32 %v2487, 16
        %v2664 = vrot.slane %v2662, 4
        %v2665 = vshll.u32 %v2487, 16
        %v2667 = vrot.slane %v2665, 5
        %v2668 = vor.u32 %v2664, %v2667
        %v2669 = vrot.slane %v2668, 4
        %v2671 = vshll.u32 %v2488, 16
        %v2673 = vrot.slane %v2671, 5
        %v2674 = vsel %vm1569, %v2669, %v2673
        %v2675 = vshrl.u32 %v2488, 16
        %v2677 = vrot.slane %v2675, 4
        %v2678 = vor.u32 %v2677, %v2673
        %v2679 = vrot.slane %v2678, 4
        %v2681 = vshll.u32 %v2489, 16
        %v2683 = vrot.slane %v2681, 5
        %v2684 = vsel %vm1569, %v2679, %v2683
        %v2686 = vshrl.u32 %v2490, 16
        %v2688 = vrot.slane %v2686, 4
        %v2689 = vshll.u32 %v2490, 16
        %v2691 = vrot.slane %v2689, 5
        %v2692 = vor.u32 %v2688, %v2691
        %v2693 = vrot.slane %v2692, 4
        %v2695 = vshll.u32 %v2491, 16
        %v2697 = vrot.slane %v2695, 5
        %v2698 = vsel %vm1569, %v2693, %v2697
        %v2699 = vshrl.u32 %v2491, 16
        %v2701 = vrot.slane %v2699, 4
        %v2702 = vor.u32 %v2701, %v2697
        %v2703 = vrot.slane %v2702, 4
        %v2705 = vshll.u32 %v2492, 16
        %v2707 = vrot.slane %v2705, 5
        %v2708 = vsel %vm1569, %v2703, %v2707
        %v2710 = vshrl.u32 %v2493, 16
        %v2712 = vrot.slane %v2710, 4
        %v2713 = vshll.u32 %v2493, 16
        %v2715 = vrot.slane %v2713, 5
        %v2716 = vor.u32 %v2712, %v2715
        %v2717 = vrot.slane %v2716, 4
        %v2719 = vshll.u32 %v2494, 16
        %v2721 = vrot.slane %v2719, 5
        %v2722 = vsel %vm1569, %v2717, %v2721
        %v2723 = vshrl.u32 %v2494, 16
        %v2725 = vrot.slane %v2723, 4
        %v2726 = vor.u32 %v2725, %v2721
        %v2727 = vrot.slane %v2726, 4
        %v2729 = vshll.u32 %v2495, 16
        %v2731 = vrot.slane %v2729, 5
        %v2732 = vsel %vm1569, %v2727, %v2731
        %v2734 = vshrl.u32 %v2496, 16
        %v2736 = vrot.slane %v2734, 4
        %v2737 = vshll.u32 %v2496, 16
        %v2739 = vrot.slane %v2737, 5
        %v2740 = vor.u32 %v2736, %v2739
        %v2741 = vrot.slane %v2740, 4
        %v2743 = vshll.u32 %v2497, 16
        %v2745 = vrot.slane %v2743, 5
        %v2746 = vsel %vm1569, %v2741, %v2745
        %v2747 = vshrl.u32 %v2497, 16
        %v2749 = vrot.slane %v2747, 4
        %v2750 = vor.u32 %v2749, %v2745
        %v2751 = vrot.slane %v2750, 4
        %v2753 = vshll.u32 %v2498, 16
        %v2755 = vrot.slane %v2753, 5
        %v2756 = vsel %vm1569, %v2751, %v2755
        %v2758 = vshrl.u32 %v2499, 16
        %v2760 = vrot.slane %v2758, 4
        %v2761 = vshll.u32 %v2499, 16
        %v2763 = vrot.slane %v2761, 5
        %v2764 = vor.u32 %v2760, %v2763
        %v2765 = vrot.slane %v2764, 4
        %v2767 = vshll.u32 %v2500, 16
        %v2769 = vrot.slane %v2767, 5
        %v2770 = vsel %vm1569, %v2765, %v2769
        %v2771 = vshrl.u32 %v2500, 16
        %v2773 = vrot.slane %v2771, 4
        %v2774 = vor.u32 %v2773, %v2769
        %v2775 = vrot.slane %v2774, 4
        %v2777 = vshll.u32 %v2501, 16
        %v2779 = vrot.slane %v2777, 5
        %v2780 = vsel %vm1569, %v2775, %v2779
        %v2782 = vshrl.u32 %v2502, 16
        %v2784 = vrot.slane %v2782, 4
        %v2785 = vshll.u32 %v2502, 16
        %v2787 = vrot.slane %v2785, 5
        %v2788 = vor.u32 %v2784, %v2787
        %v2789 = vrot.slane %v2788, 4
        %v2791 = vshll.u32 %v2503, 16
        %v2793 = vrot.slane %v2791, 5
        %v2794 = vsel %vm1569, %v2789, %v2793
        %v2795 = vshrl.u32 %v2503, 16
        %v2797 = vrot.slane %v2795, 4
        %v2798 = vor.u32 %v2797, %v2793
        %v2799 = vrot.slane %v2798, 4
        %v2801 = vshll.u32 %v2504, 16
        %v2803 = vrot.slane %v2801, 5
        %v2804 = vsel %vm1569, %v2799, %v2803
        %v2806 = vshrl.u32 %v2505, 16
        %v2808 = vrot.slane %v2806, 4
        %v2809 = vshll.u32 %v2505, 16
        %v2811 = vrot.slane %v2809, 5
        %v2812 = vor.u32 %v2808, %v2811
        %v2813 = vrot.slane %v2812, 4
        %v2815 = vshll.u32 %v2506, 16
        %v2817 = vrot.slane %v2815, 5
        %v2818 = vsel %vm1569, %v2813, %v2817
        %v2819 = vshrl.u32 %v2506, 16
        %v2821 = vrot.slane %v2819, 4
        %v2822 = vor.u32 %v2821, %v2817
        %v2823 = vrot.slane %v2822, 4
        %v2825 = vshll.u32 %v2507, 16
        %v2827 = vrot.slane %v2825, 5
        %v2828 = vsel %vm1569, %v2823, %v2827
        %v2830 = vshrl.u32 %v2508, 16
        %v2832 = vrot.slane %v2830, 4
        %v2833 = vshll.u32 %v2508, 16
        %v2835 = vrot.slane %v2833, 5
        %v2836 = vor.u32 %v2832, %v2835
        %v2837 = vrot.slane %v2836, 4
        %v2839 = vshll.u32 %v2509, 16
        %v2841 = vrot.slane %v2839, 5
        %v2842 = vsel %vm1569, %v2837, %v2841
        %v2843 = vshrl.u32 %v2509, 16
        %v2845 = vrot.slane %v2843, 4
        %v2846 = vor.u32 %v2845, %v2841
        %v2847 = vrot.slane %v2846, 4
        %v2849 = vshll.u32 %v2510, 16
        %v2851 = vrot.slane %v2849, 5
        %v2852 = vsel %vm1569, %v2847, %v2851
        %v2854 = vshrl.u32 %v2511, 16
        %v2856 = vrot.slane %v2854, 4
        %v2857 = vshll.u32 %v2511, 16
        %v2859 = vrot.slane %v2857, 5
        %v2860 = vor.u32 %v2856, %v2859
        %v2861 = vrot.slane %v2860, 4
        %v2863 = vshll.u32 %v2512, 16
        %v2865 = vrot.slane %v2863, 5
        %v2866 = vsel %vm1569, %v2861, %v2865
        %v2867 = vshrl.u32 %v2512, 16
        %v2869 = vrot.slane %v2867, 4
        %v2870 = vor.u32 %v2869, %v2865
        %v2871 = vrot.slane %v2870, 4
        %v2873 = vshll.u32 %v2513, 16
        %v2875 = vrot.slane %v2873, 5
        %v2876 = vsel %vm1569, %v2871, %v2875
        %v2878 = vshrl.u32 %v2514, 16
        %v2880 = vrot.slane %v2878, 4
        %v2881 = vshll.u32 %v2514, 16
        %v2883 = vrot.slane %v2881, 5
        %v2884 = vor.u32 %v2880, %v2883
        %v2885 = vrot.slane %v2884, 4
        %v2887 = vshll.u32 %v2515, 16
        %v2889 = vrot.slane %v2887, 5
        %v2890 = vsel %vm1569, %v2885, %v2889
        %v2891 = vshrl.u32 %v2515, 16
        %v2893 = vrot.slane %v2891, 4
        %v2894 = vor.u32 %v2893, %v2889
        %v2895 = vrot.slane %v2894, 4
        %v2897 = vshll.u32 %v2516, 16
        %v2899 = vrot.slane %v2897, 5
        %v2900 = vsel %vm1569, %v2895, %v2899
        %v2901 = vunpack.c.l.b16 %v2530
        %v2902 = vunpack.c.l.b16 %v2540
        %v2903 = vunpack.c.l.b16 %v2554
        %v2904 = vunpack.c.l.b16 %v2564
        %v2905 = vunpack.c.l.b16 %v2578
        %v2906 = vunpack.c.l.b16 %v2588
        %v2907 = vunpack.c.l.b16 %v2602
        %v2908 = vunpack.c.l.b16 %v2612
        %v2909 = vunpack.c.l.b16 %v2626
        %v2910 = vunpack.c.l.b16 %v2636
        %v2911 = vunpack.c.l.b16 %v2650
        %v2912 = vunpack.c.l.b16 %v2660
        %v2913 = vunpack.c.l.b16 %v2674
        %v2914 = vunpack.c.l.b16 %v2684
        %v2915 = vunpack.c.l.b16 %v2698
        %v2916 = vunpack.c.l.b16 %v2708
        %v2917 = vunpack.c.l.b16 %v2722
        %v2918 = vunpack.c.l.b16 %v2732
        %v2919 = vunpack.c.l.b16 %v2746
        %v2920 = vunpack.c.l.b16 %v2756
        %v2921 = vunpack.c.l.b16 %v2770
        %v2922 = vunpack.c.l.b16 %v2780
        %v2923 = vunpack.c.l.b16 %v2794
        %v2924 = vunpack.c.l.b16 %v2804
        %v2925 = vunpack.c.l.b16 %v2818
        %v2926 = vunpack.c.l.b16 %v2828
        %v2927 = vunpack.c.l.b16 %v2842
        %v2928 = vunpack.c.l.b16 %v2852
        %v2929 = vunpack.c.l.b16 %v2866
        %v2930 = vunpack.c.l.b16 %v2876
        %v2931 = vunpack.c.l.b16 %v2890
        %v2932 = vunpack.c.l.b16 %v2900
        %v2933 = vpack.c.b16 %v2902, %v2901
        %v2934 = vpack.c.b16 %v2904, %v2903
        %v2935 = vpack.c.b16 %v2906, %v2905
        %v2936 = vpack.c.b16 %v2908, %v2907
        %v2937 = vpack.c.b16 %v2910, %v2909
        %v2938 = vpack.c.b16 %v2912, %v2911
        %v2939 = vpack.c.b16 %v2914, %v2913
        %v2940 = vpack.c.b16 %v2916, %v2915
        %v2941 = vpack.c.b16 %v2918, %v2917
        %v2942 = vpack.c.b16 %v2920, %v2919
        %v2943 = vpack.c.b16 %v2922, %v2921
        %v2944 = vpack.c.b16 %v2924, %v2923
        %v2945 = vpack.c.b16 %v2926, %v2925
        %v2946 = vpack.c.b16 %v2928, %v2927
        %v2947 = vpack.c.b16 %v2930, %v2929
        %v2948 = vpack.c.b16 %v2932, %v2931
        %2965 = vst [vmem:[#allocation3 + $0x20] sm:$0xff] %v2933
        %2966 = vst [vmem:[#allocation3 + $0x68] sm:$0xff] %v2934
        %2967 = vst [vmem:[#allocation3 + $0xb0] sm:$0xff] %v2935
        %2968 = vst [vmem:[#allocation3 + $0xf8] sm:$0xff] %v2936
        %2969 = vst [vmem:[#allocation3 + $0x140] sm:$0xff] %v2937
        %2970 = vst [vmem:[#allocation3 + $0x188] sm:$0xff] %v2938
        %2971 = vst [vmem:[#allocation3 + $0x1d0] sm:$0xff] %v2939
        %2972 = vst [vmem:[#allocation3 + $0x218] sm:$0xff] %v2940
        %2973 = vst [vmem:[#allocation3 + $0x260] sm:$0xff] %v2941
        %2974 = vst [vmem:[#allocation3 + $0x2a8] sm:$0xff] %v2942
        %2975 = vst [vmem:[#allocation3 + $0x2f0] sm:$0xff] %v2943
        %2976 = vst [vmem:[#allocation3 + $0x338] sm:$0xff] %v2944
        %2977 = vst [vmem:[#allocation3 + $0x380] sm:$0xff] %v2945
        %2978 = vst [vmem:[#allocation3 + $0x3c8] sm:$0xff] %v2946
        %2979 = vst [vmem:[#allocation3 + $0x410] sm:$0xff] %v2947
        %2980 = vst [vmem:[#allocation3 + $0x458] sm:$0xff] %v2948
        %v2981 = vld [vmem:[%s741] sm:$0xe]
        %v2982 = vld [vmem:[%s741 + $0x4] sm:$0xf]
        %v2983 = vld [vmem:[%s741 + $0x8] sm:$0x1]
        %v2984 = vld [vmem:[%s741 + $0xc] sm:$0xe]
        %v2985 = vld [vmem:[%s741 + $0x10] sm:$0xf]
        %v2986 = vld [vmem:[%s741 + $0x14] sm:$0x1]
        %v2987 = vld [vmem:[%s741 + $0x18] sm:$0xe]
        %v2988 = vld [vmem:[%s741 + $0x1c] sm:$0xf]
        %v2989 = vld [vmem:[%s741 + $0x20] sm:$0x1]
        %v2990 = vld [vmem:[%s741 + $0x24] sm:$0xe]
        %v2991 = vld [vmem:[%s741 + $0x28] sm:$0xf]
        %v2992 = vld [vmem:[%s741 + $0x2c] sm:$0x1]
        %v2993 = vld [vmem:[%s741 + $0x30] sm:$0xe]
        %v2994 = vld [vmem:[%s741 + $0x34] sm:$0xf]
        %v2995 = vld [vmem:[%s741 + $0x38] sm:$0x1]
        %v2996 = vld [vmem:[%s741 + $0x3c] sm:$0xe]
        %v2997 = vld [vmem:[%s741 + $0x40] sm:$0xf]
        %v2998 = vld [vmem:[%s741 + $0x44] sm:$0x1]
        %v2999 = vld [vmem:[%s741 + $0x48] sm:$0xe]
        %v3000 = vld [vmem:[%s741 + $0x4c] sm:$0xf]
        %v3001 = vld [vmem:[%s741 + $0x50] sm:$0x1]
        %v3002 = vld [vmem:[%s741 + $0x54] sm:$0xe]
        %v3003 = vld [vmem:[%s741 + $0x58] sm:$0xf]
        %v3004 = vld [vmem:[%s741 + $0x5c] sm:$0x1]
        %v3005 = vld [vmem:[%s741 + $0x60] sm:$0xe]
        %v3006 = vld [vmem:[%s741 + $0x64] sm:$0xf]
        %v3007 = vld [vmem:[%s741 + $0x68] sm:$0x1]
        %v3008 = vld [vmem:[%s741 + $0x6c] sm:$0xe]
        %v3009 = vld [vmem:[%s741 + $0x70] sm:$0xf]
        %v3010 = vld [vmem:[%s741 + $0x74] sm:$0x1]
        %v3011 = vld [vmem:[%s741 + $0x78] sm:$0xe]
        %v3012 = vld [vmem:[%s741 + $0x7c] sm:$0xf]
        %v3013 = vld [vmem:[%s741 + $0x80] sm:$0x1]
        %v3014 = vld [vmem:[%s741 + $0x84] sm:$0xe]
        %v3015 = vld [vmem:[%s741 + $0x88] sm:$0xf]
        %v3016 = vld [vmem:[%s741 + $0x8c] sm:$0x1]
        %v3017 = vld [vmem:[%s741 + $0x90] sm:$0xe]
        %v3018 = vld [vmem:[%s741 + $0x94] sm:$0xf]
        %v3019 = vld [vmem:[%s741 + $0x98] sm:$0x1]
        %v3020 = vld [vmem:[%s741 + $0x9c] sm:$0xe]
        %v3021 = vld [vmem:[%s741 + $0xa0] sm:$0xf]
        %v3022 = vld [vmem:[%s741 + $0xa4] sm:$0x1]
        %v3023 = vld [vmem:[%s741 + $0xa8] sm:$0xe]
        %v3024 = vld [vmem:[%s741 + $0xac] sm:$0xf]
        %v3025 = vld [vmem:[%s741 + $0xb0] sm:$0x1]
        %v3026 = vld [vmem:[%s741 + $0xb4] sm:$0xe]
        %v3027 = vld [vmem:[%s741 + $0xb8] sm:$0xf]
        %v3028 = vld [vmem:[%s741 + $0xbc] sm:$0x1]
        %v3077 = vrot.slane %v2981, 5
        %v3078 = vrot.slane %v3077, 4
        %v3079 = vrot.slane %v2982, 5
        %v3080 = vsel %vm2132, %v3078, %v3079
        %v3081 = vrot.slane %v3079, 4
        %v3082 = vrot.slane %v2983, 5
        %v3083 = vsel %vm2132, %v3081, %v3082
        %v3084 = vrot.slane %v2984, 5
        %v3085 = vrot.slane %v3084, 4
        %v3086 = vrot.slane %v2985, 5
        %v3087 = vsel %vm2132, %v3085, %v3086
        %v3088 = vrot.slane %v3086, 4
        %v3089 = vrot.slane %v2986, 5
        %v3090 = vsel %vm2132, %v3088, %v3089
        %v3091 = vrot.slane %v2987, 5
        %v3092 = vrot.slane %v3091, 4
        %v3093 = vrot.slane %v2988, 5
        %v3094 = vsel %vm2132, %v3092, %v3093
        %v3095 = vrot.slane %v3093, 4
        %v3096 = vrot.slane %v2989, 5
        %v3097 = vsel %vm2132, %v3095, %v3096
        %v3098 = vrot.slane %v2990, 5
        %v3099 = vrot.slane %v3098, 4
        %v3100 = vrot.slane %v2991, 5
        %v3101 = vsel %vm2132, %v3099, %v3100
        %v3102 = vrot.slane %v3100, 4
        %v3103 = vrot.slane %v2992, 5
        %v3104 = vsel %vm2132, %v3102, %v3103
        %v3105 = vrot.slane %v2993, 5
        %v3106 = vrot.slane %v3105, 4
        %v3107 = vrot.slane %v2994, 5
        %v3108 = vsel %vm2132, %v3106, %v3107
        %v3109 = vrot.slane %v3107, 4
        %v3110 = vrot.slane %v2995, 5
        %v3111 = vsel %vm2132, %v3109, %v3110
        %v3112 = vrot.slane %v2996, 5
        %v3113 = vrot.slane %v3112, 4
        %v3114 = vrot.slane %v2997, 5
        %v3115 = vsel %vm2132, %v3113, %v3114
        %v3116 = vrot.slane %v3114, 4
        %v3117 = vrot.slane %v2998, 5
        %v3118 = vsel %vm2132, %v3116, %v3117
        %v3119 = vrot.slane %v2999, 5
        %v3120 = vrot.slane %v3119, 4
        %v3121 = vrot.slane %v3000, 5
        %v3122 = vsel %vm2132, %v3120, %v3121
        %v3123 = vrot.slane %v3121, 4
        %v3124 = vrot.slane %v3001, 5
        %v3125 = vsel %vm2132, %v3123, %v3124
        %v3126 = vrot.slane %v3002, 5
        %v3127 = vrot.slane %v3126, 4
        %v3128 = vrot.slane %v3003, 5
        %v3129 = vsel %vm2132, %v3127, %v3128
        %v3130 = vrot.slane %v3128, 4
        %v3131 = vrot.slane %v3004, 5
        %v3132 = vsel %vm2132, %v3130, %v3131
        %v3133 = vrot.slane %v3005, 5
        %v3134 = vrot.slane %v3133, 4
        %v3135 = vrot.slane %v3006, 5
        %v3136 = vsel %vm2132, %v3134, %v3135
        %v3137 = vrot.slane %v3135, 4
        %v3138 = vrot.slane %v3007, 5
        %v3139 = vsel %vm2132, %v3137, %v3138
        %v3140 = vrot.slane %v3008, 5
        %v3141 = vrot.slane %v3140, 4
        %v3142 = vrot.slane %v3009, 5
        %v3143 = vsel %vm2132, %v3141, %v3142
        %v3144 = vrot.slane %v3142, 4
        %v3145 = vrot.slane %v3010, 5
        %v3146 = vsel %vm2132, %v3144, %v3145
        %v3147 = vrot.slane %v3011, 5
        %v3148 = vrot.slane %v3147, 4
        %v3149 = vrot.slane %v3012, 5
        %v3150 = vsel %vm2132, %v3148, %v3149
        %v3151 = vrot.slane %v3149, 4
        %v3152 = vrot.slane %v3013, 5
        %v3153 = vsel %vm2132, %v3151, %v3152
        %v3154 = vrot.slane %v3014, 5
        %v3155 = vrot.slane %v3154, 4
        %v3156 = vrot.slane %v3015, 5
        %v3157 = vsel %vm2132, %v3155, %v3156
        %v3158 = vrot.slane %v3156, 4
        %v3159 = vrot.slane %v3016, 5
        %v3160 = vsel %vm2132, %v3158, %v3159
        %v3161 = vrot.slane %v3017, 5
        %v3162 = vrot.slane %v3161, 4
        %v3163 = vrot.slane %v3018, 5
        %v3164 = vsel %vm2132, %v3162, %v3163
        %v3165 = vrot.slane %v3163, 4
        %v3166 = vrot.slane %v3019, 5
        %v3167 = vsel %vm2132, %v3165, %v3166
        %v3168 = vrot.slane %v3020, 5
        %v3169 = vrot.slane %v3168, 4
        %v3170 = vrot.slane %v3021, 5
        %v3171 = vsel %vm2132, %v3169, %v3170
        %v3172 = vrot.slane %v3170, 4
        %v3173 = vrot.slane %v3022, 5
        %v3174 = vsel %vm2132, %v3172, %v3173
        %v3175 = vrot.slane %v3023, 5
        %v3176 = vrot.slane %v3175, 4
        %v3177 = vrot.slane %v3024, 5
        %v3178 = vsel %vm2132, %v3176, %v3177
        %v3179 = vrot.slane %v3177, 4
        %v3180 = vrot.slane %v3025, 5
        %v3181 = vsel %vm2132, %v3179, %v3180
        %v3182 = vrot.slane %v3026, 5
        %v3183 = vrot.slane %v3182, 4
        %v3184 = vrot.slane %v3027, 5
        %v3185 = vsel %vm2132, %v3183, %v3184
        %v3186 = vrot.slane %v3184, 4
        %v3187 = vrot.slane %v3028, 5
        %v3188 = vsel %vm2132, %v3186, %v3187
        %v3189 = vunpack.c.l.b16 %v3080
        %v3190 = vunpack.c.l.b16 %v3083
        %v3191 = vunpack.c.l.b16 %v3087
        %v3192 = vunpack.c.l.b16 %v3090
        %v3193 = vunpack.c.l.b16 %v3094
        %v3194 = vunpack.c.l.b16 %v3097
        %v3195 = vunpack.c.l.b16 %v3101
        %v3196 = vunpack.c.l.b16 %v3104
        %v3197 = vunpack.c.l.b16 %v3108
        %v3198 = vunpack.c.l.b16 %v3111
        %v3199 = vunpack.c.l.b16 %v3115
        %v3200 = vunpack.c.l.b16 %v3118
        %v3201 = vunpack.c.l.b16 %v3122
        %v3202 = vunpack.c.l.b16 %v3125
        %v3203 = vunpack.c.l.b16 %v3129
        %v3204 = vunpack.c.l.b16 %v3132
        %v3205 = vunpack.c.l.b16 %v3136
        %v3206 = vunpack.c.l.b16 %v3139
        %v3207 = vunpack.c.l.b16 %v3143
        %v3208 = vunpack.c.l.b16 %v3146
        %v3209 = vunpack.c.l.b16 %v3150
        %v3210 = vunpack.c.l.b16 %v3153
        %v3211 = vunpack.c.l.b16 %v3157
        %v3212 = vunpack.c.l.b16 %v3160
        %v3213 = vunpack.c.l.b16 %v3164
        %v3214 = vunpack.c.l.b16 %v3167
        %v3215 = vunpack.c.l.b16 %v3171
        %v3216 = vunpack.c.l.b16 %v3174
        %v3217 = vunpack.c.l.b16 %v3178
        %v3218 = vunpack.c.l.b16 %v3181
        %v3219 = vunpack.c.l.b16 %v3185
        %v3220 = vunpack.c.l.b16 %v3188
        %v3221 = vpack.c.b16 %v3190, %v3189
        %v3222 = vpack.c.b16 %v3192, %v3191
        %v3223 = vpack.c.b16 %v3194, %v3193
        %v3224 = vpack.c.b16 %v3196, %v3195
        %v3225 = vpack.c.b16 %v3198, %v3197
        %v3226 = vpack.c.b16 %v3200, %v3199
        %v3227 = vpack.c.b16 %v3202, %v3201
        %v3228 = vpack.c.b16 %v3204, %v3203
        %v3229 = vpack.c.b16 %v3206, %v3205
        %v3230 = vpack.c.b16 %v3208, %v3207
        %v3231 = vpack.c.b16 %v3210, %v3209
        %v3232 = vpack.c.b16 %v3212, %v3211
        %v3233 = vpack.c.b16 %v3214, %v3213
        %v3234 = vpack.c.b16 %v3216, %v3215
        %v3235 = vpack.c.b16 %v3218, %v3217
        %v3236 = vpack.c.b16 %v3220, %v3219
        %3253 = vst [vmem:[#allocation3 + $0x28] sm:$0xff] %v3221
        %3254 = vst [vmem:[#allocation3 + $0x70] sm:$0xff] %v3222
        %3255 = vst [vmem:[#allocation3 + $0xb8] sm:$0xff] %v3223
        %3256 = vst [vmem:[#allocation3 + $0x100] sm:$0xff] %v3224
        %3257 = vst [vmem:[#allocation3 + $0x148] sm:$0xff] %v3225
        %3258 = vst [vmem:[#allocation3 + $0x190] sm:$0xff] %v3226
        %3259 = vst [vmem:[#allocation3 + $0x1d8] sm:$0xff] %v3227
        %3260 = vst [vmem:[#allocation3 + $0x220] sm:$0xff] %v3228
        %3261 = vst [vmem:[#allocation3 + $0x268] sm:$0xff] %v3229
        %3262 = vst [vmem:[#allocation3 + $0x2b0] sm:$0xff] %v3230
        %3263 = vst [vmem:[#allocation3 + $0x2f8] sm:$0xff] %v3231
        %3264 = vst [vmem:[#allocation3 + $0x340] sm:$0xff] %v3232
        %3265 = vst [vmem:[#allocation3 + $0x388] sm:$0xff] %v3233
        %3266 = vst [vmem:[#allocation3 + $0x3d0] sm:$0xff] %v3234
        %3267 = vst [vmem:[#allocation3 + $0x418] sm:$0xff] %v3235
        %3268 = vst [vmem:[#allocation3 + $0x460] sm:$0xff] %v3236
        %s3269 = scalar_lea.vmem [#allocation2], 24
        %v3270 = vld [vmem:[%s3269] sm:$0xf]
        %v3271 = vld [vmem:[%s3269 + $0x4] sm:$0xf]
        %v3272 = vld [vmem:[%s3269 + $0xc] sm:$0xf]
        %v3273 = vld [vmem:[%s3269 + $0x10] sm:$0xf]
        %v3274 = vld [vmem:[%s3269 + $0x18] sm:$0xf]
        %v3275 = vld [vmem:[%s3269 + $0x1c] sm:$0xf]
        %v3276 = vld [vmem:[%s3269 + $0x24] sm:$0xf]
        %v3277 = vld [vmem:[%s3269 + $0x28] sm:$0xf]
        %v3278 = vld [vmem:[%s3269 + $0x30] sm:$0xf]
        %v3279 = vld [vmem:[%s3269 + $0x34] sm:$0xf]
        %v3280 = vld [vmem:[%s3269 + $0x3c] sm:$0xf]
        %v3281 = vld [vmem:[%s3269 + $0x40] sm:$0xf]
        %v3282 = vld [vmem:[%s3269 + $0x48] sm:$0xf]
        %v3283 = vld [vmem:[%s3269 + $0x4c] sm:$0xf]
        %v3284 = vld [vmem:[%s3269 + $0x54] sm:$0xf]
        %v3285 = vld [vmem:[%s3269 + $0x58] sm:$0xf]
        %v3286 = vld [vmem:[%s3269 + $0x60] sm:$0xf]
        %v3287 = vld [vmem:[%s3269 + $0x64] sm:$0xf]
        %v3288 = vld [vmem:[%s3269 + $0x6c] sm:$0xf]
        %v3289 = vld [vmem:[%s3269 + $0x70] sm:$0xf]
        %v3290 = vld [vmem:[%s3269 + $0x78] sm:$0xf]
        %v3291 = vld [vmem:[%s3269 + $0x7c] sm:$0xf]
        %v3292 = vld [vmem:[%s3269 + $0x84] sm:$0xf]
        %v3293 = vld [vmem:[%s3269 + $0x88] sm:$0xf]
        %v3294 = vld [vmem:[%s3269 + $0x90] sm:$0xf]
        %v3295 = vld [vmem:[%s3269 + $0x94] sm:$0xf]
        %v3296 = vld [vmem:[%s3269 + $0x9c] sm:$0xf]
        %v3297 = vld [vmem:[%s3269 + $0xa0] sm:$0xf]
        %v3298 = vld [vmem:[%s3269 + $0xa8] sm:$0xf]
        %v3299 = vld [vmem:[%s3269 + $0xac] sm:$0xf]
        %v3300 = vld [vmem:[%s3269 + $0xb4] sm:$0xf]
        %v3301 = vld [vmem:[%s3269 + $0xb8] sm:$0xf]
        %v3334 = vunpack.c.l.b16 %v3270
        %v3335 = vunpack.c.l.b16 %v3271
        %v3336 = vunpack.c.l.b16 %v3272
        %v3337 = vunpack.c.l.b16 %v3273
        %v3338 = vunpack.c.l.b16 %v3274
        %v3339 = vunpack.c.l.b16 %v3275
        %v3340 = vunpack.c.l.b16 %v3276
        %v3341 = vunpack.c.l.b16 %v3277
        %v3342 = vunpack.c.l.b16 %v3278
        %v3343 = vunpack.c.l.b16 %v3279
        %v3344 = vunpack.c.l.b16 %v3280
        %v3345 = vunpack.c.l.b16 %v3281
        %v3346 = vunpack.c.l.b16 %v3282
        %v3347 = vunpack.c.l.b16 %v3283
        %v3348 = vunpack.c.l.b16 %v3284
        %v3349 = vunpack.c.l.b16 %v3285
        %v3350 = vunpack.c.l.b16 %v3286
        %v3351 = vunpack.c.l.b16 %v3287
        %v3352 = vunpack.c.l.b16 %v3288
        %v3353 = vunpack.c.l.b16 %v3289
        %v3354 = vunpack.c.l.b16 %v3290
        %v3355 = vunpack.c.l.b16 %v3291
        %v3356 = vunpack.c.l.b16 %v3292
        %v3357 = vunpack.c.l.b16 %v3293
        %v3358 = vunpack.c.l.b16 %v3294
        %v3359 = vunpack.c.l.b16 %v3295
        %v3360 = vunpack.c.l.b16 %v3296
        %v3361 = vunpack.c.l.b16 %v3297
        %v3362 = vunpack.c.l.b16 %v3298
        %v3363 = vunpack.c.l.b16 %v3299
        %v3364 = vunpack.c.l.b16 %v3300
        %v3365 = vunpack.c.l.b16 %v3301
        %v3366 = vpack.c.b16 %v3335, %v3334
        %v3367 = vpack.c.b16 %v3337, %v3336
        %v3368 = vpack.c.b16 %v3339, %v3338
        %v3369 = vpack.c.b16 %v3341, %v3340
        %v3370 = vpack.c.b16 %v3343, %v3342
        %v3371 = vpack.c.b16 %v3345, %v3344
        %v3372 = vpack.c.b16 %v3347, %v3346
        %v3373 = vpack.c.b16 %v3349, %v3348
        %v3374 = vpack.c.b16 %v3351, %v3350
        %v3375 = vpack.c.b16 %v3353, %v3352
        %v3376 = vpack.c.b16 %v3355, %v3354
        %v3377 = vpack.c.b16 %v3357, %v3356
        %v3378 = vpack.c.b16 %v3359, %v3358
        %v3379 = vpack.c.b16 %v3361, %v3360
        %v3380 = vpack.c.b16 %v3363, %v3362
        %v3381 = vpack.c.b16 %v3365, %v3364
        %3398 = vst [vmem:[#allocation3 + $0x30] sm:$0xff] %v3366
        %3399 = vst [vmem:[#allocation3 + $0x78] sm:$0xff] %v3367
        %3400 = vst [vmem:[#allocation3 + $0xc0] sm:$0xff] %v3368
        %3401 = vst [vmem:[#allocation3 + $0x108] sm:$0xff] %v3369
        %3402 = vst [vmem:[#allocation3 + $0x150] sm:$0xff] %v3370
        %3403 = vst [vmem:[#allocation3 + $0x198] sm:$0xff] %v3371
        %3404 = vst [vmem:[#allocation3 + $0x1e0] sm:$0xff] %v3372
        %3405 = vst [vmem:[#allocation3 + $0x228] sm:$0xff] %v3373
        %3406 = vst [vmem:[#allocation3 + $0x270] sm:$0xff] %v3374
        %3407 = vst [vmem:[#allocation3 + $0x2b8] sm:$0xff] %v3375
        %3408 = vst [vmem:[#allocation3 + $0x300] sm:$0xff] %v3376
        %3409 = vst [vmem:[#allocation3 + $0x348] sm:$0xff] %v3377
        %3410 = vst [vmem:[#allocation3 + $0x390] sm:$0xff] %v3378
        %3411 = vst [vmem:[#allocation3 + $0x3d8] sm:$0xff] %v3379
        %3412 = vst [vmem:[#allocation3 + $0x420] sm:$0xff] %v3380
        %3413 = vst [vmem:[#allocation3 + $0x468] sm:$0xff] %v3381
        %v3414 = vld [vmem:[%s3269] sm:$0xf]
        %v3415 = vld [vmem:[%s3269 + $0x4] sm:$0xf]
        %v3416 = vld [vmem:[%s3269 + $0x8] sm:$0x1]
        %v3417 = vld [vmem:[%s3269 + $0xc] sm:$0xf]
        %v3418 = vld [vmem:[%s3269 + $0x10] sm:$0xf]
        %v3419 = vld [vmem:[%s3269 + $0x14] sm:$0x1]
        %v3420 = vld [vmem:[%s3269 + $0x18] sm:$0xf]
        %v3421 = vld [vmem:[%s3269 + $0x1c] sm:$0xf]
        %v3422 = vld [vmem:[%s3269 + $0x20] sm:$0x1]
        %v3423 = vld [vmem:[%s3269 + $0x24] sm:$0xf]
        %v3424 = vld [vmem:[%s3269 + $0x28] sm:$0xf]
        %v3425 = vld [vmem:[%s3269 + $0x2c] sm:$0x1]
        %v3426 = vld [vmem:[%s3269 + $0x30] sm:$0xf]
        %v3427 = vld [vmem:[%s3269 + $0x34] sm:$0xf]
        %v3428 = vld [vmem:[%s3269 + $0x38] sm:$0x1]
        %v3429 = vld [vmem:[%s3269 + $0x3c] sm:$0xf]
        %v3430 = vld [vmem:[%s3269 + $0x40] sm:$0xf]
        %v3431 = vld [vmem:[%s3269 + $0x44] sm:$0x1]
        %v3432 = vld [vmem:[%s3269 + $0x48] sm:$0xf]
        %v3433 = vld [vmem:[%s3269 + $0x4c] sm:$0xf]
        %v3434 = vld [vmem:[%s3269 + $0x50] sm:$0x1]
        %v3435 = vld [vmem:[%s3269 + $0x54] sm:$0xf]
        %v3436 = vld [vmem:[%s3269 + $0x58] sm:$0xf]
        %v3437 = vld [vmem:[%s3269 + $0x5c] sm:$0x1]
        %v3438 = vld [vmem:[%s3269 + $0x60] sm:$0xf]
        %v3439 = vld [vmem:[%s3269 + $0x64] sm:$0xf]
        %v3440 = vld [vmem:[%s3269 + $0x68] sm:$0x1]
        %v3441 = vld [vmem:[%s3269 + $0x6c] sm:$0xf]
        %v3442 = vld [vmem:[%s3269 + $0x70] sm:$0xf]
        %v3443 = vld [vmem:[%s3269 + $0x74] sm:$0x1]
        %v3444 = vld [vmem:[%s3269 + $0x78] sm:$0xf]
        %v3445 = vld [vmem:[%s3269 + $0x7c] sm:$0xf]
        %v3446 = vld [vmem:[%s3269 + $0x80] sm:$0x1]
        %v3447 = vld [vmem:[%s3269 + $0x84] sm:$0xf]
        %v3448 = vld [vmem:[%s3269 + $0x88] sm:$0xf]
        %v3449 = vld [vmem:[%s3269 + $0x8c] sm:$0x1]
        %v3450 = vld [vmem:[%s3269 + $0x90] sm:$0xf]
        %v3451 = vld [vmem:[%s3269 + $0x94] sm:$0xf]
        %v3452 = vld [vmem:[%s3269 + $0x98] sm:$0x1]
        %v3453 = vld [vmem:[%s3269 + $0x9c] sm:$0xf]
        %v3454 = vld [vmem:[%s3269 + $0xa0] sm:$0xf]
        %v3455 = vld [vmem:[%s3269 + $0xa4] sm:$0x1]
        %v3456 = vld [vmem:[%s3269 + $0xa8] sm:$0xf]
        %v3457 = vld [vmem:[%s3269 + $0xac] sm:$0xf]
        %v3458 = vld [vmem:[%s3269 + $0xb0] sm:$0x1]
        %v3459 = vld [vmem:[%s3269 + $0xb4] sm:$0xf]
        %v3460 = vld [vmem:[%s3269 + $0xb8] sm:$0xf]
        %v3461 = vld [vmem:[%s3269 + $0xbc] sm:$0x1]
        %v3463 = vshrl.u32 %v3414, 16
        %v3465 = vrot.slane %v3463, 4
        %v3466 = vshll.u32 %v3414, 16
        %v3468 = vrot.slane %v3466, 5
        %v3469 = vor.u32 %v3465, %v3468
        %v3470 = vrot.slane %v3469, 4
        %v3472 = vshll.u32 %v3415, 16
        %v3474 = vrot.slane %v3472, 5
        %v3475 = vsel %vm1569, %v3470, %v3474
        %v3476 = vshrl.u32 %v3415, 16
        %v3478 = vrot.slane %v3476, 4
        %v3479 = vor.u32 %v3478, %v3474
        %v3480 = vrot.slane %v3479, 4
        %v3482 = vshll.u32 %v3416, 16
        %v3484 = vrot.slane %v3482, 5
        %v3485 = vsel %vm1569, %v3480, %v3484
        %v3487 = vshrl.u32 %v3417, 16
        %v3489 = vrot.slane %v3487, 4
        %v3490 = vshll.u32 %v3417, 16
        %v3492 = vrot.slane %v3490, 5
        %v3493 = vor.u32 %v3489, %v3492
        %v3494 = vrot.slane %v3493, 4
        %v3496 = vshll.u32 %v3418, 16
        %v3498 = vrot.slane %v3496, 5
        %v3499 = vsel %vm1569, %v3494, %v3498
        %v3500 = vshrl.u32 %v3418, 16
        %v3502 = vrot.slane %v3500, 4
        %v3503 = vor.u32 %v3502, %v3498
        %v3504 = vrot.slane %v3503, 4
        %v3506 = vshll.u32 %v3419, 16
        %v3508 = vrot.slane %v3506, 5
        %v3509 = vsel %vm1569, %v3504, %v3508
        %v3511 = vshrl.u32 %v3420, 16
        %v3513 = vrot.slane %v3511, 4
        %v3514 = vshll.u32 %v3420, 16
        %v3516 = vrot.slane %v3514, 5
        %v3517 = vor.u32 %v3513, %v3516
        %v3518 = vrot.slane %v3517, 4
        %v3520 = vshll.u32 %v3421, 16
        %v3522 = vrot.slane %v3520, 5
        %v3523 = vsel %vm1569, %v3518, %v3522
        %v3524 = vshrl.u32 %v3421, 16
        %v3526 = vrot.slane %v3524, 4
        %v3527 = vor.u32 %v3526, %v3522
        %v3528 = vrot.slane %v3527, 4
        %v3530 = vshll.u32 %v3422, 16
        %v3532 = vrot.slane %v3530, 5
        %v3533 = vsel %vm1569, %v3528, %v3532
        %v3535 = vshrl.u32 %v3423, 16
        %v3537 = vrot.slane %v3535, 4
        %v3538 = vshll.u32 %v3423, 16
        %v3540 = vrot.slane %v3538, 5
        %v3541 = vor.u32 %v3537, %v3540
        %v3542 = vrot.slane %v3541, 4
        %v3544 = vshll.u32 %v3424, 16
        %v3546 = vrot.slane %v3544, 5
        %v3547 = vsel %vm1569, %v3542, %v3546
        %v3548 = vshrl.u32 %v3424, 16
        %v3550 = vrot.slane %v3548, 4
        %v3551 = vor.u32 %v3550, %v3546
        %v3552 = vrot.slane %v3551, 4
        %v3554 = vshll.u32 %v3425, 16
        %v3556 = vrot.slane %v3554, 5
        %v3557 = vsel %vm1569, %v3552, %v3556
        %v3559 = vshrl.u32 %v3426, 16
        %v3561 = vrot.slane %v3559, 4
        %v3562 = vshll.u32 %v3426, 16
        %v3564 = vrot.slane %v3562, 5
        %v3565 = vor.u32 %v3561, %v3564
        %v3566 = vrot.slane %v3565, 4
        %v3568 = vshll.u32 %v3427, 16
        %v3570 = vrot.slane %v3568, 5
        %v3571 = vsel %vm1569, %v3566, %v3570
        %v3572 = vshrl.u32 %v3427, 16
        %v3574 = vrot.slane %v3572, 4
        %v3575 = vor.u32 %v3574, %v3570
        %v3576 = vrot.slane %v3575, 4
        %v3578 = vshll.u32 %v3428, 16
        %v3580 = vrot.slane %v3578, 5
        %v3581 = vsel %vm1569, %v3576, %v3580
        %v3583 = vshrl.u32 %v3429, 16
        %v3585 = vrot.slane %v3583, 4
        %v3586 = vshll.u32 %v3429, 16
        %v3588 = vrot.slane %v3586, 5
        %v3589 = vor.u32 %v3585, %v3588
        %v3590 = vrot.slane %v3589, 4
        %v3592 = vshll.u32 %v3430, 16
        %v3594 = vrot.slane %v3592, 5
        %v3595 = vsel %vm1569, %v3590, %v3594
        %v3596 = vshrl.u32 %v3430, 16
        %v3598 = vrot.slane %v3596, 4
        %v3599 = vor.u32 %v3598, %v3594
        %v3600 = vrot.slane %v3599, 4
        %v3602 = vshll.u32 %v3431, 16
        %v3604 = vrot.slane %v3602, 5
        %v3605 = vsel %vm1569, %v3600, %v3604
        %v3607 = vshrl.u32 %v3432, 16
        %v3609 = vrot.slane %v3607, 4
        %v3610 = vshll.u32 %v3432, 16
        %v3612 = vrot.slane %v3610, 5
        %v3613 = vor.u32 %v3609, %v3612
        %v3614 = vrot.slane %v3613, 4
        %v3616 = vshll.u32 %v3433, 16
        %v3618 = vrot.slane %v3616, 5
        %v3619 = vsel %vm1569, %v3614, %v3618
        %v3620 = vshrl.u32 %v3433, 16
        %v3622 = vrot.slane %v3620, 4
        %v3623 = vor.u32 %v3622, %v3618
        %v3624 = vrot.slane %v3623, 4
        %v3626 = vshll.u32 %v3434, 16
        %v3628 = vrot.slane %v3626, 5
        %v3629 = vsel %vm1569, %v3624, %v3628
        %v3631 = vshrl.u32 %v3435, 16
        %v3633 = vrot.slane %v3631, 4
        %v3634 = vshll.u32 %v3435, 16
        %v3636 = vrot.slane %v3634, 5
        %v3637 = vor.u32 %v3633, %v3636
        %v3638 = vrot.slane %v3637, 4
        %v3640 = vshll.u32 %v3436, 16
        %v3642 = vrot.slane %v3640, 5
        %v3643 = vsel %vm1569, %v3638, %v3642
        %v3644 = vshrl.u32 %v3436, 16
        %v3646 = vrot.slane %v3644, 4
        %v3647 = vor.u32 %v3646, %v3642
        %v3648 = vrot.slane %v3647, 4
        %v3650 = vshll.u32 %v3437, 16
        %v3652 = vrot.slane %v3650, 5
        %v3653 = vsel %vm1569, %v3648, %v3652
        %v3655 = vshrl.u32 %v3438, 16
        %v3657 = vrot.slane %v3655, 4
        %v3658 = vshll.u32 %v3438, 16
        %v3660 = vrot.slane %v3658, 5
        %v3661 = vor.u32 %v3657, %v3660
        %v3662 = vrot.slane %v3661, 4
        %v3664 = vshll.u32 %v3439, 16
        %v3666 = vrot.slane %v3664, 5
        %v3667 = vsel %vm1569, %v3662, %v3666
        %v3668 = vshrl.u32 %v3439, 16
        %v3670 = vrot.slane %v3668, 4
        %v3671 = vor.u32 %v3670, %v3666
        %v3672 = vrot.slane %v3671, 4
        %v3674 = vshll.u32 %v3440, 16
        %v3676 = vrot.slane %v3674, 5
        %v3677 = vsel %vm1569, %v3672, %v3676
        %v3679 = vshrl.u32 %v3441, 16
        %v3681 = vrot.slane %v3679, 4
        %v3682 = vshll.u32 %v3441, 16
        %v3684 = vrot.slane %v3682, 5
        %v3685 = vor.u32 %v3681, %v3684
        %v3686 = vrot.slane %v3685, 4
        %v3688 = vshll.u32 %v3442, 16
        %v3690 = vrot.slane %v3688, 5
        %v3691 = vsel %vm1569, %v3686, %v3690
        %v3692 = vshrl.u32 %v3442, 16
        %v3694 = vrot.slane %v3692, 4
        %v3695 = vor.u32 %v3694, %v3690
        %v3696 = vrot.slane %v3695, 4
        %v3698 = vshll.u32 %v3443, 16
        %v3700 = vrot.slane %v3698, 5
        %v3701 = vsel %vm1569, %v3696, %v3700
        %v3703 = vshrl.u32 %v3444, 16
        %v3705 = vrot.slane %v3703, 4
        %v3706 = vshll.u32 %v3444, 16
        %v3708 = vrot.slane %v3706, 5
        %v3709 = vor.u32 %v3705, %v3708
        %v3710 = vrot.slane %v3709, 4
        %v3712 = vshll.u32 %v3445, 16
        %v3714 = vrot.slane %v3712, 5
        %v3715 = vsel %vm1569, %v3710, %v3714
        %v3716 = vshrl.u32 %v3445, 16
        %v3718 = vrot.slane %v3716, 4
        %v3719 = vor.u32 %v3718, %v3714
        %v3720 = vrot.slane %v3719, 4
        %v3722 = vshll.u32 %v3446, 16
        %v3724 = vrot.slane %v3722, 5
        %v3725 = vsel %vm1569, %v3720, %v3724
        %v3727 = vshrl.u32 %v3447, 16
        %v3729 = vrot.slane %v3727, 4
        %v3730 = vshll.u32 %v3447, 16
        %v3732 = vrot.slane %v3730, 5
        %v3733 = vor.u32 %v3729, %v3732
        %v3734 = vrot.slane %v3733, 4
        %v3736 = vshll.u32 %v3448, 16
        %v3738 = vrot.slane %v3736, 5
        %v3739 = vsel %vm1569, %v3734, %v3738
        %v3740 = vshrl.u32 %v3448, 16
        %v3742 = vrot.slane %v3740, 4
        %v3743 = vor.u32 %v3742, %v3738
        %v3744 = vrot.slane %v3743, 4
        %v3746 = vshll.u32 %v3449, 16
        %v3748 = vrot.slane %v3746, 5
        %v3749 = vsel %vm1569, %v3744, %v3748
        %v3751 = vshrl.u32 %v3450, 16
        %v3753 = vrot.slane %v3751, 4
        %v3754 = vshll.u32 %v3450, 16
        %v3756 = vrot.slane %v3754, 5
        %v3757 = vor.u32 %v3753, %v3756
        %v3758 = vrot.slane %v3757, 4
        %v3760 = vshll.u32 %v3451, 16
        %v3762 = vrot.slane %v3760, 5
        %v3763 = vsel %vm1569, %v3758, %v3762
        %v3764 = vshrl.u32 %v3451, 16
        %v3766 = vrot.slane %v3764, 4
        %v3767 = vor.u32 %v3766, %v3762
        %v3768 = vrot.slane %v3767, 4
        %v3770 = vshll.u32 %v3452, 16
        %v3772 = vrot.slane %v3770, 5
        %v3773 = vsel %vm1569, %v3768, %v3772
        %v3775 = vshrl.u32 %v3453, 16
        %v3777 = vrot.slane %v3775, 4
        %v3778 = vshll.u32 %v3453, 16
        %v3780 = vrot.slane %v3778, 5
        %v3781 = vor.u32 %v3777, %v3780
        %v3782 = vrot.slane %v3781, 4
        %v3784 = vshll.u32 %v3454, 16
        %v3786 = vrot.slane %v3784, 5
        %v3787 = vsel %vm1569, %v3782, %v3786
        %v3788 = vshrl.u32 %v3454, 16
        %v3790 = vrot.slane %v3788, 4
        %v3791 = vor.u32 %v3790, %v3786
        %v3792 = vrot.slane %v3791, 4
        %v3794 = vshll.u32 %v3455, 16
        %v3796 = vrot.slane %v3794, 5
        %v3797 = vsel %vm1569, %v3792, %v3796
        %v3799 = vshrl.u32 %v3456, 16
        %v3801 = vrot.slane %v3799, 4
        %v3802 = vshll.u32 %v3456, 16
        %v3804 = vrot.slane %v3802, 5
        %v3805 = vor.u32 %v3801, %v3804
        %v3806 = vrot.slane %v3805, 4
        %v3808 = vshll.u32 %v3457, 16
        %v3810 = vrot.slane %v3808, 5
        %v3811 = vsel %vm1569, %v3806, %v3810
        %v3812 = vshrl.u32 %v3457, 16
        %v3814 = vrot.slane %v3812, 4
        %v3815 = vor.u32 %v3814, %v3810
        %v3816 = vrot.slane %v3815, 4
        %v3818 = vshll.u32 %v3458, 16
        %v3820 = vrot.slane %v3818, 5
        %v3821 = vsel %vm1569, %v3816, %v3820
        %v3823 = vshrl.u32 %v3459, 16
        %v3825 = vrot.slane %v3823, 4
        %v3826 = vshll.u32 %v3459, 16
        %v3828 = vrot.slane %v3826, 5
        %v3829 = vor.u32 %v3825, %v3828
        %v3830 = vrot.slane %v3829, 4
        %v3832 = vshll.u32 %v3460, 16
        %v3834 = vrot.slane %v3832, 5
        %v3835 = vsel %vm1569, %v3830, %v3834
        %v3836 = vshrl.u32 %v3460, 16
        %v3838 = vrot.slane %v3836, 4
        %v3839 = vor.u32 %v3838, %v3834
        %v3840 = vrot.slane %v3839, 4
        %v3842 = vshll.u32 %v3461, 16
        %v3844 = vrot.slane %v3842, 5
        %v3845 = vsel %vm1569, %v3840, %v3844
        %v3846 = vunpack.c.l.b16 %v3475
        %v3847 = vunpack.c.l.b16 %v3485
        %v3848 = vunpack.c.l.b16 %v3499
        %v3849 = vunpack.c.l.b16 %v3509
        %v3850 = vunpack.c.l.b16 %v3523
        %v3851 = vunpack.c.l.b16 %v3533
        %v3852 = vunpack.c.l.b16 %v3547
        %v3853 = vunpack.c.l.b16 %v3557
        %v3854 = vunpack.c.l.b16 %v3571
        %v3855 = vunpack.c.l.b16 %v3581
        %v3856 = vunpack.c.l.b16 %v3595
        %v3857 = vunpack.c.l.b16 %v3605
        %v3858 = vunpack.c.l.b16 %v3619
        %v3859 = vunpack.c.l.b16 %v3629
        %v3860 = vunpack.c.l.b16 %v3643
        %v3861 = vunpack.c.l.b16 %v3653
        %v3862 = vunpack.c.l.b16 %v3667
        %v3863 = vunpack.c.l.b16 %v3677
        %v3864 = vunpack.c.l.b16 %v3691
        %v3865 = vunpack.c.l.b16 %v3701
        %v3866 = vunpack.c.l.b16 %v3715
        %v3867 = vunpack.c.l.b16 %v3725
        %v3868 = vunpack.c.l.b16 %v3739
        %v3869 = vunpack.c.l.b16 %v3749
        %v3870 = vunpack.c.l.b16 %v3763
        %v3871 = vunpack.c.l.b16 %v3773
        %v3872 = vunpack.c.l.b16 %v3787
        %v3873 = vunpack.c.l.b16 %v3797
        %v3874 = vunpack.c.l.b16 %v3811
        %v3875 = vunpack.c.l.b16 %v3821
        %v3876 = vunpack.c.l.b16 %v3835
        %v3877 = vunpack.c.l.b16 %v3845
        %v3878 = vpack.c.b16 %v3847, %v3846
        %v3879 = vpack.c.b16 %v3849, %v3848
        %v3880 = vpack.c.b16 %v3851, %v3850
        %v3881 = vpack.c.b16 %v3853, %v3852
        %v3882 = vpack.c.b16 %v3855, %v3854
        %v3883 = vpack.c.b16 %v3857, %v3856
        %v3884 = vpack.c.b16 %v3859, %v3858
        %v3885 = vpack.c.b16 %v3861, %v3860
        %v3886 = vpack.c.b16 %v3863, %v3862
        %v3887 = vpack.c.b16 %v3865, %v3864
        %v3888 = vpack.c.b16 %v3867, %v3866
        %v3889 = vpack.c.b16 %v3869, %v3868
        %v3890 = vpack.c.b16 %v3871, %v3870
        %v3891 = vpack.c.b16 %v3873, %v3872
        %v3892 = vpack.c.b16 %v3875, %v3874
        %v3893 = vpack.c.b16 %v3877, %v3876
        %3910 = vst [vmem:[#allocation3 + $0x38] sm:$0xff] %v3878
        %3911 = vst [vmem:[#allocation3 + $0x80] sm:$0xff] %v3879
        %3912 = vst [vmem:[#allocation3 + $0xc8] sm:$0xff] %v3880
        %3913 = vst [vmem:[#allocation3 + $0x110] sm:$0xff] %v3881
        %3914 = vst [vmem:[#allocation3 + $0x158] sm:$0xff] %v3882
        %3915 = vst [vmem:[#allocation3 + $0x1a0] sm:$0xff] %v3883
        %3916 = vst [vmem:[#allocation3 + $0x1e8] sm:$0xff] %v3884
        %3917 = vst [vmem:[#allocation3 + $0x230] sm:$0xff] %v3885
        %3918 = vst [vmem:[#allocation3 + $0x278] sm:$0xff] %v3886
        %3919 = vst [vmem:[#allocation3 + $0x2c0] sm:$0xff] %v3887
        %3920 = vst [vmem:[#allocation3 + $0x308] sm:$0xff] %v3888
        %3921 = vst [vmem:[#allocation3 + $0x350] sm:$0xff] %v3889
        %3922 = vst [vmem:[#allocation3 + $0x398] sm:$0xff] %v3890
        %3923 = vst [vmem:[#allocation3 + $0x3e0] sm:$0xff] %v3891
        %3924 = vst [vmem:[#allocation3 + $0x428] sm:$0xff] %v3892
        %3925 = vst [vmem:[#allocation3 + $0x470] sm:$0xff] %v3893
        %v3926 = vld [vmem:[%s3269] sm:$0xe]
        %v3927 = vld [vmem:[%s3269 + $0x4] sm:$0xf]
        %v3928 = vld [vmem:[%s3269 + $0x8] sm:$0x1]
        %v3929 = vld [vmem:[%s3269 + $0xc] sm:$0xe]
        %v3930 = vld [vmem:[%s3269 + $0x10] sm:$0xf]
        %v3931 = vld [vmem:[%s3269 + $0x14] sm:$0x1]
        %v3932 = vld [vmem:[%s3269 + $0x18] sm:$0xe]
        %v3933 = vld [vmem:[%s3269 + $0x1c] sm:$0xf]
        %v3934 = vld [vmem:[%s3269 + $0x20] sm:$0x1]
        %v3935 = vld [vmem:[%s3269 + $0x24] sm:$0xe]
        %v3936 = vld [vmem:[%s3269 + $0x28] sm:$0xf]
        %v3937 = vld [vmem:[%s3269 + $0x2c] sm:$0x1]
        %v3938 = vld [vmem:[%s3269 + $0x30] sm:$0xe]
        %v3939 = vld [vmem:[%s3269 + $0x34] sm:$0xf]
        %v3940 = vld [vmem:[%s3269 + $0x38] sm:$0x1]
        %v3941 = vld [vmem:[%s3269 + $0x3c] sm:$0xe]
        %v3942 = vld [vmem:[%s3269 + $0x40] sm:$0xf]
        %v3943 = vld [vmem:[%s3269 + $0x44] sm:$0x1]
        %v3944 = vld [vmem:[%s3269 + $0x48] sm:$0xe]
        %v3945 = vld [vmem:[%s3269 + $0x4c] sm:$0xf]
        %v3946 = vld [vmem:[%s3269 + $0x50] sm:$0x1]
        %v3947 = vld [vmem:[%s3269 + $0x54] sm:$0xe]
        %v3948 = vld [vmem:[%s3269 + $0x58] sm:$0xf]
        %v3949 = vld [vmem:[%s3269 + $0x5c] sm:$0x1]
        %v3950 = vld [vmem:[%s3269 + $0x60] sm:$0xe]
        %v3951 = vld [vmem:[%s3269 + $0x64] sm:$0xf]
        %v3952 = vld [vmem:[%s3269 + $0x68] sm:$0x1]
        %v3953 = vld [vmem:[%s3269 + $0x6c] sm:$0xe]
        %v3954 = vld [vmem:[%s3269 + $0x70] sm:$0xf]
        %v3955 = vld [vmem:[%s3269 + $0x74] sm:$0x1]
        %v3956 = vld [vmem:[%s3269 + $0x78] sm:$0xe]
        %v3957 = vld [vmem:[%s3269 + $0x7c] sm:$0xf]
        %v3958 = vld [vmem:[%s3269 + $0x80] sm:$0x1]
        %v3959 = vld [vmem:[%s3269 + $0x84] sm:$0xe]
        %v3960 = vld [vmem:[%s3269 + $0x88] sm:$0xf]
        %v3961 = vld [vmem:[%s3269 + $0x8c] sm:$0x1]
        %v3962 = vld [vmem:[%s3269 + $0x90] sm:$0xe]
        %v3963 = vld [vmem:[%s3269 + $0x94] sm:$0xf]
        %v3964 = vld [vmem:[%s3269 + $0x98] sm:$0x1]
        %v3965 = vld [vmem:[%s3269 + $0x9c] sm:$0xe]
        %v3966 = vld [vmem:[%s3269 + $0xa0] sm:$0xf]
        %v3967 = vld [vmem:[%s3269 + $0xa4] sm:$0x1]
        %v3968 = vld [vmem:[%s3269 + $0xa8] sm:$0xe]
        %v3969 = vld [vmem:[%s3269 + $0xac] sm:$0xf]
        %v3970 = vld [vmem:[%s3269 + $0xb0] sm:$0x1]
        %v3971 = vld [vmem:[%s3269 + $0xb4] sm:$0xe]
        %v3972 = vld [vmem:[%s3269 + $0xb8] sm:$0xf]
        %v3973 = vld [vmem:[%s3269 + $0xbc] sm:$0x1]
        %v4022 = vrot.slane %v3926, 5
        %v4023 = vrot.slane %v4022, 4
        %v4024 = vrot.slane %v3927, 5
        %v4025 = vsel %vm2132, %v4023, %v4024
        %v4026 = vrot.slane %v4024, 4
        %v4027 = vrot.slane %v3928, 5
        %v4028 = vsel %vm2132, %v4026, %v4027
        %v4029 = vrot.slane %v3929, 5
        %v4030 = vrot.slane %v4029, 4
        %v4031 = vrot.slane %v3930, 5
        %v4032 = vsel %vm2132, %v4030, %v4031
        %v4033 = vrot.slane %v4031, 4
        %v4034 = vrot.slane %v3931, 5
        %v4035 = vsel %vm2132, %v4033, %v4034
        %v4036 = vrot.slane %v3932, 5
        %v4037 = vrot.slane %v4036, 4
        %v4038 = vrot.slane %v3933, 5
        %v4039 = vsel %vm2132, %v4037, %v4038
        %v4040 = vrot.slane %v4038, 4
        %v4041 = vrot.slane %v3934, 5
        %v4042 = vsel %vm2132, %v4040, %v4041
        %v4043 = vrot.slane %v3935, 5
        %v4044 = vrot.slane %v4043, 4
        %v4045 = vrot.slane %v3936, 5
        %v4046 = vsel %vm2132, %v4044, %v4045
        %v4047 = vrot.slane %v4045, 4
        %v4048 = vrot.slane %v3937, 5
        %v4049 = vsel %vm2132, %v4047, %v4048
        %v4050 = vrot.slane %v3938, 5
        %v4051 = vrot.slane %v4050, 4
        %v4052 = vrot.slane %v3939, 5
        %v4053 = vsel %vm2132, %v4051, %v4052
        %v4054 = vrot.slane %v4052, 4
        %v4055 = vrot.slane %v3940, 5
        %v4056 = vsel %vm2132, %v4054, %v4055
        %v4057 = vrot.slane %v3941, 5
        %v4058 = vrot.slane %v4057, 4
        %v4059 = vrot.slane %v3942, 5
        %v4060 = vsel %vm2132, %v4058, %v4059
        %v4061 = vrot.slane %v4059, 4
        %v4062 = vrot.slane %v3943, 5
        %v4063 = vsel %vm2132, %v4061, %v4062
        %v4064 = vrot.slane %v3944, 5
        %v4065 = vrot.slane %v4064, 4
        %v4066 = vrot.slane %v3945, 5
        %v4067 = vsel %vm2132, %v4065, %v4066
        %v4068 = vrot.slane %v4066, 4
        %v4069 = vrot.slane %v3946, 5
        %v4070 = vsel %vm2132, %v4068, %v4069
        %v4071 = vrot.slane %v3947, 5
        %v4072 = vrot.slane %v4071, 4
        %v4073 = vrot.slane %v3948, 5
        %v4074 = vsel %vm2132, %v4072, %v4073
        %v4075 = vrot.slane %v4073, 4
        %v4076 = vrot.slane %v3949, 5
        %v4077 = vsel %vm2132, %v4075, %v4076
        %v4078 = vrot.slane %v3950, 5
        %v4079 = vrot.slane %v4078, 4
        %v4080 = vrot.slane %v3951, 5
        %v4081 = vsel %vm2132, %v4079, %v4080
        %v4082 = vrot.slane %v4080, 4
        %v4083 = vrot.slane %v3952, 5
        %v4084 = vsel %vm2132, %v4082, %v4083
        %v4085 = vrot.slane %v3953, 5
        %v4086 = vrot.slane %v4085, 4
        %v4087 = vrot.slane %v3954, 5
        %v4088 = vsel %vm2132, %v4086, %v4087
        %v4089 = vrot.slane %v4087, 4
        %v4090 = vrot.slane %v3955, 5
        %v4091 = vsel %vm2132, %v4089, %v4090
        %v4092 = vrot.slane %v3956, 5
        %v4093 = vrot.slane %v4092, 4
        %v4094 = vrot.slane %v3957, 5
        %v4095 = vsel %vm2132, %v4093, %v4094
        %v4096 = vrot.slane %v4094, 4
        %v4097 = vrot.slane %v3958, 5
        %v4098 = vsel %vm2132, %v4096, %v4097
        %v4099 = vrot.slane %v3959, 5
        %v4100 = vrot.slane %v4099, 4
        %v4101 = vrot.slane %v3960, 5
        %v4102 = vsel %vm2132, %v4100, %v4101
        %v4103 = vrot.slane %v4101, 4
        %v4104 = vrot.slane %v3961, 5
        %v4105 = vsel %vm2132, %v4103, %v4104
        %v4106 = vrot.slane %v3962, 5
        %v4107 = vrot.slane %v4106, 4
        %v4108 = vrot.slane %v3963, 5
        %v4109 = vsel %vm2132, %v4107, %v4108
        %v4110 = vrot.slane %v4108, 4
        %v4111 = vrot.slane %v3964, 5
        %v4112 = vsel %vm2132, %v4110, %v4111
        %v4113 = vrot.slane %v3965, 5
        %v4114 = vrot.slane %v4113, 4
        %v4115 = vrot.slane %v3966, 5
        %v4116 = vsel %vm2132, %v4114, %v4115
        %v4117 = vrot.slane %v4115, 4
        %v4118 = vrot.slane %v3967, 5
        %v4119 = vsel %vm2132, %v4117, %v4118
        %v4120 = vrot.slane %v3968, 5
        %v4121 = vrot.slane %v4120, 4
        %v4122 = vrot.slane %v3969, 5
        %v4123 = vsel %vm2132, %v4121, %v4122
        %v4124 = vrot.slane %v4122, 4
        %v4125 = vrot.slane %v3970, 5
        %v4126 = vsel %vm2132, %v4124, %v4125
        %v4127 = vrot.slane %v3971, 5
        %v4128 = vrot.slane %v4127, 4
        %v4129 = vrot.slane %v3972, 5
        %v4130 = vsel %vm2132, %v4128, %v4129
        %v4131 = vrot.slane %v4129, 4
        %v4132 = vrot.slane %v3973, 5
        %v4133 = vsel %vm2132, %v4131, %v4132
        %v4134 = vunpack.c.l.b16 %v4025
        %v4135 = vunpack.c.l.b16 %v4028
        %v4136 = vunpack.c.l.b16 %v4032
        %v4137 = vunpack.c.l.b16 %v4035
        %v4138 = vunpack.c.l.b16 %v4039
        %v4139 = vunpack.c.l.b16 %v4042
        %v4140 = vunpack.c.l.b16 %v4046
        %v4141 = vunpack.c.l.b16 %v4049
        %v4142 = vunpack.c.l.b16 %v4053
        %v4143 = vunpack.c.l.b16 %v4056
        %v4144 = vunpack.c.l.b16 %v4060
        %v4145 = vunpack.c.l.b16 %v4063
        %v4146 = vunpack.c.l.b16 %v4067
        %v4147 = vunpack.c.l.b16 %v4070
        %v4148 = vunpack.c.l.b16 %v4074
        %v4149 = vunpack.c.l.b16 %v4077
        %v4150 = vunpack.c.l.b16 %v4081
        %v4151 = vunpack.c.l.b16 %v4084
        %v4152 = vunpack.c.l.b16 %v4088
        %v4153 = vunpack.c.l.b16 %v4091
        %v4154 = vunpack.c.l.b16 %v4095
        %v4155 = vunpack.c.l.b16 %v4098
        %v4156 = vunpack.c.l.b16 %v4102
        %v4157 = vunpack.c.l.b16 %v4105
        %v4158 = vunpack.c.l.b16 %v4109
        %v4159 = vunpack.c.l.b16 %v4112
        %v4160 = vunpack.c.l.b16 %v4116
        %v4161 = vunpack.c.l.b16 %v4119
        %v4162 = vunpack.c.l.b16 %v4123
        %v4163 = vunpack.c.l.b16 %v4126
        %v4164 = vunpack.c.l.b16 %v4130
        %v4165 = vunpack.c.l.b16 %v4133
        %v4166 = vpack.c.b16 %v4135, %v4134
        %v4167 = vpack.c.b16 %v4137, %v4136
        %v4168 = vpack.c.b16 %v4139, %v4138
        %v4169 = vpack.c.b16 %v4141, %v4140
        %v4170 = vpack.c.b16 %v4143, %v4142
        %v4171 = vpack.c.b16 %v4145, %v4144
        %v4172 = vpack.c.b16 %v4147, %v4146
        %v4173 = vpack.c.b16 %v4149, %v4148
        %v4174 = vpack.c.b16 %v4151, %v4150
        %v4175 = vpack.c.b16 %v4153, %v4152
        %v4176 = vpack.c.b16 %v4155, %v4154
        %v4177 = vpack.c.b16 %v4157, %v4156
        %v4178 = vpack.c.b16 %v4159, %v4158
        %v4179 = vpack.c.b16 %v4161, %v4160
        %v4180 = vpack.c.b16 %v4163, %v4162
        %v4181 = vpack.c.b16 %v4165, %v4164
        %4198 = vst [vmem:[#allocation3 + $0x40] sm:$0xff] %v4166
        %4199 = vst [vmem:[#allocation3 + $0x88] sm:$0xff] %v4167
        %4200 = vst [vmem:[#allocation3 + $0xd0] sm:$0xff] %v4168
        %4201 = vst [vmem:[#allocation3 + $0x118] sm:$0xff] %v4169
        %4202 = vst [vmem:[#allocation3 + $0x160] sm:$0xff] %v4170
        %4203 = vst [vmem:[#allocation3 + $0x1a8] sm:$0xff] %v4171
        %4204 = vst [vmem:[#allocation3 + $0x1f0] sm:$0xff] %v4172
        %4205 = vst [vmem:[#allocation3 + $0x238] sm:$0xff] %v4173
        %4206 = vst [vmem:[#allocation3 + $0x280] sm:$0xff] %v4174
        %4207 = vst [vmem:[#allocation3 + $0x2c8] sm:$0xff] %v4175
        %4208 = vst [vmem:[#allocation3 + $0x310] sm:$0xff] %v4176
        %4209 = vst [vmem:[#allocation3 + $0x358] sm:$0xff] %v4177
        %4210 = vst [vmem:[#allocation3 + $0x3a0] sm:$0xff] %v4178
        %4211 = vst [vmem:[#allocation3 + $0x3e8] sm:$0xff] %v4179
        %4212 = vst [vmem:[#allocation3 + $0x430] sm:$0xff] %v4180
        %4213 = vst [vmem:[#allocation3 + $0x478] sm:$0xff] %v4181
        %v4214 = vld [vmem:[#allocation3] sm:$0xff]
        %v4215 = vld [vmem:[#allocation3 + $0x8] sm:$0xff]
        %v4216 = vld [vmem:[#allocation3 + $0x10] sm:$0xff]
        %v4217 = vld [vmem:[#allocation3 + $0x18] sm:$0xff]
        %v4218 = vld [vmem:[#allocation3 + $0x20] sm:$0xff]
        %v4219 = vld [vmem:[#allocation3 + $0x28] sm:$0xff]
        %v4220 = vld [vmem:[#allocation3 + $0x30] sm:$0xff]
        %v4221 = vld [vmem:[#allocation3 + $0x38] sm:$0xff]
        %v4222 = vld [vmem:[#allocation3 + $0x40] sm:$0xff]
        %v4223 = vld [vmem:[#allocation3 + $0x48] sm:$0xff]
        %v4224 = vld [vmem:[#allocation3 + $0x50] sm:$0xff]
        %v4225 = vld [vmem:[#allocation3 + $0x58] sm:$0xff]
        %v4226 = vld [vmem:[#allocation3 + $0x60] sm:$0xff]
        %v4227 = vld [vmem:[#allocation3 + $0x68] sm:$0xff]
        %v4228 = vld [vmem:[#allocation3 + $0x70] sm:$0xff]
        %v4229 = vld [vmem:[#allocation3 + $0x78] sm:$0xff]
        %v4230 = vld [vmem:[#allocation3 + $0x80] sm:$0xff]
        %v4231 = vld [vmem:[#allocation3 + $0x88] sm:$0xff]
        %v4232 = vld [vmem:[#allocation3 + $0x90] sm:$0xff]
        %v4233 = vld [vmem:[#allocation3 + $0x98] sm:$0xff]
        %v4234 = vld [vmem:[#allocation3 + $0xa0] sm:$0xff]
        %v4235 = vld [vmem:[#allocation3 + $0xa8] sm:$0xff]
        %v4236 = vld [vmem:[#allocation3 + $0xb0] sm:$0xff]
        %v4237 = vld [vmem:[#allocation3 + $0xb8] sm:$0xff]
        %v4238 = vld [vmem:[#allocation3 + $0xc0] sm:$0xff]
        %v4239 = vld [vmem:[#allocation3 + $0xc8] sm:$0xff]
        %v4240 = vld [vmem:[#allocation3 + $0xd0] sm:$0xff]
        %v4241 = vld [vmem:[#allocation3 + $0xd8] sm:$0xff]
        %v4242 = vld [vmem:[#allocation3 + $0xe0] sm:$0xff]
        %v4243 = vld [vmem:[#allocation3 + $0xe8] sm:$0xff]
        %v4244 = vld [vmem:[#allocation3 + $0xf0] sm:$0xff]
        %v4245 = vld [vmem:[#allocation3 + $0xf8] sm:$0xff]
        %v4246 = vld [vmem:[#allocation3 + $0x100] sm:$0xff]
        %v4247 = vld [vmem:[#allocation3 + $0x108] sm:$0xff]
        %v4248 = vld [vmem:[#allocation3 + $0x110] sm:$0xff]
        %v4249 = vld [vmem:[#allocation3 + $0x118] sm:$0xff]
        %v4250 = vld [vmem:[#allocation3 + $0x120] sm:$0xff]
        %v4251 = vld [vmem:[#allocation3 + $0x128] sm:$0xff]
        %v4252 = vld [vmem:[#allocation3 + $0x130] sm:$0xff]
        %v4253 = vld [vmem:[#allocation3 + $0x138] sm:$0xff]
        %v4254 = vld [vmem:[#allocation3 + $0x140] sm:$0xff]
        %v4255 = vld [vmem:[#allocation3 + $0x148] sm:$0xff]
        %v4256 = vld [vmem:[#allocation3 + $0x150] sm:$0xff]
        %v4257 = vld [vmem:[#allocation3 + $0x158] sm:$0xff]
        %v4258 = vld [vmem:[#allocation3 + $0x160] sm:$0xff]
        %v4259 = vld [vmem:[#allocation3 + $0x168] sm:$0xff]
        %v4260 = vld [vmem:[#allocation3 + $0x170] sm:$0xff]
        %v4261 = vld [vmem:[#allocation3 + $0x178] sm:$0xff]
        %v4262 = vld [vmem:[#allocation3 + $0x180] sm:$0xff]
        %v4263 = vld [vmem:[#allocation3 + $0x188] sm:$0xff]
        %v4264 = vld [vmem:[#allocation3 + $0x190] sm:$0xff]
        %v4265 = vld [vmem:[#allocation3 + $0x198] sm:$0xff]
        %v4266 = vld [vmem:[#allocation3 + $0x1a0] sm:$0xff]
        %v4267 = vld [vmem:[#allocation3 + $0x1a8] sm:$0xff]
        %v4268 = vld [vmem:[#allocation3 + $0x1b0] sm:$0xff]
        %v4269 = vld [vmem:[#allocation3 + $0x1b8] sm:$0xff]
        %v4270 = vld [vmem:[#allocation3 + $0x1c0] sm:$0xff]
        %v4271 = vld [vmem:[#allocation3 + $0x1c8] sm:$0xff]
        %v4272 = vld [vmem:[#allocation3 + $0x1d0] sm:$0xff]
        %v4273 = vld [vmem:[#allocation3 + $0x1d8] sm:$0xff]
        %v4274 = vld [vmem:[#allocation3 + $0x1e0] sm:$0xff]
        %v4275 = vld [vmem:[#allocation3 + $0x1e8] sm:$0xff]
        %v4276 = vld [vmem:[#allocation3 + $0x1f0] sm:$0xff]
        %v4277 = vld [vmem:[#allocation3 + $0x1f8] sm:$0xff]
        %v4278 = vld [vmem:[#allocation3 + $0x200] sm:$0xff]
        %v4279 = vld [vmem:[#allocation3 + $0x208] sm:$0xff]
        %v4280 = vld [vmem:[#allocation3 + $0x210] sm:$0xff]
        %v4281 = vld [vmem:[#allocation3 + $0x218] sm:$0xff]
        %v4282 = vld [vmem:[#allocation3 + $0x220] sm:$0xff]
        %v4283 = vld [vmem:[#allocation3 + $0x228] sm:$0xff]
        %v4284 = vld [vmem:[#allocation3 + $0x230] sm:$0xff]
        %v4285 = vld [vmem:[#allocation3 + $0x238] sm:$0xff]
        %v4286 = vld [vmem:[#allocation3 + $0x240] sm:$0xff]
        %v4287 = vld [vmem:[#allocation3 + $0x248] sm:$0xff]
        %v4288 = vld [vmem:[#allocation3 + $0x250] sm:$0xff]
        %v4289 = vld [vmem:[#allocation3 + $0x258] sm:$0xff]
        %v4290 = vld [vmem:[#allocation3 + $0x260] sm:$0xff]
        %v4291 = vld [vmem:[#allocation3 + $0x268] sm:$0xff]
        %v4292 = vld [vmem:[#allocation3 + $0x270] sm:$0xff]
        %v4293 = vld [vmem:[#allocation3 + $0x278] sm:$0xff]
        %v4294 = vld [vmem:[#allocation3 + $0x280] sm:$0xff]
        %v4295 = vld [vmem:[#allocation3 + $0x288] sm:$0xff]
        %v4296 = vld [vmem:[#allocation3 + $0x290] sm:$0xff]
        %v4297 = vld [vmem:[#allocation3 + $0x298] sm:$0xff]
        %v4298 = vld [vmem:[#allocation3 + $0x2a0] sm:$0xff]
        %v4299 = vld [vmem:[#allocation3 + $0x2a8] sm:$0xff]
        %v4300 = vld [vmem:[#allocation3 + $0x2b0] sm:$0xff]
        %v4301 = vld [vmem:[#allocation3 + $0x2b8] sm:$0xff]
        %v4302 = vld [vmem:[#allocation3 + $0x2c0] sm:$0xff]
        %v4303 = vld [vmem:[#allocation3 + $0x2c8] sm:$0xff]
        %v4304 = vld [vmem:[#allocation3 + $0x2d0] sm:$0xff]
        %v4305 = vld [vmem:[#allocation3 + $0x2d8] sm:$0xff]
        %v4306 = vld [vmem:[#allocation3 + $0x2e0] sm:$0xff]
        %v4307 = vld [vmem:[#allocation3 + $0x2e8] sm:$0xff]
        %v4308 = vld [vmem:[#allocation3 + $0x2f0] sm:$0xff]
        %v4309 = vld [vmem:[#allocation3 + $0x2f8] sm:$0xff]
        %v4310 = vld [vmem:[#allocation3 + $0x300] sm:$0xff]
        %v4311 = vld [vmem:[#allocation3 + $0x308] sm:$0xff]
        %v4312 = vld [vmem:[#allocation3 + $0x310] sm:$0xff]
        %v4313 = vld [vmem:[#allocation3 + $0x318] sm:$0xff]
        %v4314 = vld [vmem:[#allocation3 + $0x320] sm:$0xff]
        %v4315 = vld [vmem:[#allocation3 + $0x328] sm:$0xff]
        %v4316 = vld [vmem:[#allocation3 + $0x330] sm:$0xff]
        %v4317 = vld [vmem:[#allocation3 + $0x338] sm:$0xff]
        %v4318 = vld [vmem:[#allocation3 + $0x340] sm:$0xff]
        %v4319 = vld [vmem:[#allocation3 + $0x348] sm:$0xff]
        %v4320 = vld [vmem:[#allocation3 + $0x350] sm:$0xff]
        %v4321 = vld [vmem:[#allocation3 + $0x358] sm:$0xff]
        %v4322 = vld [vmem:[#allocation3 + $0x360] sm:$0xff]
        %v4323 = vld [vmem:[#allocation3 + $0x368] sm:$0xff]
        %v4324 = vld [vmem:[#allocation3 + $0x370] sm:$0xff]
        %v4325 = vld [vmem:[#allocation3 + $0x378] sm:$0xff]
        %v4326 = vld [vmem:[#allocation3 + $0x380] sm:$0xff]
        %v4327 = vld [vmem:[#allocation3 + $0x388] sm:$0xff]
        %v4328 = vld [vmem:[#allocation3 + $0x390] sm:$0xff]
        %v4329 = vld [vmem:[#allocation3 + $0x398] sm:$0xff]
        %v4330 = vld [vmem:[#allocation3 + $0x3a0] sm:$0xff]
        %v4331 = vld [vmem:[#allocation3 + $0x3a8] sm:$0xff]
        %v4332 = vld [vmem:[#allocation3 + $0x3b0] sm:$0xff]
        %v4333 = vld [vmem:[#allocation3 + $0x3b8] sm:$0xff]
        %v4334 = vld [vmem:[#allocation3 + $0x3c0] sm:$0xff]
        %v4335 = vld [vmem:[#allocation3 + $0x3c8] sm:$0xff]
        %v4336 = vld [vmem:[#allocation3 + $0x3d0] sm:$0xff]
        %v4337 = vld [vmem:[#allocation3 + $0x3d8] sm:$0xff]
        %v4338 = vld [vmem:[#allocation3 + $0x3e0] sm:$0xff]
        %v4339 = vld [vmem:[#allocation3 + $0x3e8] sm:$0xff]
        %v4340 = vld [vmem:[#allocation3 + $0x3f0] sm:$0xff]
        %v4341 = vld [vmem:[#allocation3 + $0x3f8] sm:$0xff]
        %v4342 = vld [vmem:[#allocation3 + $0x400] sm:$0xff]
        %v4343 = vld [vmem:[#allocation3 + $0x408] sm:$0xff]
        %v4344 = vld [vmem:[#allocation3 + $0x410] sm:$0xff]
        %v4345 = vld [vmem:[#allocation3 + $0x418] sm:$0xff]
        %v4346 = vld [vmem:[#allocation3 + $0x420] sm:$0xff]
        %v4347 = vld [vmem:[#allocation3 + $0x428] sm:$0xff]
        %v4348 = vld [vmem:[#allocation3 + $0x430] sm:$0xff]
        %v4349 = vld [vmem:[#allocation3 + $0x438] sm:$0xff]
        %v4350 = vld [vmem:[#allocation3 + $0x440] sm:$0xff]
        %v4351 = vld [vmem:[#allocation3 + $0x448] sm:$0xff]
        %v4352 = vld [vmem:[#allocation3 + $0x450] sm:$0xff]
        %v4353 = vld [vmem:[#allocation3 + $0x458] sm:$0xff]
        %v4354 = vld [vmem:[#allocation3 + $0x460] sm:$0xff]
        %v4355 = vld [vmem:[#allocation3 + $0x468] sm:$0xff]
        %v4356 = vld [vmem:[#allocation3 + $0x470] sm:$0xff]
        %v4357 = vld [vmem:[#allocation3 + $0x478] sm:$0xff]
        %v4358 = vld [vmem:[#allocation9] sm:$0xf]
        %v4359 = vld [vmem:[#allocation9 + $0x4] sm:$0xf]
        %v4360 = vld [vmem:[#allocation9 + $0x8] sm:$0xf]
        %v4361 = vld [vmem:[#allocation9 + $0xc] sm:$0xf]
        %v4362 = vld [vmem:[#allocation9 + $0x10] sm:$0xf]
        %v4363 = vld [vmem:[#allocation9 + $0x14] sm:$0xf]
        %v4364 = vld [vmem:[#allocation9 + $0x18] sm:$0xf]
        %v4365 = vld [vmem:[#allocation9 + $0x1c] sm:$0xf]
        %v4366 = vld [vmem:[#allocation9 + $0x20] sm:$0xf]
        %v4367 = vld [vmem:[#allocation9 + $0x24] sm:$0xf]
        %v4368 = vld [vmem:[#allocation9 + $0x28] sm:$0xf]
        %v4369 = vld [vmem:[#allocation9 + $0x2c] sm:$0xf]
        %v4370 = vld [vmem:[#allocation9 + $0x30] sm:$0xf]
        %v4371 = vld [vmem:[#allocation9 + $0x34] sm:$0xf]
        %v4372 = vld [vmem:[#allocation9 + $0x38] sm:$0xf]
        %v4373 = vld [vmem:[#allocation9 + $0x3c] sm:$0xf]
        %v4374 = vld [vmem:[#allocation9 + $0x40] sm:$0xf]
        %v4375 = vld [vmem:[#allocation9 + $0x44] sm:$0xf]
        %v4376 = vld [vmem:[#allocation9 + $0x48] sm:$0xf]
        %v4377 = vld [vmem:[#allocation9 + $0x4c] sm:$0xf]
        %v4378 = vld [vmem:[#allocation9 + $0x50] sm:$0xf]
        %v4379 = vld [vmem:[#allocation9 + $0x54] sm:$0xf]
        %v4380 = vld [vmem:[#allocation9 + $0x58] sm:$0xf]
        %v4381 = vld [vmem:[#allocation9 + $0x5c] sm:$0xf]
        %v4382 = vld [vmem:[#allocation9 + $0x60] sm:$0xf]
        %v4383 = vld [vmem:[#allocation9 + $0x64] sm:$0xf]
        %v4384 = vld [vmem:[#allocation9 + $0x68] sm:$0xf]
        %v4385 = vld [vmem:[#allocation9 + $0x6c] sm:$0xf]
        %v4386 = vld [vmem:[#allocation9 + $0x70] sm:$0xf]
        %v4387 = vld [vmem:[#allocation9 + $0x74] sm:$0xf]
        %v4388 = vld [vmem:[#allocation9 + $0x78] sm:$0xf]
        %v4389 = vld [vmem:[#allocation9 + $0x7c] sm:$0xf]
        %v4390 = vld [vmem:[#allocation9 + $0x80] sm:$0xf]
        %v4391 = vld [vmem:[#allocation9 + $0x84] sm:$0xf]
        %v4392 = vld [vmem:[#allocation9 + $0x88] sm:$0xf]
        %v4393 = vld [vmem:[#allocation9 + $0x8c] sm:$0xf]
        %v4394 = vld [vmem:[#allocation9 + $0x90] sm:$0xf]
        %v4395 = vld [vmem:[#allocation9 + $0x94] sm:$0xf]
        %v4396 = vld [vmem:[#allocation9 + $0x98] sm:$0xf]
        %v4397 = vld [vmem:[#allocation9 + $0x9c] sm:$0xf]
        %v4398 = vld [vmem:[#allocation9 + $0xa0] sm:$0xf]
        %v4399 = vld [vmem:[#allocation9 + $0xa4] sm:$0xf]
        %v4400 = vld [vmem:[#allocation9 + $0xa8] sm:$0xf]
        %v4401 = vld [vmem:[#allocation9 + $0xac] sm:$0xf]
        %v4402 = vld [vmem:[#allocation9 + $0xb0] sm:$0xf]
        %v4403 = vld [vmem:[#allocation9 + $0xb4] sm:$0xf]
        %v4404 = vld [vmem:[#allocation9 + $0xb8] sm:$0xf]
        %v4405 = vld [vmem:[#allocation9 + $0xbc] sm:$0xf]
        %v4406 = vld [vmem:[#allocation9 + $0xc0] sm:$0xf]
        %v4407 = vld [vmem:[#allocation9 + $0xc4] sm:$0xf]
        %v4408 = vld [vmem:[#allocation9 + $0xc8] sm:$0xf]
        %v4409 = vld [vmem:[#allocation9 + $0xcc] sm:$0xf]
        %v4410 = vld [vmem:[#allocation9 + $0xd0] sm:$0xf]
        %v4411 = vld [vmem:[#allocation9 + $0xd4] sm:$0xf]
        %v4412 = vld [vmem:[#allocation9 + $0xd8] sm:$0xf]
        %v4413 = vld [vmem:[#allocation9 + $0xdc] sm:$0xf]
        %v4414 = vld [vmem:[#allocation9 + $0xe0] sm:$0xf]
        %v4415 = vld [vmem:[#allocation9 + $0xe4] sm:$0xf]
        %v4416 = vld [vmem:[#allocation9 + $0xe8] sm:$0xf]
        %v4417 = vld [vmem:[#allocation9 + $0xec] sm:$0xf]
        %v4418 = vld [vmem:[#allocation9 + $0xf0] sm:$0xf]
        %v4419 = vld [vmem:[#allocation9 + $0xf4] sm:$0xf]
        %v4420 = vld [vmem:[#allocation9 + $0xf8] sm:$0xf]
        %v4421 = vld [vmem:[#allocation9 + $0xfc] sm:$0xf]
        %v4422 = vld [vmem:[#allocation9 + $0x100] sm:$0xf]
        %v4423 = vld [vmem:[#allocation9 + $0x104] sm:$0xf]
        %v4424 = vld [vmem:[#allocation9 + $0x108] sm:$0xf]
        %v4425 = vld [vmem:[#allocation9 + $0x10c] sm:$0xf]
        %v4426 = vld [vmem:[#allocation9 + $0x110] sm:$0xf]
        %v4427 = vld [vmem:[#allocation9 + $0x114] sm:$0xf]
        %v4428 = vld [vmem:[#allocation9 + $0x118] sm:$0xf]
        %v4429 = vld [vmem:[#allocation9 + $0x11c] sm:$0xf]
        %v4430 = vld [vmem:[#allocation9 + $0x120] sm:$0xf]
        %v4431 = vld [vmem:[#allocation9 + $0x124] sm:$0xf]
        %v4432 = vld [vmem:[#allocation9 + $0x128] sm:$0xf]
        %v4433 = vld [vmem:[#allocation9 + $0x12c] sm:$0xf]
        %v4434 = vld [vmem:[#allocation9 + $0x130] sm:$0xf]
        %v4435 = vld [vmem:[#allocation9 + $0x134] sm:$0xf]
        %v4436 = vld [vmem:[#allocation9 + $0x138] sm:$0xf]
        %v4437 = vld [vmem:[#allocation9 + $0x13c] sm:$0xf]
        %v4438 = vld [vmem:[#allocation9 + $0x140] sm:$0xf]
        %v4439 = vld [vmem:[#allocation9 + $0x144] sm:$0xf]
        %v4440 = vld [vmem:[#allocation9 + $0x148] sm:$0xf]
        %v4441 = vld [vmem:[#allocation9 + $0x14c] sm:$0xf]
        %v4442 = vld [vmem:[#allocation9 + $0x150] sm:$0xf]
        %v4443 = vld [vmem:[#allocation9 + $0x154] sm:$0xf]
        %v4444 = vld [vmem:[#allocation9 + $0x158] sm:$0xf]
        %v4445 = vld [vmem:[#allocation9 + $0x15c] sm:$0xf]
        %v4446 = vld [vmem:[#allocation9 + $0x160] sm:$0xf]
        %v4447 = vld [vmem:[#allocation9 + $0x164] sm:$0xf]
        %v4448 = vld [vmem:[#allocation9 + $0x168] sm:$0xf]
        %v4449 = vld [vmem:[#allocation9 + $0x16c] sm:$0xf]
        %v4450 = vld [vmem:[#allocation9 + $0x170] sm:$0xf]
        %v4451 = vld [vmem:[#allocation9 + $0x174] sm:$0xf]
        %v4452 = vld [vmem:[#allocation9 + $0x178] sm:$0xf]
        %v4453 = vld [vmem:[#allocation9 + $0x17c] sm:$0xf]
        %v4454 = vld [vmem:[#allocation9 + $0x180] sm:$0xf]
        %v4455 = vld [vmem:[#allocation9 + $0x184] sm:$0xf]
        %v4456 = vld [vmem:[#allocation9 + $0x188] sm:$0xf]
        %v4457 = vld [vmem:[#allocation9 + $0x18c] sm:$0xf]
        %v4458 = vld [vmem:[#allocation9 + $0x190] sm:$0xf]
        %v4459 = vld [vmem:[#allocation9 + $0x194] sm:$0xf]
        %v4460 = vld [vmem:[#allocation9 + $0x198] sm:$0xf]
        %v4461 = vld [vmem:[#allocation9 + $0x19c] sm:$0xf]
        %v4462 = vld [vmem:[#allocation9 + $0x1a0] sm:$0xf]
        %v4463 = vld [vmem:[#allocation9 + $0x1a4] sm:$0xf]
        %v4464 = vld [vmem:[#allocation9 + $0x1a8] sm:$0xf]
        %v4465 = vld [vmem:[#allocation9 + $0x1ac] sm:$0xf]
        %v4466 = vld [vmem:[#allocation9 + $0x1b0] sm:$0xf]
        %v4467 = vld [vmem:[#allocation9 + $0x1b4] sm:$0xf]
        %v4468 = vld [vmem:[#allocation9 + $0x1b8] sm:$0xf]
        %v4469 = vld [vmem:[#allocation9 + $0x1bc] sm:$0xf]
        %v4470 = vld [vmem:[#allocation9 + $0x1c0] sm:$0xf]
        %v4471 = vld [vmem:[#allocation9 + $0x1c4] sm:$0xf]
        %v4472 = vld [vmem:[#allocation9 + $0x1c8] sm:$0xf]
        %v4473 = vld [vmem:[#allocation9 + $0x1cc] sm:$0xf]
        %v4474 = vld [vmem:[#allocation9 + $0x1d0] sm:$0xf]
        %v4475 = vld [vmem:[#allocation9 + $0x1d4] sm:$0xf]
        %v4476 = vld [vmem:[#allocation9 + $0x1d8] sm:$0xf]
        %v4477 = vld [vmem:[#allocation9 + $0x1dc] sm:$0xf]
        %v4478 = vld [vmem:[#allocation9 + $0x1e0] sm:$0xf]
        %v4479 = vld [vmem:[#allocation9 + $0x1e4] sm:$0xf]
        %v4480 = vld [vmem:[#allocation9 + $0x1e8] sm:$0xf]
        %v4481 = vld [vmem:[#allocation9 + $0x1ec] sm:$0xf]
        %v4482 = vld [vmem:[#allocation9 + $0x1f0] sm:$0xf]
        %v4483 = vld [vmem:[#allocation9 + $0x1f4] sm:$0xf]
        %v4484 = vld [vmem:[#allocation9 + $0x1f8] sm:$0xf]
        %v4485 = vld [vmem:[#allocation9 + $0x1fc] sm:$0xf]
        %v4486 = vld [vmem:[#allocation9 + $0x200] sm:$0xf]
        %v4487 = vld [vmem:[#allocation9 + $0x204] sm:$0xf]
        %v4488 = vld [vmem:[#allocation9 + $0x208] sm:$0xf]
        %v4489 = vld [vmem:[#allocation9 + $0x20c] sm:$0xf]
        %v4490 = vld [vmem:[#allocation9 + $0x210] sm:$0xf]
        %v4491 = vld [vmem:[#allocation9 + $0x214] sm:$0xf]
        %v4492 = vld [vmem:[#allocation9 + $0x218] sm:$0xf]
        %v4493 = vld [vmem:[#allocation9 + $0x21c] sm:$0xf]
        %v4494 = vld [vmem:[#allocation9 + $0x220] sm:$0xf]
        %v4495 = vld [vmem:[#allocation9 + $0x224] sm:$0xf]
        %v4496 = vld [vmem:[#allocation9 + $0x228] sm:$0xf]
        %v4497 = vld [vmem:[#allocation9 + $0x22c] sm:$0xf]
        %v4498 = vld [vmem:[#allocation9 + $0x230] sm:$0xf]
        %v4499 = vld [vmem:[#allocation9 + $0x234] sm:$0xf]
        %v4500 = vld [vmem:[#allocation9 + $0x238] sm:$0xf]
        %v4501 = vld [vmem:[#allocation9 + $0x23c] sm:$0xf]
        %v4502 = vld [vmem:[%s4] sm:$0x1]
        %v4504 = vlaneseq
        %v4505 = vshrl.u32 %v4504, 7
        %v4506 = vsub.s32 0, %v4505
        %v4507 = vrot.slane %v4502, %v4506
        %v4653 = vunpack.c.l.b16 %v4358
        %v4654 = vunpack.c.l.b16 %v4359
        %v4655 = vunpack.c.l.b16 %v4360
        %v4656 = vunpack.c.l.b16 %v4361
        %v4657 = vunpack.c.l.b16 %v4362
        %v4658 = vunpack.c.l.b16 %v4363
        %v4659 = vunpack.c.l.b16 %v4364
        %v4660 = vunpack.c.l.b16 %v4365
        %v4661 = vunpack.c.l.b16 %v4366
        %v4662 = vunpack.c.l.b16 %v4367
        %v4663 = vunpack.c.l.b16 %v4368
        %v4664 = vunpack.c.l.b16 %v4369
        %v4665 = vunpack.c.l.b16 %v4370
        %v4666 = vunpack.c.l.b16 %v4371
        %v4667 = vunpack.c.l.b16 %v4372
        %v4668 = vunpack.c.l.b16 %v4373
        %v4669 = vunpack.c.l.b16 %v4374
        %v4670 = vunpack.c.l.b16 %v4375
        %v4671 = vunpack.c.l.b16 %v4376
        %v4672 = vunpack.c.l.b16 %v4377
        %v4673 = vunpack.c.l.b16 %v4378
        %v4674 = vunpack.c.l.b16 %v4379
        %v4675 = vunpack.c.l.b16 %v4380
        %v4676 = vunpack.c.l.b16 %v4381
        %v4677 = vunpack.c.l.b16 %v4382
        %v4678 = vunpack.c.l.b16 %v4383
        %v4679 = vunpack.c.l.b16 %v4384
        %v4680 = vunpack.c.l.b16 %v4385
        %v4681 = vunpack.c.l.b16 %v4386
        %v4682 = vunpack.c.l.b16 %v4387
        %v4683 = vunpack.c.l.b16 %v4388
        %v4684 = vunpack.c.l.b16 %v4389
        %v4685 = vunpack.c.l.b16 %v4390
        %v4686 = vunpack.c.l.b16 %v4391
        %v4687 = vunpack.c.l.b16 %v4392
        %v4688 = vunpack.c.l.b16 %v4393
        %v4689 = vunpack.c.l.b16 %v4394
        %v4690 = vunpack.c.l.b16 %v4395
        %v4691 = vunpack.c.l.b16 %v4396
        %v4692 = vunpack.c.l.b16 %v4397
        %v4693 = vunpack.c.l.b16 %v4398
        %v4694 = vunpack.c.l.b16 %v4399
        %v4695 = vunpack.c.l.b16 %v4400
        %v4696 = vunpack.c.l.b16 %v4401
        %v4697 = vunpack.c.l.b16 %v4402
        %v4698 = vunpack.c.l.b16 %v4403
        %v4699 = vunpack.c.l.b16 %v4404
        %v4700 = vunpack.c.l.b16 %v4405
        %v4701 = vunpack.c.l.b16 %v4406
        %v4702 = vunpack.c.l.b16 %v4407
        %v4703 = vunpack.c.l.b16 %v4408
        %v4704 = vunpack.c.l.b16 %v4409
        %v4705 = vunpack.c.l.b16 %v4410
        %v4706 = vunpack.c.l.b16 %v4411
        %v4707 = vunpack.c.l.b16 %v4412
        %v4708 = vunpack.c.l.b16 %v4413
        %v4709 = vunpack.c.l.b16 %v4414
        %v4710 = vunpack.c.l.b16 %v4415
        %v4711 = vunpack.c.l.b16 %v4416
        %v4712 = vunpack.c.l.b16 %v4417
        %v4713 = vunpack.c.l.b16 %v4418
        %v4714 = vunpack.c.l.b16 %v4419
        %v4715 = vunpack.c.l.b16 %v4420
        %v4716 = vunpack.c.l.b16 %v4421
        %v4717 = vunpack.c.l.b16 %v4422
        %v4718 = vunpack.c.l.b16 %v4423
        %v4719 = vunpack.c.l.b16 %v4424
        %v4720 = vunpack.c.l.b16 %v4425
        %v4721 = vunpack.c.l.b16 %v4426
        %v4722 = vunpack.c.l.b16 %v4427
        %v4723 = vunpack.c.l.b16 %v4428
        %v4724 = vunpack.c.l.b16 %v4429
        %v4725 = vunpack.c.l.b16 %v4430
        %v4726 = vunpack.c.l.b16 %v4431
        %v4727 = vunpack.c.l.b16 %v4432
        %v4728 = vunpack.c.l.b16 %v4433
        %v4729 = vunpack.c.l.b16 %v4434
        %v4730 = vunpack.c.l.b16 %v4435
        %v4731 = vunpack.c.l.b16 %v4436
        %v4732 = vunpack.c.l.b16 %v4437
        %v4733 = vunpack.c.l.b16 %v4438
        %v4734 = vunpack.c.l.b16 %v4439
        %v4735 = vunpack.c.l.b16 %v4440
        %v4736 = vunpack.c.l.b16 %v4441
        %v4737 = vunpack.c.l.b16 %v4442
        %v4738 = vunpack.c.l.b16 %v4443
        %v4739 = vunpack.c.l.b16 %v4444
        %v4740 = vunpack.c.l.b16 %v4445
        %v4741 = vunpack.c.l.b16 %v4446
        %v4742 = vunpack.c.l.b16 %v4447
        %v4743 = vunpack.c.l.b16 %v4448
        %v4744 = vunpack.c.l.b16 %v4449
        %v4745 = vunpack.c.l.b16 %v4450
        %v4746 = vunpack.c.l.b16 %v4451
        %v4747 = vunpack.c.l.b16 %v4452
        %v4748 = vunpack.c.l.b16 %v4453
        %v4749 = vunpack.c.l.b16 %v4454
        %v4750 = vunpack.c.l.b16 %v4455
        %v4751 = vunpack.c.l.b16 %v4456
        %v4752 = vunpack.c.l.b16 %v4457
        %v4753 = vunpack.c.l.b16 %v4458
        %v4754 = vunpack.c.l.b16 %v4459
        %v4755 = vunpack.c.l.b16 %v4460
        %v4756 = vunpack.c.l.b16 %v4461
        %v4757 = vunpack.c.l.b16 %v4462
        %v4758 = vunpack.c.l.b16 %v4463
        %v4759 = vunpack.c.l.b16 %v4464
        %v4760 = vunpack.c.l.b16 %v4465
        %v4761 = vunpack.c.l.b16 %v4466
        %v4762 = vunpack.c.l.b16 %v4467
        %v4763 = vunpack.c.l.b16 %v4468
        %v4764 = vunpack.c.l.b16 %v4469
        %v4765 = vunpack.c.l.b16 %v4470
        %v4766 = vunpack.c.l.b16 %v4471
        %v4767 = vunpack.c.l.b16 %v4472
        %v4768 = vunpack.c.l.b16 %v4473
        %v4769 = vunpack.c.l.b16 %v4474
        %v4770 = vunpack.c.l.b16 %v4475
        %v4771 = vunpack.c.l.b16 %v4476
        %v4772 = vunpack.c.l.b16 %v4477
        %v4773 = vunpack.c.l.b16 %v4478
        %v4774 = vunpack.c.l.b16 %v4479
        %v4775 = vunpack.c.l.b16 %v4480
        %v4776 = vunpack.c.l.b16 %v4481
        %v4777 = vunpack.c.l.b16 %v4482
        %v4778 = vunpack.c.l.b16 %v4483
        %v4779 = vunpack.c.l.b16 %v4484
        %v4780 = vunpack.c.l.b16 %v4485
        %v4781 = vunpack.c.l.b16 %v4486
        %v4782 = vunpack.c.l.b16 %v4487
        %v4783 = vunpack.c.l.b16 %v4488
        %v4784 = vunpack.c.l.b16 %v4489
        %v4785 = vunpack.c.l.b16 %v4490
        %v4786 = vunpack.c.l.b16 %v4491
        %v4787 = vunpack.c.l.b16 %v4492
        %v4788 = vunpack.c.l.b16 %v4493
        %v4789 = vunpack.c.l.b16 %v4494
        %v4790 = vunpack.c.l.b16 %v4495
        %v4791 = vunpack.c.l.b16 %v4496
        %v4792 = vunpack.c.l.b16 %v4497
        %v4793 = vunpack.c.l.b16 %v4498
        %v4794 = vunpack.c.l.b16 %v4499
        %v4795 = vunpack.c.l.b16 %v4500
        %v4796 = vunpack.c.l.b16 %v4501
        %v4797 = vpack.c.b16 %v4654, %v4653
        %v4798 = vpack.c.b16 %v4656, %v4655
        %v4799 = vpack.c.b16 %v4658, %v4657
        %v4800 = vpack.c.b16 %v4660, %v4659
        %v4801 = vpack.c.b16 %v4662, %v4661
        %v4802 = vpack.c.b16 %v4664, %v4663
        %v4803 = vpack.c.b16 %v4666, %v4665
        %v4804 = vpack.c.b16 %v4668, %v4667
        %v4805 = vpack.c.b16 %v4670, %v4669
        %v4806 = vpack.c.b16 %v4672, %v4671
        %v4807 = vpack.c.b16 %v4674, %v4673
        %v4808 = vpack.c.b16 %v4676, %v4675
        %v4809 = vpack.c.b16 %v4678, %v4677
        %v4810 = vpack.c.b16 %v4680, %v4679
        %v4811 = vpack.c.b16 %v4682, %v4681
        %v4812 = vpack.c.b16 %v4684, %v4683
        %v4813 = vpack.c.b16 %v4686, %v4685
        %v4814 = vpack.c.b16 %v4688, %v4687
        %v4815 = vpack.c.b16 %v4690, %v4689
        %v4816 = vpack.c.b16 %v4692, %v4691
        %v4817 = vpack.c.b16 %v4694, %v4693
        %v4818 = vpack.c.b16 %v4696, %v4695
        %v4819 = vpack.c.b16 %v4698, %v4697
        %v4820 = vpack.c.b16 %v4700, %v4699
        %v4821 = vpack.c.b16 %v4702, %v4701
        %v4822 = vpack.c.b16 %v4704, %v4703
        %v4823 = vpack.c.b16 %v4706, %v4705
        %v4824 = vpack.c.b16 %v4708, %v4707
        %v4825 = vpack.c.b16 %v4710, %v4709
        %v4826 = vpack.c.b16 %v4712, %v4711
        %v4827 = vpack.c.b16 %v4714, %v4713
        %v4828 = vpack.c.b16 %v4716, %v4715
        %v4829 = vpack.c.b16 %v4718, %v4717
        %v4830 = vpack.c.b16 %v4720, %v4719
        %v4831 = vpack.c.b16 %v4722, %v4721
        %v4832 = vpack.c.b16 %v4724, %v4723
        %v4833 = vpack.c.b16 %v4726, %v4725
        %v4834 = vpack.c.b16 %v4728, %v4727
        %v4835 = vpack.c.b16 %v4730, %v4729
        %v4836 = vpack.c.b16 %v4732, %v4731
        %v4837 = vpack.c.b16 %v4734, %v4733
        %v4838 = vpack.c.b16 %v4736, %v4735
        %v4839 = vpack.c.b16 %v4738, %v4737
        %v4840 = vpack.c.b16 %v4740, %v4739
        %v4841 = vpack.c.b16 %v4742, %v4741
        %v4842 = vpack.c.b16 %v4744, %v4743
        %v4843 = vpack.c.b16 %v4746, %v4745
        %v4844 = vpack.c.b16 %v4748, %v4747
        %v4845 = vpack.c.b16 %v4750, %v4749
        %v4846 = vpack.c.b16 %v4752, %v4751
        %v4847 = vpack.c.b16 %v4754, %v4753
        %v4848 = vpack.c.b16 %v4756, %v4755
        %v4849 = vpack.c.b16 %v4758, %v4757
        %v4850 = vpack.c.b16 %v4760, %v4759
        %v4851 = vpack.c.b16 %v4762, %v4761
        %v4852 = vpack.c.b16 %v4764, %v4763
        %v4853 = vpack.c.b16 %v4766, %v4765
        %v4854 = vpack.c.b16 %v4768, %v4767
        %v4855 = vpack.c.b16 %v4770, %v4769
        %v4856 = vpack.c.b16 %v4772, %v4771
        %v4857 = vpack.c.b16 %v4774, %v4773
        %v4858 = vpack.c.b16 %v4776, %v4775
        %v4859 = vpack.c.b16 %v4778, %v4777
        %v4860 = vpack.c.b16 %v4780, %v4779
        %v4861 = vpack.c.b16 %v4782, %v4781
        %v4862 = vpack.c.b16 %v4784, %v4783
        %v4863 = vpack.c.b16 %v4786, %v4785
        %v4864 = vpack.c.b16 %v4788, %v4787
        %v4865 = vpack.c.b16 %v4790, %v4789
        %v4866 = vpack.c.b16 %v4792, %v4791
        %v4867 = vpack.c.b16 %v4794, %v4793
        %v4868 = vpack.c.b16 %v4796, %v4795
        %4941 = vmatprep.subr.bf16.mxu0 0
        %4942 = vmatpush1.bf16.msra.mxu0 %v4797
        %4943 = vmatprep.subr.bf16.mxu0 0
        %4944 = vmatpush1.bf16.msra.mxu0 %v4798
        %4945 = vmatprep.subr.bf16.mxu0 0
        %4946 = vmatpush1.bf16.msra.mxu0 %v4799
        %4947 = vmatprep.subr.bf16.mxu0 0
        %4948 = vmatpush1.bf16.msra.mxu0 %v4800
        %4949 = vmatprep.subr.bf16.mxu0 0
        %4950 = vmatpush1.bf16.msra.mxu0 %v4801
        %4951 = vmatprep.subr.bf16.mxu0 0
        %4952 = vmatpush1.bf16.msra.mxu0 %v4802
        %4953 = vmatprep.subr.bf16.mxu0 0
        %4954 = vmatpush1.bf16.msra.mxu0 %v4803
        %4955 = vmatprep.subr.bf16.mxu0 0
        %4956 = vmatpush1.bf16.msra.mxu0 %v4804
        %4957 = vmatprep.subr.bf16.mxu0 0
        %4958 = vmatpush1.bf16.msra.mxu0 %v4805
        %4959 = vmatprep.subr.bf16.mxu0 0
        %4960 = vmatpush1.bf16.msra.mxu0 %v4806
        %4961 = vmatprep.subr.bf16.mxu0 0
        %4962 = vmatpush1.bf16.msra.mxu0 %v4807
        %4963 = vmatprep.subr.bf16.mxu0 0
        %4964 = vmatpush1.bf16.msra.mxu0 %v4808
        %4965 = vmatprep.subr.bf16.mxu0 0
        %4966 = vmatpush1.bf16.msra.mxu0 %v4809
        %4967 = vmatprep.subr.bf16.mxu0 0
        %4968 = vmatpush1.bf16.msra.mxu0 %v4810
        %4969 = vmatprep.subr.bf16.mxu0 0
        %4970 = vmatpush1.bf16.msra.mxu0 %v4811
        %4971 = vmatprep.subr.bf16.mxu0 0
        %4972 = vmatpush1.bf16.msra.mxu0 %v4812
        %4973 = vmatprep.mubr.bf16.mxu0 %v4215
        %4974 = vmatmul.mubr.bf16.gmra.mrb[0].mxu0 %v4214
        %v4975 = vpop.f32.mrb[0].mxu0
        %v4976 = vadd.f32 %v4507, %v4975
        %v4977 = vpop.f32.mrb[0].mxu0
        %v4978 = vpop.f32.mrb[0].mxu0
        %v4979 = vadd.f32 %v4507, %v4978
        %v4980 = vpop.f32.mrb[0].mxu0
        %4981 = vmatprep.mubr.bf16.mxu0 %v4224
        %4982 = vmatmul.mubr.bf16.gmra.mrb[0].mxu0 %v4223
        %v4983 = vpop.f32.mrb[0].mxu0
        %v4984 = vadd.f32 %v4507, %v4983
        %v4985 = vpop.f32.mrb[0].mxu0
        %v4986 = vpop.f32.mrb[0].mxu0
        %v4987 = vadd.f32 %v4507, %v4986
        %v4988 = vpop.f32.mrb[0].mxu0
        %4989 = vmatprep.mubr.bf16.mxu0 %v4233
        %4990 = vmatmul.mubr.bf16.gmra.mrb[0].mxu0 %v4232
        %v4991 = vpop.f32.mrb[0].mxu0
        %v4992 = vadd.f32 %v4507, %v4991
        %v4993 = vpop.f32.mrb[0].mxu0
        %v4994 = vpop.f32.mrb[0].mxu0
        %v4995 = vadd.f32 %v4507, %v4994
        %v4996 = vpop.f32.mrb[0].mxu0
        %4997 = vmatprep.mubr.bf16.mxu0 %v4242
        %4998 = vmatmul.mubr.bf16.gmra.mrb[0].mxu0 %v4241
        %v4999 = vpop.f32.mrb[0].mxu0
        %v5000 = vadd.f32 %v4507, %v4999
        %v5001 = vpop.f32.mrb[0].mxu0
        %v5002 = vpop.f32.mrb[0].mxu0
        %v5003 = vadd.f32 %v4507, %v5002
        %v5004 = vpop.f32.mrb[0].mxu0
        %5005 = vmatprep.mubr.bf16.mxu0 %v4251
        %5006 = vmatmul.mubr.bf16.gmra.mrb[0].mxu0 %v4250
        %v5007 = vpop.f32.mrb[0].mxu0
        %v5008 = vadd.f32 %v4507, %v5007
        %v5009 = vpop.f32.mrb[0].mxu0
        %v5010 = vpop.f32.mrb[0].mxu0
        %v5011 = vadd.f32 %v4507, %v5010
        %v5012 = vpop.f32.mrb[0].mxu0
        %5013 = vmatprep.mubr.bf16.mxu0 %v4260
        %5014 = vmatmul.mubr.bf16.gmra.mrb[0].mxu0 %v4259
        %v5015 = vpop.f32.mrb[0].mxu0
        %v5016 = vadd.f32 %v4507, %v5015
        %v5017 = vpop.f32.mrb[0].mxu0
        %v5018 = vpop.f32.mrb[0].mxu0
        %v5019 = vadd.f32 %v4507, %v5018
        %v5020 = vpop.f32.mrb[0].mxu0
        %5021 = vmatprep.mubr.bf16.mxu0 %v4269
        %5022 = vmatmul.mubr.bf16.gmra.mrb[0].mxu0 %v4268
        %v5023 = vpop.f32.mrb[0].mxu0
        %v5024 = vadd.f32 %v4507, %v5023
        %v5025 = vpop.f32.mrb[0].mxu0
        %v5026 = vpop.f32.mrb[0].mxu0
        %v5027 = vadd.f32 %v4507, %v5026
        %v5028 = vpop.f32.mrb[0].mxu0
        %5029 = vmatprep.mubr.bf16.mxu0 %v4278
        %5030 = vmatmul.mubr.bf16.gmra.mrb[0].mxu0 %v4277
        %v5031 = vpop.f32.mrb[0].mxu0
        %v5032 = vadd.f32 %v4507, %v5031
        %v5033 = vpop.f32.mrb[0].mxu0
        %v5034 = vpop.f32.mrb[0].mxu0
        %v5035 = vadd.f32 %v4507, %v5034
        %v5036 = vpop.f32.mrb[0].mxu0
        %5037 = vmatprep.mubr.bf16.mxu0 %v4287
        %5038 = vmatmul.mubr.bf16.gmra.mrb[0].mxu0 %v4286
        %v5039 = vpop.f32.mrb[0].mxu0
        %v5040 = vadd.f32 %v4507, %v5039
        %v5041 = vpop.f32.mrb[0].mxu0
        %v5042 = vpop.f32.mrb[0].mxu0
        %v5043 = vadd.f32 %v4507, %v5042
        %v5044 = vpop.f32.mrb[0].mxu0
        %5045 = vmatprep.mubr.bf16.mxu0 %v4296
        %5046 = vmatmul.mubr.bf16.gmra.mrb[0].mxu0 %v4295
        %v5047 = vpop.f32.mrb[0].mxu0
        %v5048 = vadd.f32 %v4507, %v5047
        %v5049 = vpop.f32.mrb[0].mxu0
        %v5050 = vpop.f32.mrb[0].mxu0
        %v5051 = vadd.f32 %v4507, %v5050
        %v5052 = vpop.f32.mrb[0].mxu0
        %5053 = vmatprep.mubr.bf16.mxu0 %v4305
        %5054 = vmatmul.mubr.bf16.gmra.mrb[0].mxu0 %v4304
        %v5055 = vpop.f32.mrb[0].mxu0
        %v5056 = vadd.f32 %v4507, %v5055
        %v5057 = vpop.f32.mrb[0].mxu0
        %v5058 = vpop.f32.mrb[0].mxu0
        %v5059 = vadd.f32 %v4507, %v5058
        %v5060 = vpop.f32.mrb[0].mxu0
        %5061 = vmatprep.mubr.bf16.mxu0 %v4314
        %5062 = vmatmul.mubr.bf16.gmra.mrb[0].mxu0 %v4313
        %v5063 = vpop.f32.mrb[0].mxu0
        %v5064 = vadd.f32 %v4507, %v5063
        %v5065 = vpop.f32.mrb[0].mxu0
        %v5066 = vpop.f32.mrb[0].mxu0
        %v5067 = vadd.f32 %v4507, %v5066
        %v5068 = vpop.f32.mrb[0].mxu0
        %5069 = vmatprep.mubr.bf16.mxu0 %v4323
        %5070 = vmatmul.mubr.bf16.gmra.mrb[0].mxu0 %v4322
        %v5071 = vpop.f32.mrb[0].mxu0
        %v5072 = vadd.f32 %v4507, %v5071
        %v5073 = vpop.f32.mrb[0].mxu0
        %v5074 = vpop.f32.mrb[0].mxu0
        %v5075 = vadd.f32 %v4507, %v5074
        %v5076 = vpop.f32.mrb[0].mxu0
        %5077 = vmatprep.mubr.bf16.mxu0 %v4332
        %5078 = vmatmul.mubr.bf16.gmra.mrb[0].mxu0 %v4331
        %v5079 = vpop.f32.mrb[0].mxu0
        %v5080 = vadd.f32 %v4507, %v5079
        %v5081 = vpop.f32.mrb[0].mxu0
        %v5082 = vpop.f32.mrb[0].mxu0
        %v5083 = vadd.f32 %v4507, %v5082
        %v5084 = vpop.f32.mrb[0].mxu0
        %5085 = vmatprep.mubr.bf16.mxu0 %v4341
        %5086 = vmatmul.mubr.bf16.gmra.mrb[0].mxu0 %v4340
        %v5087 = vpop.f32.mrb[0].mxu0
        %v5088 = vadd.f32 %v4507, %v5087
        %v5089 = vpop.f32.mrb[0].mxu0
        %v5090 = vpop.f32.mrb[0].mxu0
        %v5091 = vadd.f32 %v4507, %v5090
        %v5092 = vpop.f32.mrb[0].mxu0
        %5093 = vmatprep.mubr.bf16.mxu0 %v4350
        %5094 = vmatmul.mubr.bf16.gmra.mrb[0].mxu0 %v4349
        %v5095 = vpop.f32.mrb[0].mxu0
        %v5096 = vadd.f32 %v4507, %v5095
        %v5097 = vpop.f32.mrb[0].mxu0
        %v5098 = vpop.f32.mrb[0].mxu0
        %v5099 = vadd.f32 %v4507, %v5098
        %v5100 = vpop.f32.mrb[0].mxu0
        %5101 = vdwg.mxu0
        %5102 = vmatprep.subr.bf16.mxu0 0
        %5103 = vmatpush1.bf16.msra.mxu0 %v4813
        %5104 = vmatprep.subr.bf16.mxu0 0
        %5105 = vmatpush1.bf16.msra.mxu0 %v4814
        %5106 = vmatprep.subr.bf16.mxu0 0
        %5107 = vmatpush1.bf16.msra.mxu0 %v4815
        %5108 = vmatprep.subr.bf16.mxu0 0
        %5109 = vmatpush1.bf16.msra.mxu0 %v4816
        %5110 = vmatprep.subr.bf16.mxu0 0
        %5111 = vmatpush1.bf16.msra.mxu0 %v4817
        %5112 = vmatprep.subr.bf16.mxu0 0
        %5113 = vmatpush1.bf16.msra.mxu0 %v4818
        %5114 = vmatprep.subr.bf16.mxu0 0
        %5115 = vmatpush1.bf16.msra.mxu0 %v4819
        %5116 = vmatprep.subr.bf16.mxu0 0
        %5117 = vmatpush1.bf16.msra.mxu0 %v4820
        %5118 = vmatprep.subr.bf16.mxu0 0
        %5119 = vmatpush1.bf16.msra.mxu0 %v4821
        %5120 = vmatprep.subr.bf16.mxu0 0
        %5121 = vmatpush1.bf16.msra.mxu0 %v4822
        %5122 = vmatprep.subr.bf16.mxu0 0
        %5123 = vmatpush1.bf16.msra.mxu0 %v4823
        %5124 = vmatprep.subr.bf16.mxu0 0
        %5125 = vmatpush1.bf16.msra.mxu0 %v4824
        %5126 = vmatprep.subr.bf16.mxu0 0
        %5127 = vmatpush1.bf16.msra.mxu0 %v4825
        %5128 = vmatprep.subr.bf16.mxu0 0
        %5129 = vmatpush1.bf16.msra.mxu0 %v4826
        %5130 = vmatprep.subr.bf16.mxu0 0
        %5131 = vmatpush1.bf16.msra.mxu0 %v4827
        %5132 = vmatprep.subr.bf16.mxu0 0
        %5133 = vmatpush1.bf16.msra.mxu0 %v4828
        %5134 = vmatprep.mubr.bf16.mxu0 %v4217
        %5135 = vmatmul.mubr.bf16.gmra.mrb[0].mxu0 %v4216
        %v5136 = vpop.f32.mrb[0].mxu0
        %v5137 = vadd.f32 %v4976, %v5136
        %v5138 = vpop.f32.mrb[0].mxu0
        %v5139 = vpop.f32.mrb[0].mxu0
        %v5140 = vadd.f32 %v4979, %v5139
        %v5141 = vpop.f32.mrb[0].mxu0
        %5142 = vmatprep.mubr.bf16.mxu0 %v4226
        %5143 = vmatmul.mubr.bf16.gmra.mrb[0].mxu0 %v4225
        %v5144 = vpop.f32.mrb[0].mxu0
        %v5145 = vadd.f32 %v4984, %v5144
        %v5146 = vpop.f32.mrb[0].mxu0
        %v5147 = vpop.f32.mrb[0].mxu0
        %v5148 = vadd.f32 %v4987, %v5147
        %v5149 = vpop.f32.mrb[0].mxu0
        %5150 = vmatprep.mubr.bf16.mxu0 %v4235
        %5151 = vmatmul.mubr.bf16.gmra.mrb[0].mxu0 %v4234
        %v5152 = vpop.f32.mrb[0].mxu0
        %v5153 = vadd.f32 %v4992, %v5152
        %v5154 = vpop.f32.mrb[0].mxu0
        %v5155 = vpop.f32.mrb[0].mxu0
        %v5156 = vadd.f32 %v4995, %v5155
        %v5157 = vpop.f32.mrb[0].mxu0
        %5158 = vmatprep.mubr.bf16.mxu0 %v4244
        %5159 = vmatmul.mubr.bf16.gmra.mrb[0].mxu0 %v4243
        %v5160 = vpop.f32.mrb[0].mxu0
        %v5161 = vadd.f32 %v5000, %v5160
        %v5162 = vpop.f32.mrb[0].mxu0
        %v5163 = vpop.f32.mrb[0].mxu0
        %v5164 = vadd.f32 %v5003, %v5163
        %v5165 = vpop.f32.mrb[0].mxu0
        %5166 = vmatprep.mubr.bf16.mxu0 %v4253
        %5167 = vmatmul.mubr.bf16.gmra.mrb[0].mxu0 %v4252
        %v5168 = vpop.f32.mrb[0].mxu0
        %v5169 = vadd.f32 %v5008, %v5168
        %v5170 = vpop.f32.mrb[0].mxu0
        %v5171 = vpop.f32.mrb[0].mxu0
        %v5172 = vadd.f32 %v5011, %v5171
        %v5173 = vpop.f32.mrb[0].mxu0
        %5174 = vmatprep.mubr.bf16.mxu0 %v4262
        %5175 = vmatmul.mubr.bf16.gmra.mrb[0].mxu0 %v4261
        %v5176 = vpop.f32.mrb[0].mxu0
        %v5177 = vadd.f32 %v5016, %v5176
        %v5178 = vpop.f32.mrb[0].mxu0
        %v5179 = vpop.f32.mrb[0].mxu0
        %v5180 = vadd.f32 %v5019, %v5179
        %v5181 = vpop.f32.mrb[0].mxu0
        %5182 = vmatprep.mubr.bf16.mxu0 %v4271
        %5183 = vmatmul.mubr.bf16.gmra.mrb[0].mxu0 %v4270
        %v5184 = vpop.f32.mrb[0].mxu0
        %v5185 = vadd.f32 %v5024, %v5184
        %v5186 = vpop.f32.mrb[0].mxu0
        %v5187 = vpop.f32.mrb[0].mxu0
        %v5188 = vadd.f32 %v5027, %v5187
        %v5189 = vpop.f32.mrb[0].mxu0
        %5190 = vmatprep.mubr.bf16.mxu0 %v4280
        %5191 = vmatmul.mubr.bf16.gmra.mrb[0].mxu0 %v4279
        %v5192 = vpop.f32.mrb[0].mxu0
        %v5193 = vadd.f32 %v5032, %v5192
        %v5194 = vpop.f32.mrb[0].mxu0
        %v5195 = vpop.f32.mrb[0].mxu0
        %v5196 = vadd.f32 %v5035, %v5195
        %v5197 = vpop.f32.mrb[0].mxu0
        %5198 = vmatprep.mubr.bf16.mxu0 %v4289
        %5199 = vmatmul.mubr.bf16.gmra.mrb[0].mxu0 %v4288
        %v5200 = vpop.f32.mrb[0].mxu0
        %v5201 = vadd.f32 %v5040, %v5200
        %v5202 = vpop.f32.mrb[0].mxu0
        %v5203 = vpop.f32.mrb[0].mxu0
        %v5204 = vadd.f32 %v5043, %v5203
        %v5205 = vpop.f32.mrb[0].mxu0
        %5206 = vmatprep.mubr.bf16.mxu0 %v4298
        %5207 = vmatmul.mubr.bf16.gmra.mrb[0].mxu0 %v4297
        %v5208 = vpop.f32.mrb[0].mxu0
        %v5209 = vadd.f32 %v5048, %v5208
        %v5210 = vpop.f32.mrb[0].mxu0
        %v5211 = vpop.f32.mrb[0].mxu0
        %v5212 = vadd.f32 %v5051, %v5211
        %v5213 = vpop.f32.mrb[0].mxu0
        %5214 = vmatprep.mubr.bf16.mxu0 %v4307
        %5215 = vmatmul.mubr.bf16.gmra.mrb[0].mxu0 %v4306
        %v5216 = vpop.f32.mrb[0].mxu0
        %v5217 = vadd.f32 %v5056, %v5216
        %v5218 = vpop.f32.mrb[0].mxu0
        %v5219 = vpop.f32.mrb[0].mxu0
        %v5220 = vadd.f32 %v5059, %v5219
        %v5221 = vpop.f32.mrb[0].mxu0
        %5222 = vmatprep.mubr.bf16.mxu0 %v4316
        %5223 = vmatmul.mubr.bf16.gmra.mrb[0].mxu0 %v4315
        %v5224 = vpop.f32.mrb[0].mxu0
        %v5225 = vadd.f32 %v5064, %v5224
        %v5226 = vpop.f32.mrb[0].mxu0
        %v5227 = vpop.f32.mrb[0].mxu0
        %v5228 = vadd.f32 %v5067, %v5227
        %v5229 = vpop.f32.mrb[0].mxu0
        %5230 = vmatprep.mubr.bf16.mxu0 %v4325
        %5231 = vmatmul.mubr.bf16.gmra.mrb[0].mxu0 %v4324
        %v5232 = vpop.f32.mrb[0].mxu0
        %v5233 = vadd.f32 %v5072, %v5232
        %v5234 = vpop.f32.mrb[0].mxu0
        %v5235 = vpop.f32.mrb[0].mxu0
        %v5236 = vadd.f32 %v5075, %v5235
        %v5237 = vpop.f32.mrb[0].mxu0
        %5238 = vmatprep.mubr.bf16.mxu0 %v4334
        %5239 = vmatmul.mubr.bf16.gmra.mrb[0].mxu0 %v4333
        %v5240 = vpop.f32.mrb[0].mxu0
        %v5241 = vadd.f32 %v5080, %v5240
        %v5242 = vpop.f32.mrb[0].mxu0
        %v5243 = vpop.f32.mrb[0].mxu0
        %v5244 = vadd.f32 %v5083, %v5243
        %v5245 = vpop.f32.mrb[0].mxu0
        %5246 = vmatprep.mubr.bf16.mxu0 %v4343
        %5247 = vmatmul.mubr.bf16.gmra.mrb[0].mxu0 %v4342
        %v5248 = vpop.f32.mrb[0].mxu0
        %v5249 = vadd.f32 %v5088, %v5248
        %v5250 = vpop.f32.mrb[0].mxu0
        %v5251 = vpop.f32.mrb[0].mxu0
        %v5252 = vadd.f32 %v5091, %v5251
        %v5253 = vpop.f32.mrb[0].mxu0
        %5254 = vmatprep.mubr.bf16.mxu0 %v4352
        %5255 = vmatmul.mubr.bf16.gmra.mrb[0].mxu0 %v4351
        %v5256 = vpop.f32.mrb[0].mxu0
        %v5257 = vadd.f32 %v5096, %v5256
        %v5258 = vpop.f32.mrb[0].mxu0
        %v5259 = vpop.f32.mrb[0].mxu0
        %v5260 = vadd.f32 %v5099, %v5259
        %v5261 = vpop.f32.mrb[0].mxu0
        %5262 = vdwg.mxu0
        %5263 = vmatprep.subr.bf16.mxu0 0
        %5264 = vmatpush1.bf16.msra.mxu0 %v4829
        %5265 = vmatprep.subr.bf16.mxu0 0
        %5266 = vmatpush1.bf16.msra.mxu0 %v4830
        %5267 = vmatprep.subr.bf16.mxu0 0
        %5268 = vmatpush1.bf16.msra.mxu0 %v4831
        %5269 = vmatprep.subr.bf16.mxu0 0
        %5270 = vmatpush1.bf16.msra.mxu0 %v4832
        %5271 = vmatprep.subr.bf16.mxu0 0
        %5272 = vmatpush1.bf16.msra.mxu0 %v4833
        %5273 = vmatprep.subr.bf16.mxu0 0
        %5274 = vmatpush1.bf16.msra.mxu0 %v4834
        %5275 = vmatprep.subr.bf16.mxu0 0
        %5276 = vmatpush1.bf16.msra.mxu0 %v4835
        %5277 = vmatprep.subr.bf16.mxu0 0
        %5278 = vmatpush1.bf16.msra.mxu0 %v4836
        %5279 = vmatprep.subr.bf16.mxu0 0
        %5280 = vmatpush1.bf16.msra.mxu0 %v4837
        %5281 = vmatprep.subr.bf16.mxu0 0
        %5282 = vmatpush1.bf16.msra.mxu0 %v4838
        %5283 = vmatprep.subr.bf16.mxu0 0
        %5284 = vmatpush1.bf16.msra.mxu0 %v4839
        %5285 = vmatprep.subr.bf16.mxu0 0
        %5286 = vmatpush1.bf16.msra.mxu0 %v4840
        %5287 = vmatprep.subr.bf16.mxu0 0
        %5288 = vmatpush1.bf16.msra.mxu0 %v4841
        %5289 = vmatprep.subr.bf16.mxu0 0
        %5290 = vmatpush1.bf16.msra.mxu0 %v4842
        %5291 = vmatprep.subr.bf16.mxu0 0
        %5292 = vmatpush1.bf16.msra.mxu0 %v4843
        %5293 = vmatprep.subr.bf16.mxu0 0
        %5294 = vmatpush1.bf16.msra.mxu0 %v4844
        %5295 = vmatprep.mubr.bf16.mxu0 %v4219
        %5296 = vmatmul.mubr.bf16.gmra.mrb[0].mxu0 %v4218
        %v5297 = vpop.f32.mrb[0].mxu0
        %v5298 = vadd.f32 %v5137, %v5297
        %v5299 = vpop.f32.mrb[0].mxu0
        %v5300 = vpop.f32.mrb[0].mxu0
        %v5301 = vadd.f32 %v5140, %v5300
        %v5302 = vpop.f32.mrb[0].mxu0
        %5303 = vmatprep.mubr.bf16.mxu0 %v4228
        %5304 = vmatmul.mubr.bf16.gmra.mrb[0].mxu0 %v4227
        %v5305 = vpop.f32.mrb[0].mxu0
        %v5306 = vadd.f32 %v5145, %v5305
        %v5307 = vpop.f32.mrb[0].mxu0
        %v5308 = vpop.f32.mrb[0].mxu0
        %v5309 = vadd.f32 %v5148, %v5308
        %v5310 = vpop.f32.mrb[0].mxu0
        %5311 = vmatprep.mubr.bf16.mxu0 %v4237
        %5312 = vmatmul.mubr.bf16.gmra.mrb[0].mxu0 %v4236
        %v5313 = vpop.f32.mrb[0].mxu0
        %v5314 = vadd.f32 %v5153, %v5313
        %v5315 = vpop.f32.mrb[0].mxu0
        %v5316 = vpop.f32.mrb[0].mxu0
        %v5317 = vadd.f32 %v5156, %v5316
        %v5318 = vpop.f32.mrb[0].mxu0
        %5319 = vmatprep.mubr.bf16.mxu0 %v4246
        %5320 = vmatmul.mubr.bf16.gmra.mrb[0].mxu0 %v4245
        %v5321 = vpop.f32.mrb[0].mxu0
        %v5322 = vadd.f32 %v5161, %v5321
        %v5323 = vpop.f32.mrb[0].mxu0
        %v5324 = vpop.f32.mrb[0].mxu0
        %v5325 = vadd.f32 %v5164, %v5324
        %v5326 = vpop.f32.mrb[0].mxu0
        %5327 = vmatprep.mubr.bf16.mxu0 %v4255
        %5328 = vmatmul.mubr.bf16.gmra.mrb[0].mxu0 %v4254
        %v5329 = vpop.f32.mrb[0].mxu0
        %v5330 = vadd.f32 %v5169, %v5329
        %v5331 = vpop.f32.mrb[0].mxu0
        %v5332 = vpop.f32.mrb[0].mxu0
        %v5333 = vadd.f32 %v5172, %v5332
        %v5334 = vpop.f32.mrb[0].mxu0
        %5335 = vmatprep.mubr.bf16.mxu0 %v4264
        %5336 = vmatmul.mubr.bf16.gmra.mrb[0].mxu0 %v4263
        %v5337 = vpop.f32.mrb[0].mxu0
        %v5338 = vadd.f32 %v5177, %v5337
        %v5339 = vpop.f32.mrb[0].mxu0
        %v5340 = vpop.f32.mrb[0].mxu0
        %v5341 = vadd.f32 %v5180, %v5340
        %v5342 = vpop.f32.mrb[0].mxu0
        %5343 = vmatprep.mubr.bf16.mxu0 %v4273
        %5344 = vmatmul.mubr.bf16.gmra.mrb[0].mxu0 %v4272
        %v5345 = vpop.f32.mrb[0].mxu0
        %v5346 = vadd.f32 %v5185, %v5345
        %v5347 = vpop.f32.mrb[0].mxu0
        %v5348 = vpop.f32.mrb[0].mxu0
        %v5349 = vadd.f32 %v5188, %v5348
        %v5350 = vpop.f32.mrb[0].mxu0
        %5351 = vmatprep.mubr.bf16.mxu0 %v4282
        %5352 = vmatmul.mubr.bf16.gmra.mrb[0].mxu0 %v4281
        %v5353 = vpop.f32.mrb[0].mxu0
        %v5354 = vadd.f32 %v5193, %v5353
        %v5355 = vpop.f32.mrb[0].mxu0
        %v5356 = vpop.f32.mrb[0].mxu0
        %v5357 = vadd.f32 %v5196, %v5356
        %v5358 = vpop.f32.mrb[0].mxu0
        %5359 = vmatprep.mubr.bf16.mxu0 %v4291
        %5360 = vmatmul.mubr.bf16.gmra.mrb[0].mxu0 %v4290
        %v5361 = vpop.f32.mrb[0].mxu0
        %v5362 = vadd.f32 %v5201, %v5361
        %v5363 = vpop.f32.mrb[0].mxu0
        %v5364 = vpop.f32.mrb[0].mxu0
        %v5365 = vadd.f32 %v5204, %v5364
        %v5366 = vpop.f32.mrb[0].mxu0
        %5367 = vmatprep.mubr.bf16.mxu0 %v4300
        %5368 = vmatmul.mubr.bf16.gmra.mrb[0].mxu0 %v4299
        %v5369 = vpop.f32.mrb[0].mxu0
        %v5370 = vadd.f32 %v5209, %v5369
        %v5371 = vpop.f32.mrb[0].mxu0
        %v5372 = vpop.f32.mrb[0].mxu0
        %v5373 = vadd.f32 %v5212, %v5372
        %v5374 = vpop.f32.mrb[0].mxu0
        %5375 = vmatprep.mubr.bf16.mxu0 %v4309
        %5376 = vmatmul.mubr.bf16.gmra.mrb[0].mxu0 %v4308
        %v5377 = vpop.f32.mrb[0].mxu0
        %v5378 = vadd.f32 %v5217, %v5377
        %v5379 = vpop.f32.mrb[0].mxu0
        %v5380 = vpop.f32.mrb[0].mxu0
        %v5381 = vadd.f32 %v5220, %v5380
        %v5382 = vpop.f32.mrb[0].mxu0
        %5383 = vmatprep.mubr.bf16.mxu0 %v4318
        %5384 = vmatmul.mubr.bf16.gmra.mrb[0].mxu0 %v4317
        %v5385 = vpop.f32.mrb[0].mxu0
        %v5386 = vadd.f32 %v5225, %v5385
        %v5387 = vpop.f32.mrb[0].mxu0
        %v5388 = vpop.f32.mrb[0].mxu0
        %v5389 = vadd.f32 %v5228, %v5388
        %v5390 = vpop.f32.mrb[0].mxu0
        %5391 = vmatprep.mubr.bf16.mxu0 %v4327
        %5392 = vmatmul.mubr.bf16.gmra.mrb[0].mxu0 %v4326
        %v5393 = vpop.f32.mrb[0].mxu0
        %v5394 = vadd.f32 %v5233, %v5393
        %v5395 = vpop.f32.mrb[0].mxu0
        %v5396 = vpop.f32.mrb[0].mxu0
        %v5397 = vadd.f32 %v5236, %v5396
        %v5398 = vpop.f32.mrb[0].mxu0
        %5399 = vmatprep.mubr.bf16.mxu0 %v4336
        %5400 = vmatmul.mubr.bf16.gmra.mrb[0].mxu0 %v4335
        %v5401 = vpop.f32.mrb[0].mxu0
        %v5402 = vadd.f32 %v5241, %v5401
        %v5403 = vpop.f32.mrb[0].mxu0
        %v5404 = vpop.f32.mrb[0].mxu0
        %v5405 = vadd.f32 %v5244, %v5404
        %v5406 = vpop.f32.mrb[0].mxu0
        %5407 = vmatprep.mubr.bf16.mxu0 %v4345
        %5408 = vmatmul.mubr.bf16.gmra.mrb[0].mxu0 %v4344
        %v5409 = vpop.f32.mrb[0].mxu0
        %v5410 = vadd.f32 %v5249, %v5409
        %v5411 = vpop.f32.mrb[0].mxu0
        %v5412 = vpop.f32.mrb[0].mxu0
        %v5413 = vadd.f32 %v5252, %v5412
        %v5414 = vpop.f32.mrb[0].mxu0
        %5415 = vmatprep.mubr.bf16.mxu0 %v4354
        %5416 = vmatmul.mubr.bf16.gmra.mrb[0].mxu0 %v4353
        %v5417 = vpop.f32.mrb[0].mxu0
        %v5418 = vadd.f32 %v5257, %v5417
        %v5419 = vpop.f32.mrb[0].mxu0
        %v5420 = vpop.f32.mrb[0].mxu0
        %v5421 = vadd.f32 %v5260, %v5420
        %v5422 = vpop.f32.mrb[0].mxu0
        %5423 = vdwg.mxu0
        %5424 = vmatprep.subr.bf16.mxu0 0
        %5425 = vmatpush1.bf16.msra.mxu0 %v4845
        %5426 = vmatprep.subr.bf16.mxu0 0
        %5427 = vmatpush1.bf16.msra.mxu0 %v4846
        %5428 = vmatprep.subr.bf16.mxu0 0
        %5429 = vmatpush1.bf16.msra.mxu0 %v4847
        %5430 = vmatprep.subr.bf16.mxu0 0
        %5431 = vmatpush1.bf16.msra.mxu0 %v4848
        %5432 = vmatprep.subr.bf16.mxu0 0
        %5433 = vmatpush1.bf16.msra.mxu0 %v4849
        %5434 = vmatprep.subr.bf16.mxu0 0
        %5435 = vmatpush1.bf16.msra.mxu0 %v4850
        %5436 = vmatprep.subr.bf16.mxu0 0
        %5437 = vmatpush1.bf16.msra.mxu0 %v4851
        %5438 = vmatprep.subr.bf16.mxu0 0
        %5439 = vmatpush1.bf16.msra.mxu0 %v4852
        %5440 = vmatprep.subr.bf16.mxu0 0
        %5441 = vmatpush1.bf16.msra.mxu0 %v4853
        %5442 = vmatprep.subr.bf16.mxu0 0
        %5443 = vmatpush1.bf16.msra.mxu0 %v4854
        %5444 = vmatprep.subr.bf16.mxu0 0
        %5445 = vmatpush1.bf16.msra.mxu0 %v4855
        %5446 = vmatprep.subr.bf16.mxu0 0
        %5447 = vmatpush1.bf16.msra.mxu0 %v4856
        %5448 = vmatprep.subr.bf16.mxu0 0
        %5449 = vmatpush1.bf16.msra.mxu0 %v4857
        %5450 = vmatprep.subr.bf16.mxu0 0
        %5451 = vmatpush1.bf16.msra.mxu0 %v4858
        %5452 = vmatprep.subr.bf16.mxu0 0
        %5453 = vmatpush1.bf16.msra.mxu0 %v4859
        %5454 = vmatprep.subr.bf16.mxu0 0
        %5455 = vmatpush1.bf16.msra.mxu0 %v4860
        %5456 = vmatprep.mubr.bf16.mxu0 %v4221
        %5457 = vmatmul.mubr.bf16.gmra.mrb[0].mxu0 %v4220
        %v5458 = vpop.f32.mrb[0].mxu0
        %v5459 = vadd.f32 %v5298, %v5458
        %v5460 = vpop.f32.mrb[0].mxu0
        %v5461 = vpop.f32.mrb[0].mxu0
        %v5462 = vadd.f32 %v5301, %v5461
        %v5463 = vpop.f32.mrb[0].mxu0
        %5464 = vmatprep.mubr.bf16.mxu0 %v4230
        %5465 = vmatmul.mubr.bf16.gmra.mrb[0].mxu0 %v4229
        %v5466 = vpop.f32.mrb[0].mxu0
        %v5467 = vadd.f32 %v5306, %v5466
        %v5468 = vpop.f32.mrb[0].mxu0
        %v5469 = vpop.f32.mrb[0].mxu0
        %v5470 = vadd.f32 %v5309, %v5469
        %v5471 = vpop.f32.mrb[0].mxu0
        %5472 = vmatprep.mubr.bf16.mxu0 %v4239
        %5473 = vmatmul.mubr.bf16.gmra.mrb[0].mxu0 %v4238
        %v5474 = vpop.f32.mrb[0].mxu0
        %v5475 = vadd.f32 %v5314, %v5474
        %v5476 = vpop.f32.mrb[0].mxu0
        %v5477 = vpop.f32.mrb[0].mxu0
        %v5478 = vadd.f32 %v5317, %v5477
        %v5479 = vpop.f32.mrb[0].mxu0
        %5480 = vmatprep.mubr.bf16.mxu0 %v4248
        %5481 = vmatmul.mubr.bf16.gmra.mrb[0].mxu0 %v4247
        %v5482 = vpop.f32.mrb[0].mxu0
        %v5483 = vadd.f32 %v5322, %v5482
        %v5484 = vpop.f32.mrb[0].mxu0
        %v5485 = vpop.f32.mrb[0].mxu0
        %v5486 = vadd.f32 %v5325, %v5485
        %v5487 = vpop.f32.mrb[0].mxu0
        %5488 = vmatprep.mubr.bf16.mxu0 %v4257
        %5489 = vmatmul.mubr.bf16.gmra.mrb[0].mxu0 %v4256
        %v5490 = vpop.f32.mrb[0].mxu0
        %v5491 = vadd.f32 %v5330, %v5490
        %v5492 = vpop.f32.mrb[0].mxu0
        %v5493 = vpop.f32.mrb[0].mxu0
        %v5494 = vadd.f32 %v5333, %v5493
        %v5495 = vpop.f32.mrb[0].mxu0
        %5496 = vmatprep.mubr.bf16.mxu0 %v4266
        %5497 = vmatmul.mubr.bf16.gmra.mrb[0].mxu0 %v4265
        %v5498 = vpop.f32.mrb[0].mxu0
        %v5499 = vadd.f32 %v5338, %v5498
        %v5500 = vpop.f32.mrb[0].mxu0
        %v5501 = vpop.f32.mrb[0].mxu0
        %v5502 = vadd.f32 %v5341, %v5501
        %v5503 = vpop.f32.mrb[0].mxu0
        %5504 = vmatprep.mubr.bf16.mxu0 %v4275
        %5505 = vmatmul.mubr.bf16.gmra.mrb[0].mxu0 %v4274
        %v5506 = vpop.f32.mrb[0].mxu0
        %v5507 = vadd.f32 %v5346, %v5506
        %v5508 = vpop.f32.mrb[0].mxu0
        %v5509 = vpop.f32.mrb[0].mxu0
        %v5510 = vadd.f32 %v5349, %v5509
        %v5511 = vpop.f32.mrb[0].mxu0
        %5512 = vmatprep.mubr.bf16.mxu0 %v4284
        %5513 = vmatmul.mubr.bf16.gmra.mrb[0].mxu0 %v4283
        %v5514 = vpop.f32.mrb[0].mxu0
        %v5515 = vadd.f32 %v5354, %v5514
        %v5516 = vpop.f32.mrb[0].mxu0
        %v5517 = vpop.f32.mrb[0].mxu0
        %v5518 = vadd.f32 %v5357, %v5517
        %v5519 = vpop.f32.mrb[0].mxu0
        %5520 = vmatprep.mubr.bf16.mxu0 %v4293
        %5521 = vmatmul.mubr.bf16.gmra.mrb[0].mxu0 %v4292
        %v5522 = vpop.f32.mrb[0].mxu0
        %v5523 = vadd.f32 %v5362, %v5522
        %v5524 = vpop.f32.mrb[0].mxu0
        %v5525 = vpop.f32.mrb[0].mxu0
        %v5526 = vadd.f32 %v5365, %v5525
        %v5527 = vpop.f32.mrb[0].mxu0
        %5528 = vmatprep.mubr.bf16.mxu0 %v4302
        %5529 = vmatmul.mubr.bf16.gmra.mrb[0].mxu0 %v4301
        %v5530 = vpop.f32.mrb[0].mxu0
        %v5531 = vadd.f32 %v5370, %v5530
        %v5532 = vpop.f32.mrb[0].mxu0
        %v5533 = vpop.f32.mrb[0].mxu0
        %v5534 = vadd.f32 %v5373, %v5533
        %v5535 = vpop.f32.mrb[0].mxu0
        %5536 = vmatprep.mubr.bf16.mxu0 %v4311
        %5537 = vmatmul.mubr.bf16.gmra.mrb[0].mxu0 %v4310
        %v5538 = vpop.f32.mrb[0].mxu0
        %v5539 = vadd.f32 %v5378, %v5538
        %v5540 = vpop.f32.mrb[0].mxu0
        %v5541 = vpop.f32.mrb[0].mxu0
        %v5542 = vadd.f32 %v5381, %v5541
        %v5543 = vpop.f32.mrb[0].mxu0
        %5544 = vmatprep.mubr.bf16.mxu0 %v4320
        %5545 = vmatmul.mubr.bf16.gmra.mrb[0].mxu0 %v4319
        %v5546 = vpop.f32.mrb[0].mxu0
        %v5547 = vadd.f32 %v5386, %v5546
        %v5548 = vpop.f32.mrb[0].mxu0
        %v5549 = vpop.f32.mrb[0].mxu0
        %v5550 = vadd.f32 %v5389, %v5549
        %v5551 = vpop.f32.mrb[0].mxu0
        %5552 = vmatprep.mubr.bf16.mxu0 %v4329
        %5553 = vmatmul.mubr.bf16.gmra.mrb[0].mxu0 %v4328
        %v5554 = vpop.f32.mrb[0].mxu0
        %v5555 = vadd.f32 %v5394, %v5554
        %v5556 = vpop.f32.mrb[0].mxu0
        %v5557 = vpop.f32.mrb[0].mxu0
        %v5558 = vadd.f32 %v5397, %v5557
        %v5559 = vpop.f32.mrb[0].mxu0
        %5560 = vmatprep.mubr.bf16.mxu0 %v4338
        %5561 = vmatmul.mubr.bf16.gmra.mrb[0].mxu0 %v4337
        %v5562 = vpop.f32.mrb[0].mxu0
        %v5563 = vadd.f32 %v5402, %v5562
        %v5564 = vpop.f32.mrb[0].mxu0
        %v5565 = vpop.f32.mrb[0].mxu0
        %v5566 = vadd.f32 %v5405, %v5565
        %v5567 = vpop.f32.mrb[0].mxu0
        %5568 = vmatprep.mubr.bf16.mxu0 %v4347
        %5569 = vmatmul.mubr.bf16.gmra.mrb[0].mxu0 %v4346
        %v5570 = vpop.f32.mrb[0].mxu0
        %v5571 = vadd.f32 %v5410, %v5570
        %v5572 = vpop.f32.mrb[0].mxu0
        %v5573 = vpop.f32.mrb[0].mxu0
        %v5574 = vadd.f32 %v5413, %v5573
        %v5575 = vpop.f32.mrb[0].mxu0
        %5576 = vmatprep.mubr.bf16.mxu0 %v4356
        %5577 = vmatmul.mubr.bf16.gmra.mrb[0].mxu0 %v4355
        %v5578 = vpop.f32.mrb[0].mxu0
        %v5579 = vadd.f32 %v5418, %v5578
        %v5580 = vpop.f32.mrb[0].mxu0
        %v5581 = vpop.f32.mrb[0].mxu0
        %v5582 = vadd.f32 %v5421, %v5581
        %v5583 = vpop.f32.mrb[0].mxu0
        %5584 = vdwg.mxu0
        %5585 = vmatprep.subr.bf16.mxu0 0
        %5586 = vmatpush1.bf16.msra.mxu0 %v4861
        %5587 = vmatprep.subr.bf16.mxu0 0
        %5588 = vmatpush1.bf16.msra.mxu0 %v4862
        %5589 = vmatprep.subr.bf16.mxu0 0
        %5590 = vmatpush1.bf16.msra.mxu0 %v4863
        %5591 = vmatprep.subr.bf16.mxu0 0
        %5592 = vmatpush1.bf16.msra.mxu0 %v4864
        %5593 = vmatprep.subr.bf16.mxu0 0
        %5594 = vmatpush1.bf16.msra.mxu0 %v4865
        %5595 = vmatprep.subr.bf16.mxu0 0
        %5596 = vmatpush1.bf16.msra.mxu0 %v4866
        %5597 = vmatprep.subr.bf16.mxu0 0
        %5598 = vmatpush1.bf16.msra.mxu0 %v4867
        %5599 = vmatprep.subr.bf16.mxu0 0
        %5600 = vmatpush1.bf16.msra.mxu0 %v4868
        %5601 = vmatprep.subr.bf16.mxu0 0
        %5602 = vmatpush1.bf16.msra.mxu0 0
        %5603 = vmatprep.subr.bf16.mxu0 0
        %5604 = vmatpush1.bf16.msra.mxu0 0
        %5605 = vmatprep.subr.bf16.mxu0 0
        %5606 = vmatpush1.bf16.msra.mxu0 0
        %5607 = vmatprep.subr.bf16.mxu0 0
        %5608 = vmatpush1.bf16.msra.mxu0 0
        %5609 = vmatprep.subr.bf16.mxu0 0
        %5610 = vmatpush1.bf16.msra.mxu0 0
        %5611 = vmatprep.subr.bf16.mxu0 0
        %5612 = vmatpush1.bf16.msra.mxu0 0
        %5613 = vmatprep.subr.bf16.mxu0 0
        %5614 = vmatpush1.bf16.msra.mxu0 0
        %5615 = vmatprep.subr.bf16.mxu0 0
        %5616 = vmatpush1.bf16.msra.mxu0 0
        %5617 = vmatprep.mubr.bf16.mxu0 0
        %5618 = vmatmul.mubr.bf16.gmra.mrb[0].mxu0 %v4222
        %v5619 = vpop.f32.mrb[0].mxu0
        %v5620 = vadd.f32 %v5459, %v5619
        %v5621 = vpop.f32.mrb[0].mxu0
        %v5622 = vpop.f32.mrb[0].mxu0
        %v5623 = vadd.f32 %v5462, %v5622
        %v5624 = vpop.f32.mrb[0].mxu0
        %5625 = vmatprep.mubr.bf16.mxu0 0
        %5626 = vmatmul.mubr.bf16.gmra.mrb[0].mxu0 %v4231
        %v5627 = vpop.f32.mrb[0].mxu0
        %v5628 = vadd.f32 %v5467, %v5627
        %v5629 = vpop.f32.mrb[0].mxu0
        %v5630 = vpop.f32.mrb[0].mxu0
        %v5631 = vadd.f32 %v5470, %v5630
        %v5632 = vpop.f32.mrb[0].mxu0
        %5633 = vmatprep.mubr.bf16.mxu0 0
        %5634 = vmatmul.mubr.bf16.gmra.mrb[0].mxu0 %v4240
        %v5635 = vpop.f32.mrb[0].mxu0
        %v5636 = vadd.f32 %v5475, %v5635
        %v5637 = vpop.f32.mrb[0].mxu0
        %v5638 = vpop.f32.mrb[0].mxu0
        %v5639 = vadd.f32 %v5478, %v5638
        %v5640 = vpop.f32.mrb[0].mxu0
        %5641 = vmatprep.mubr.bf16.mxu0 0
        %5642 = vmatmul.mubr.bf16.gmra.mrb[0].mxu0 %v4249
        %v5643 = vpop.f32.mrb[0].mxu0
        %v5644 = vadd.f32 %v5483, %v5643
        %v5645 = vpop.f32.mrb[0].mxu0
        %v5646 = vpop.f32.mrb[0].mxu0
        %v5647 = vadd.f32 %v5486, %v5646
        %v5648 = vpop.f32.mrb[0].mxu0
        %5649 = vmatprep.mubr.bf16.mxu0 0
        %5650 = vmatmul.mubr.bf16.gmra.mrb[0].mxu0 %v4258
        %v5651 = vpop.f32.mrb[0].mxu0
        %v5652 = vadd.f32 %v5491, %v5651
        %v5653 = vpop.f32.mrb[0].mxu0
        %v5654 = vpop.f32.mrb[0].mxu0
        %v5655 = vadd.f32 %v5494, %v5654
        %v5656 = vpop.f32.mrb[0].mxu0
        %5657 = vmatprep.mubr.bf16.mxu0 0
        %5658 = vmatmul.mubr.bf16.gmra.mrb[0].mxu0 %v4267
        %v5659 = vpop.f32.mrb[0].mxu0
        %v5660 = vadd.f32 %v5499, %v5659
        %v5661 = vpop.f32.mrb[0].mxu0
        %v5662 = vpop.f32.mrb[0].mxu0
        %v5663 = vadd.f32 %v5502, %v5662
        %v5664 = vpop.f32.mrb[0].mxu0
        %5665 = vmatprep.mubr.bf16.mxu0 0
        %5666 = vmatmul.mubr.bf16.gmra.mrb[0].mxu0 %v4276
        %v5667 = vpop.f32.mrb[0].mxu0
        %v5668 = vadd.f32 %v5507, %v5667
        %v5669 = vpop.f32.mrb[0].mxu0
        %v5670 = vpop.f32.mrb[0].mxu0
        %v5671 = vadd.f32 %v5510, %v5670
        %v5672 = vpop.f32.mrb[0].mxu0
        %5673 = vmatprep.mubr.bf16.mxu0 0
        %5674 = vmatmul.mubr.bf16.gmra.mrb[0].mxu0 %v4285
        %v5675 = vpop.f32.mrb[0].mxu0
        %v5676 = vadd.f32 %v5515, %v5675
        %v5677 = vpop.f32.mrb[0].mxu0
        %v5678 = vpop.f32.mrb[0].mxu0
        %v5679 = vadd.f32 %v5518, %v5678
        %v5680 = vpop.f32.mrb[0].mxu0
        %5681 = vmatprep.mubr.bf16.mxu0 0
        %5682 = vmatmul.mubr.bf16.gmra.mrb[0].mxu0 %v4294
        %v5683 = vpop.f32.mrb[0].mxu0
        %v5684 = vadd.f32 %v5523, %v5683
        %v5685 = vpop.f32.mrb[0].mxu0
        %v5686 = vpop.f32.mrb[0].mxu0
        %v5687 = vadd.f32 %v5526, %v5686
        %v5688 = vpop.f32.mrb[0].mxu0
        %5689 = vmatprep.mubr.bf16.mxu0 0
        %5690 = vmatmul.mubr.bf16.gmra.mrb[0].mxu0 %v4303
        %v5691 = vpop.f32.mrb[0].mxu0
        %v5692 = vadd.f32 %v5531, %v5691
        %v5693 = vpop.f32.mrb[0].mxu0
        %v5694 = vpop.f32.mrb[0].mxu0
        %v5695 = vadd.f32 %v5534, %v5694
        %v5696 = vpop.f32.mrb[0].mxu0
        %5697 = vmatprep.mubr.bf16.mxu0 0
        %5698 = vmatmul.mubr.bf16.gmra.mrb[0].mxu0 %v4312
        %v5699 = vpop.f32.mrb[0].mxu0
        %v5700 = vadd.f32 %v5539, %v5699
        %v5701 = vpop.f32.mrb[0].mxu0
        %v5702 = vpop.f32.mrb[0].mxu0
        %v5703 = vadd.f32 %v5542, %v5702
        %v5704 = vpop.f32.mrb[0].mxu0
        %5705 = vmatprep.mubr.bf16.mxu0 0
        %5706 = vmatmul.mubr.bf16.gmra.mrb[0].mxu0 %v4321
        %v5707 = vpop.f32.mrb[0].mxu0
        %v5708 = vadd.f32 %v5547, %v5707
        %v5709 = vpop.f32.mrb[0].mxu0
        %v5710 = vpop.f32.mrb[0].mxu0
        %v5711 = vadd.f32 %v5550, %v5710
        %v5712 = vpop.f32.mrb[0].mxu0
        %5713 = vmatprep.mubr.bf16.mxu0 0
        %5714 = vmatmul.mubr.bf16.gmra.mrb[0].mxu0 %v4330
        %v5715 = vpop.f32.mrb[0].mxu0
        %v5716 = vadd.f32 %v5555, %v5715
        %v5717 = vpop.f32.mrb[0].mxu0
        %v5718 = vpop.f32.mrb[0].mxu0
        %v5719 = vadd.f32 %v5558, %v5718
        %v5720 = vpop.f32.mrb[0].mxu0
        %5721 = vmatprep.mubr.bf16.mxu0 0
        %5722 = vmatmul.mubr.bf16.gmra.mrb[0].mxu0 %v4339
        %v5723 = vpop.f32.mrb[0].mxu0
        %v5724 = vadd.f32 %v5563, %v5723
        %v5725 = vpop.f32.mrb[0].mxu0
        %v5726 = vpop.f32.mrb[0].mxu0
        %v5727 = vadd.f32 %v5566, %v5726
        %v5728 = vpop.f32.mrb[0].mxu0
        %5729 = vmatprep.mubr.bf16.mxu0 0
        %5730 = vmatmul.mubr.bf16.gmra.mrb[0].mxu0 %v4348
        %v5731 = vpop.f32.mrb[0].mxu0
        %v5732 = vadd.f32 %v5571, %v5731
        %v5733 = vpop.f32.mrb[0].mxu0
        %v5734 = vpop.f32.mrb[0].mxu0
        %v5735 = vadd.f32 %v5574, %v5734
        %v5736 = vpop.f32.mrb[0].mxu0
        %5737 = vmatprep.mubr.bf16.mxu0 0
        %5738 = vmatmul.mubr.bf16.gmra.mrb[0].mxu0 %v4357
        %v5739 = vpop.f32.mrb[0].mxu0
        %v5740 = vadd.f32 %v5579, %v5739
        %v5741 = vpop.f32.mrb[0].mxu0
        %v5742 = vpop.f32.mrb[0].mxu0
        %v5743 = vadd.f32 %v5582, %v5742
        %v5744 = vpop.f32.mrb[0].mxu0
        %5745 = vdwg.mxu0
        %v5746 = vmax.f32 %v5620, 0.0
        %v5747 = vmax.f32 %v5623, 0.0
        %v5748 = vmax.f32 %v5628, 0.0
        %v5749 = vmax.f32 %v5631, 0.0
        %v5750 = vmax.f32 %v5636, 0.0
        %v5751 = vmax.f32 %v5639, 0.0
        %v5752 = vmax.f32 %v5644, 0.0
        %v5753 = vmax.f32 %v5647, 0.0
        %v5754 = vmax.f32 %v5652, 0.0
        %v5755 = vmax.f32 %v5655, 0.0
        %v5756 = vmax.f32 %v5660, 0.0
        %v5757 = vmax.f32 %v5663, 0.0
        %v5758 = vmax.f32 %v5668, 0.0
        %v5759 = vmax.f32 %v5671, 0.0
        %v5760 = vmax.f32 %v5676, 0.0
        %v5761 = vmax.f32 %v5679, 0.0
        %v5762 = vmax.f32 %v5684, 0.0
        %v5763 = vmax.f32 %v5687, 0.0
        %v5764 = vmax.f32 %v5692, 0.0
        %v5765 = vmax.f32 %v5695, 0.0
        %v5766 = vmax.f32 %v5700, 0.0
        %v5767 = vmax.f32 %v5703, 0.0
        %v5768 = vmax.f32 %v5708, 0.0
        %v5769 = vmax.f32 %v5711, 0.0
        %v5770 = vmax.f32 %v5716, 0.0
        %v5771 = vmax.f32 %v5719, 0.0
        %v5772 = vmax.f32 %v5724, 0.0
        %v5773 = vmax.f32 %v5727, 0.0
        %v5774 = vmax.f32 %v5732, 0.0
        %v5775 = vmax.f32 %v5735, 0.0
        %v5776 = vmax.f32 %v5740, 0.0
        %v5777 = vmax.f32 %v5743, 0.0
        %v5778 = vpack.c.bf16 %v5747, %v5746
        %v5779 = vpack.c.bf16 %v5749, %v5748
        %v5780 = vpack.c.bf16 %v5751, %v5750
        %v5781 = vpack.c.bf16 %v5753, %v5752
        %v5782 = vpack.c.bf16 %v5755, %v5754
        %v5783 = vpack.c.bf16 %v5757, %v5756
        %v5784 = vpack.c.bf16 %v5759, %v5758
        %v5785 = vpack.c.bf16 %v5761, %v5760
        %v5786 = vpack.c.bf16 %v5763, %v5762
        %v5787 = vpack.c.bf16 %v5765, %v5764
        %v5788 = vpack.c.bf16 %v5767, %v5766
        %v5789 = vpack.c.bf16 %v5769, %v5768
        %v5790 = vpack.c.bf16 %v5771, %v5770
        %v5791 = vpack.c.bf16 %v5773, %v5772
        %v5792 = vpack.c.bf16 %v5775, %v5774
        %v5793 = vpack.c.bf16 %v5777, %v5776
        %v5794 = vld [vmem:[#allocation10] sm:$0xf]
        %v5795 = vld [vmem:[#allocation10 + $0x4] sm:$0xf]
        %v5796 = vld [vmem:[#allocation10 + $0x8] sm:$0xf]
        %v5797 = vld [vmem:[#allocation10 + $0xc] sm:$0xf]
        %v5798 = vld [vmem:[#allocation10 + $0x10] sm:$0xf]
        %v5799 = vld [vmem:[#allocation10 + $0x14] sm:$0xf]
        %v5800 = vld [vmem:[#allocation10 + $0x18] sm:$0xf]
        %v5801 = vld [vmem:[#allocation10 + $0x1c] sm:$0xf]
        %v5802 = vld [vmem:[#allocation10 + $0x20] sm:$0xf]
        %v5803 = vld [vmem:[#allocation10 + $0x24] sm:$0xf]
        %v5804 = vld [vmem:[#allocation10 + $0x28] sm:$0xf]
        %v5805 = vld [vmem:[#allocation10 + $0x2c] sm:$0xf]
        %v5806 = vld [vmem:[#allocation10 + $0x30] sm:$0xf]
        %v5807 = vld [vmem:[#allocation10 + $0x34] sm:$0xf]
        %v5808 = vld [vmem:[#allocation10 + $0x38] sm:$0xf]
        %v5809 = vld [vmem:[#allocation10 + $0x3c] sm:$0xf]
        %v5810 = vld [vmem:[%s6] sm:$0x1]
        %v5812 = vlaneseq
        %v5813 = vshrl.u32 %v5812, 7
        %v5814 = vsub.s32 0, %v5813
        %v5815 = vrot.slane %v5810, %v5814
        %v5833 = vunpack.c.l.b16 %v5794
        %v5834 = vunpack.c.l.b16 %v5795
        %v5835 = vunpack.c.l.b16 %v5796
        %v5836 = vunpack.c.l.b16 %v5797
        %v5837 = vunpack.c.l.b16 %v5798
        %v5838 = vunpack.c.l.b16 %v5799
        %v5839 = vunpack.c.l.b16 %v5800
        %v5840 = vunpack.c.l.b16 %v5801
        %v5841 = vunpack.c.l.b16 %v5802
        %v5842 = vunpack.c.l.b16 %v5803
        %v5843 = vunpack.c.l.b16 %v5804
        %v5844 = vunpack.c.l.b16 %v5805
        %v5845 = vunpack.c.l.b16 %v5806
        %v5846 = vunpack.c.l.b16 %v5807
        %v5847 = vunpack.c.l.b16 %v5808
        %v5848 = vunpack.c.l.b16 %v5809
        %v5849 = vpack.c.b16 %v5834, %v5833
        %v5850 = vpack.c.b16 %v5836, %v5835
        %v5851 = vpack.c.b16 %v5838, %v5837
        %v5852 = vpack.c.b16 %v5840, %v5839
        %v5853 = vpack.c.b16 %v5842, %v5841
        %v5854 = vpack.c.b16 %v5844, %v5843
        %v5855 = vpack.c.b16 %v5846, %v5845
        %v5856 = vpack.c.b16 %v5848, %v5847
        %5865 = vmatprep.subr.bf16.mxu0 0
        %5866 = vmatpush1.bf16.msra.mxu0 %v5849
        %5867 = vmatprep.subr.bf16.mxu0 0
        %5868 = vmatpush1.bf16.msra.mxu0 %v5850
        %5869 = vmatprep.subr.bf16.mxu0 0
        %5870 = vmatpush1.bf16.msra.mxu0 %v5851
        %5871 = vmatprep.subr.bf16.mxu0 0
        %5872 = vmatpush1.bf16.msra.mxu0 %v5852
        %5873 = vmatprep.subr.bf16.mxu0 0
        %5874 = vmatpush1.bf16.msra.mxu0 %v5853
        %5875 = vmatprep.subr.bf16.mxu0 0
        %5876 = vmatpush1.bf16.msra.mxu0 %v5854
        %5877 = vmatprep.subr.bf16.mxu0 0
        %5878 = vmatpush1.bf16.msra.mxu0 %v5855
        %5879 = vmatprep.subr.bf16.mxu0 0
        %5880 = vmatpush1.bf16.msra.mxu0 %v5856
        %5881 = vmatprep.subr.bf16.mxu0 0
        %5882 = vmatpush1.bf16.msra.mxu0 0
        %5883 = vmatprep.subr.bf16.mxu0 0
        %5884 = vmatpush1.bf16.msra.mxu0 0
        %5885 = vmatprep.subr.bf16.mxu0 0
        %5886 = vmatpush1.bf16.msra.mxu0 0
        %5887 = vmatprep.subr.bf16.mxu0 0
        %5888 = vmatpush1.bf16.msra.mxu0 0
        %5889 = vmatprep.subr.bf16.mxu0 0
        %5890 = vmatpush1.bf16.msra.mxu0 0
        %5891 = vmatprep.subr.bf16.mxu0 0
        %5892 = vmatpush1.bf16.msra.mxu0 0
        %5893 = vmatprep.subr.bf16.mxu0 0
        %5894 = vmatpush1.bf16.msra.mxu0 0
        %5895 = vmatprep.subr.bf16.mxu0 0
        %5896 = vmatpush1.bf16.msra.mxu0 0
        %5897 = vmatprep.mubr.bf16.mxu0 0
        %5898 = vmatmul.mubr.bf16.gmra.mrb[0].mxu0 %v5778
        %v5899 = vpop.f32.mrb[0].mxu0
        %v5900 = vadd.f32 %v5815, %v5899
        %v5901 = vpop.f32.mrb[0].mxu0
        %v5902 = vpop.f32.mrb[0].mxu0
        %v5903 = vadd.f32 %v5815, %v5902
        %v5904 = vpop.f32.mrb[0].mxu0
        %5905 = vmatprep.mubr.bf16.mxu0 0
        %5906 = vmatmul.mubr.bf16.gmra.mrb[0].mxu0 %v5779
        %v5907 = vpop.f32.mrb[0].mxu0
        %v5908 = vadd.f32 %v5815, %v5907
        %v5909 = vpop.f32.mrb[0].mxu0
        %v5910 = vpop.f32.mrb[0].mxu0
        %v5911 = vadd.f32 %v5815, %v5910
        %v5912 = vpop.f32.mrb[0].mxu0
        %5913 = vmatprep.mubr.bf16.mxu0 0
        %5914 = vmatmul.mubr.bf16.gmra.mrb[0].mxu0 %v5780
        %v5915 = vpop.f32.mrb[0].mxu0
        %v5916 = vadd.f32 %v5815, %v5915
        %v5917 = vpop.f32.mrb[0].mxu0
        %v5918 = vpop.f32.mrb[0].mxu0
        %v5919 = vadd.f32 %v5815, %v5918
        %v5920 = vpop.f32.mrb[0].mxu0
        %5921 = vmatprep.mubr.bf16.mxu0 0
        %5922 = vmatmul.mubr.bf16.gmra.mrb[0].mxu0 %v5781
        %v5923 = vpop.f32.mrb[0].mxu0
        %v5924 = vadd.f32 %v5815, %v5923
        %v5925 = vpop.f32.mrb[0].mxu0
        %v5926 = vpop.f32.mrb[0].mxu0
        %v5927 = vadd.f32 %v5815, %v5926
        %v5928 = vpop.f32.mrb[0].mxu0
        %5929 = vmatprep.mubr.bf16.mxu0 0
        %5930 = vmatmul.mubr.bf16.gmra.mrb[0].mxu0 %v5782
        %v5931 = vpop.f32.mrb[0].mxu0
        %v5932 = vadd.f32 %v5815, %v5931
        %v5933 = vpop.f32.mrb[0].mxu0
        %v5934 = vpop.f32.mrb[0].mxu0
        %v5935 = vadd.f32 %v5815, %v5934
        %v5936 = vpop.f32.mrb[0].mxu0
        %5937 = vmatprep.mubr.bf16.mxu0 0
        %5938 = vmatmul.mubr.bf16.gmra.mrb[0].mxu0 %v5783
        %v5939 = vpop.f32.mrb[0].mxu0
        %v5940 = vadd.f32 %v5815, %v5939
        %v5941 = vpop.f32.mrb[0].mxu0
        %v5942 = vpop.f32.mrb[0].mxu0
        %v5943 = vadd.f32 %v5815, %v5942
        %v5944 = vpop.f32.mrb[0].mxu0
        %5945 = vmatprep.mubr.bf16.mxu0 0
        %5946 = vmatmul.mubr.bf16.gmra.mrb[0].mxu0 %v5784
        %v5947 = vpop.f32.mrb[0].mxu0
        %v5948 = vadd.f32 %v5815, %v5947
        %v5949 = vpop.f32.mrb[0].mxu0
        %v5950 = vpop.f32.mrb[0].mxu0
        %v5951 = vadd.f32 %v5815, %v5950
        %v5952 = vpop.f32.mrb[0].mxu0
        %5953 = vmatprep.mubr.bf16.mxu0 0
        %5954 = vmatmul.mubr.bf16.gmra.mrb[0].mxu0 %v5785
        %v5955 = vpop.f32.mrb[0].mxu0
        %v5956 = vadd.f32 %v5815, %v5955
        %v5957 = vpop.f32.mrb[0].mxu0
        %v5958 = vpop.f32.mrb[0].mxu0
        %v5959 = vadd.f32 %v5815, %v5958
        %v5960 = vpop.f32.mrb[0].mxu0
        %5961 = vmatprep.mubr.bf16.mxu0 0
        %5962 = vmatmul.mubr.bf16.gmra.mrb[0].mxu0 %v5786
        %v5963 = vpop.f32.mrb[0].mxu0
        %v5964 = vadd.f32 %v5815, %v5963
        %v5965 = vpop.f32.mrb[0].mxu0
        %v5966 = vpop.f32.mrb[0].mxu0
        %v5967 = vadd.f32 %v5815, %v5966
        %v5968 = vpop.f32.mrb[0].mxu0
        %5969 = vmatprep.mubr.bf16.mxu0 0
        %5970 = vmatmul.mubr.bf16.gmra.mrb[0].mxu0 %v5787
        %v5971 = vpop.f32.mrb[0].mxu0
        %v5972 = vadd.f32 %v5815, %v5971
        %v5973 = vpop.f32.mrb[0].mxu0
        %v5974 = vpop.f32.mrb[0].mxu0
        %v5975 = vadd.f32 %v5815, %v5974
        %v5976 = vpop.f32.mrb[0].mxu0
        %5977 = vmatprep.mubr.bf16.mxu0 0
        %5978 = vmatmul.mubr.bf16.gmra.mrb[0].mxu0 %v5788
        %v5979 = vpop.f32.mrb[0].mxu0
        %v5980 = vadd.f32 %v5815, %v5979
        %v5981 = vpop.f32.mrb[0].mxu0
        %v5982 = vpop.f32.mrb[0].mxu0
        %v5983 = vadd.f32 %v5815, %v5982
        %v5984 = vpop.f32.mrb[0].mxu0
        %5985 = vmatprep.mubr.bf16.mxu0 0
        %5986 = vmatmul.mubr.bf16.gmra.mrb[0].mxu0 %v5789
        %v5987 = vpop.f32.mrb[0].mxu0
        %v5988 = vadd.f32 %v5815, %v5987
        %v5989 = vpop.f32.mrb[0].mxu0
        %v5990 = vpop.f32.mrb[0].mxu0
        %v5991 = vadd.f32 %v5815, %v5990
        %v5992 = vpop.f32.mrb[0].mxu0
        %5993 = vmatprep.mubr.bf16.mxu0 0
        %5994 = vmatmul.mubr.bf16.gmra.mrb[0].mxu0 %v5790
        %v5995 = vpop.f32.mrb[0].mxu0
        %v5996 = vadd.f32 %v5815, %v5995
        %v5997 = vpop.f32.mrb[0].mxu0
        %v5998 = vpop.f32.mrb[0].mxu0
        %v5999 = vadd.f32 %v5815, %v5998
        %v6000 = vpop.f32.mrb[0].mxu0
        %6001 = vmatprep.mubr.bf16.mxu0 0
        %6002 = vmatmul.mubr.bf16.gmra.mrb[0].mxu0 %v5791
        %v6003 = vpop.f32.mrb[0].mxu0
        %v6004 = vadd.f32 %v5815, %v6003
        %v6005 = vpop.f32.mrb[0].mxu0
        %v6006 = vpop.f32.mrb[0].mxu0
        %v6007 = vadd.f32 %v5815, %v6006
        %v6008 = vpop.f32.mrb[0].mxu0
        %6009 = vmatprep.mubr.bf16.mxu0 0
        %6010 = vmatmul.mubr.bf16.gmra.mrb[0].mxu0 %v5792
        %v6011 = vpop.f32.mrb[0].mxu0
        %v6012 = vadd.f32 %v5815, %v6011
        %v6013 = vpop.f32.mrb[0].mxu0
        %v6014 = vpop.f32.mrb[0].mxu0
        %v6015 = vadd.f32 %v5815, %v6014
        %v6016 = vpop.f32.mrb[0].mxu0
        %6017 = vmatprep.mubr.bf16.mxu0 0
        %6018 = vmatmul.mubr.bf16.gmra.mrb[0].mxu0 %v5793
        %v6019 = vpop.f32.mrb[0].mxu0
        %v6020 = vadd.f32 %v5815, %v6019
        %v6021 = vpop.f32.mrb[0].mxu0
        %v6022 = vpop.f32.mrb[0].mxu0
        %v6023 = vadd.f32 %v5815, %v6022
        %v6024 = vpop.f32.mrb[0].mxu0
        %6025 = vdwg.mxu0
        %v6026 = vunpack.c.l.bf16 %v342
        %v6027 = vunpack.c.l.bf16 %v343
        %v6028 = vunpack.c.l.bf16 %v344
        %v6029 = vunpack.c.l.bf16 %v345
        %v6030 = vunpack.c.l.bf16 %v346
        %v6031 = vunpack.c.l.bf16 %v347
        %v6032 = vunpack.c.l.bf16 %v348
        %v6033 = vunpack.c.l.bf16 %v349
        %v6034 = vunpack.c.l.bf16 %v350
        %v6035 = vunpack.c.l.bf16 %v351
        %v6036 = vunpack.c.l.bf16 %v352
        %v6037 = vunpack.c.l.bf16 %v353
        %v6038 = vunpack.c.l.bf16 %v354
        %v6039 = vunpack.c.l.bf16 %v355
        %v6040 = vunpack.c.l.bf16 %v356
        %v6041 = vunpack.c.l.bf16 %v357
        %v6042 = vunpack.c.l.bf16 %v358
        %v6043 = vunpack.c.l.bf16 %v359
        %v6044 = vunpack.c.l.bf16 %v360
        %v6045 = vunpack.c.l.bf16 %v361
        %v6046 = vunpack.c.l.bf16 %v362
        %v6047 = vunpack.c.l.bf16 %v363
        %v6048 = vunpack.c.l.bf16 %v364
        %v6049 = vunpack.c.l.bf16 %v365
        %v6050 = vunpack.c.l.bf16 %v366
        %v6051 = vunpack.c.l.bf16 %v367
        %v6052 = vunpack.c.l.bf16 %v368
        %v6053 = vunpack.c.l.bf16 %v369
        %v6054 = vunpack.c.l.bf16 %v370
        %v6055 = vunpack.c.l.bf16 %v371
        %v6056 = vunpack.c.l.bf16 %v372
        %v6057 = vunpack.c.l.bf16 %v373
        %v6058 = vadd.f32 %v5900, %v6026
        %v6059 = vadd.f32 %v5903, %v6027
        %v6060 = vadd.f32 %v5908, %v6028
        %v6061 = vadd.f32 %v5911, %v6029
        %v6062 = vadd.f32 %v5916, %v6030
        %v6063 = vadd.f32 %v5919, %v6031
        %v6064 = vadd.f32 %v5924, %v6032
        %v6065 = vadd.f32 %v5927, %v6033
        %v6066 = vadd.f32 %v5932, %v6034
        %v6067 = vadd.f32 %v5935, %v6035
        %v6068 = vadd.f32 %v5940, %v6036
        %v6069 = vadd.f32 %v5943, %v6037
        %v6070 = vadd.f32 %v5948, %v6038
        %v6071 = vadd.f32 %v5951, %v6039
        %v6072 = vadd.f32 %v5956, %v6040
        %v6073 = vadd.f32 %v5959, %v6041
        %v6074 = vadd.f32 %v5964, %v6042
        %v6075 = vadd.f32 %v5967, %v6043
        %v6076 = vadd.f32 %v5972, %v6044
        %v6077 = vadd.f32 %v5975, %v6045
        %v6078 = vadd.f32 %v5980, %v6046
        %v6079 = vadd.f32 %v5983, %v6047
        %v6080 = vadd.f32 %v5988, %v6048
        %v6081 = vadd.f32 %v5991, %v6049
        %v6082 = vadd.f32 %v5996, %v6050
        %v6083 = vadd.f32 %v5999, %v6051
        %v6084 = vadd.f32 %v6004, %v6052
        %v6085 = vadd.f32 %v6007, %v6053
        %v6086 = vadd.f32 %v6012, %v6054
        %v6087 = vadd.f32 %v6015, %v6055
        %v6088 = vadd.f32 %v6020, %v6056
        %v6089 = vadd.f32 %v6023, %v6057
        %v6090 = vmax.f32 %v6058, 0.0
        %v6091 = vmax.f32 %v6059, 0.0
        %v6092 = vmax.f32 %v6060, 0.0
        %v6093 = vmax.f32 %v6061, 0.0
        %v6094 = vmax.f32 %v6062, 0.0
        %v6095 = vmax.f32 %v6063, 0.0
        %v6096 = vmax.f32 %v6064, 0.0
        %v6097 = vmax.f32 %v6065, 0.0
        %v6098 = vmax.f32 %v6066, 0.0
        %v6099 = vmax.f32 %v6067, 0.0
        %v6100 = vmax.f32 %v6068, 0.0
        %v6101 = vmax.f32 %v6069, 0.0
        %v6102 = vmax.f32 %v6070, 0.0
        %v6103 = vmax.f32 %v6071, 0.0
        %v6104 = vmax.f32 %v6072, 0.0
        %v6105 = vmax.f32 %v6073, 0.0
        %v6106 = vmax.f32 %v6074, 0.0
        %v6107 = vmax.f32 %v6075, 0.0
        %v6108 = vmax.f32 %v6076, 0.0
        %v6109 = vmax.f32 %v6077, 0.0
        %v6110 = vmax.f32 %v6078, 0.0
        %v6111 = vmax.f32 %v6079, 0.0
        %v6112 = vmax.f32 %v6080, 0.0
        %v6113 = vmax.f32 %v6081, 0.0
        %v6114 = vmax.f32 %v6082, 0.0
        %v6115 = vmax.f32 %v6083, 0.0
        %v6116 = vmax.f32 %v6084, 0.0
        %v6117 = vmax.f32 %v6085, 0.0
        %v6118 = vmax.f32 %v6086, 0.0
        %v6119 = vmax.f32 %v6087, 0.0
        %v6120 = vmax.f32 %v6088, 0.0
        %v6121 = vmax.f32 %v6089, 0.0
        %6122 = vst [vmem:[%s340] sm:$0xff] %v6090
        %6123 = vst [vmem:[%s340 + $0x8] sm:$0xff] %v6091
        %6124 = vst [vmem:[%s340 + $0x10] sm:$0xff] %v6092
        %6125 = vst [vmem:[%s340 + $0x18] sm:$0xff] %v6093
        %6126 = vst [vmem:[%s340 + $0x20] sm:$0xff] %v6094
        %6127 = vst [vmem:[%s340 + $0x28] sm:$0xff] %v6095
        %6128 = vst [vmem:[%s340 + $0x30] sm:$0xff] %v6096
        %6129 = vst [vmem:[%s340 + $0x38] sm:$0xff] %v6097
        %6130 = vst [vmem:[%s340 + $0x40] sm:$0xff] %v6098
        %6131 = vst [vmem:[%s340 + $0x48] sm:$0xff] %v6099
        %6132 = vst [vmem:[%s340 + $0x50] sm:$0xff] %v6100
        %6133 = vst [vmem:[%s340 + $0x58] sm:$0xff] %v6101
        %6134 = vst [vmem:[%s340 + $0x60] sm:$0xff] %v6102
        %6135 = vst [vmem:[%s340 + $0x68] sm:$0xff] %v6103
        %6136 = vst [vmem:[%s340 + $0x70] sm:$0xff] %v6104
        %6137 = vst [vmem:[%s340 + $0x78] sm:$0xff] %v6105
        %6138 = vst [vmem:[%s340 + $0x80] sm:$0xff] %v6106
        %6139 = vst [vmem:[%s340 + $0x88] sm:$0xff] %v6107
        %6140 = vst [vmem:[%s340 + $0x90] sm:$0xff] %v6108
        %6141 = vst [vmem:[%s340 + $0x98] sm:$0xff] %v6109
        %6142 = vst [vmem:[%s340 + $0xa0] sm:$0xff] %v6110
        %6143 = vst [vmem:[%s340 + $0xa8] sm:$0xff] %v6111
        %6144 = vst [vmem:[%s340 + $0xb0] sm:$0xff] %v6112
        %6145 = vst [vmem:[%s340 + $0xb8] sm:$0xff] %v6113
        %6146 = vst [vmem:[%s340 + $0xc0] sm:$0xff] %v6114
        %6147 = vst [vmem:[%s340 + $0xc8] sm:$0xff] %v6115
        %6148 = vst [vmem:[%s340 + $0xd0] sm:$0xff] %v6116
        %6149 = vst [vmem:[%s340 + $0xd8] sm:$0xff] %v6117
        %6150 = vst [vmem:[%s340 + $0xe0] sm:$0xff] %v6118
        %6151 = vst [vmem:[%s340 + $0xe8] sm:$0xff] %v6119
        %6152 = vst [vmem:[%s340 + $0xf0] sm:$0xff] %v6120
        %6153 = vst [vmem:[%s340 + $0xf8] sm:$0xff] %v6121
        %s6154 = sand.u32 %s186, 1
        %s6155 = scalar_lea.sflag [#allocation6], %s6154
        %s6156 = sand.u32 %s186, 1
        %s6157 = smul.addr %s6156, 256
        %s6158 = scalar_lea.vmem [#allocation12], %s6157
        // Predicated region
        $region65: #{tpu_custom_call.1} parent=47 // pred_check
          %p6159 = pneg %p196
        $region66: #{tpu_custom_call.1} parent=47 // pred_check_branch
          %6161 = sbr.rel (%p6159) target = $region68
        $region67: #{tpu_custom_call.1} parent=47 // pred_region
          %s6163 = ssub.s32 4096, 4096
          %6164 = vsyncadd %s6155, %s6163
          %s6165 = smul.addr %s26, 32
          %s6166 = smul.addr %s6165, 128
          %s6167 = scalar_lea.hbm %s7, %s6166
          %s6168 = sshll.u32 %s6158, 4
          %s6169 = int_to_ptr.vmem [resolvable:$true] %s6168
          %6174 = dma.vmem_to_hbm [thread:$0]  %s6169, 4096, %s6167, %s6155, 128, 128, 8
        $region68: #{tpu_custom_call.1} parent=47 // pred_fallthru
          _
      $region48: #{tpu_custom_call.1} parent=5 // pred_fallthru
        _
      %p6175 = scmp.le.s32.totalorder 2, %s21
      // Predicated region
      $region69: #{tpu_custom_call.1} parent=5 // pred_check
        %p6176 = pneg %p6175
      $region70: #{tpu_custom_call.1} parent=5 // pred_check_branch
        %6178 = sbr.rel (%p6176) target = $region72
      $region71: #{tpu_custom_call.1} parent=5 // pred_region
        %s6179 = ssub.s32 %s21, 2
        // Predicated region
        $region73: #{tpu_custom_call.1} parent=71 // pred_check
          %p6180 = pneg %p202
        $region74: #{tpu_custom_call.1} parent=71 // pred_check_branch
          %6182 = sbr.rel (%p6180) target = $region76
        $region75: #{tpu_custom_call.1} parent=71 // pred_region
          %s6183 = sand.u32 %s187, 1
          %s6184 = scalar_lea.sflag [#allocation6], %s6183
          %s6185 = sand.u32 %s187, 1
          %s6186 = smul.addr %s6185, 256
          %s6187 = scalar_lea.vmem [#allocation12], %s6186
          %6188 = dma.done %s6184, 4096
        $region76: #{tpu_custom_call.1} parent=71 // pred_fallthru
          _
      $region72: #{tpu_custom_call.1} parent=5 // pred_fallthru
        _
    $region6: #{tpu_custom_call.1} parent=1 // loop_footer
      %s25 = sadd.s32 1, %s21
    $region7: #{tpu_custom_call.1} parent=1 // loop_footer_branch
      %20 = sbr.rel target = $region3
    $region8: #{tpu_custom_call.1} parent=1 // loop_exit
      _
    %6189 = vsyncpa [#allocation5], 1
    %s6190 = scalar_lea.sflag [#allocation5], 1
    %6191 = vsyncpa %s6190, 1
    %6192 = vsyncpa [#allocation8], 1
    %6193 = vsyncpa [#allocation11], 1
    %6194 = vsyncpa [#allocation6], 1
    %s6195 = scalar_lea.sflag [#allocation6], 1
    %6196 = vsyncpa %s6195, 1

</llo_original>
